<compile_context>
chip_gen: v6e
topology: v6e:2x2x1
jax: 0.10.0
libtpu: 0.0.40
codegen_flags: <defaults>
</compile_context>

<pallas_src>
import functools
import math

import jax
import jax.numpy as jnp
from jax.experimental import pallas as pl
from jax.experimental.pallas import tpu as pltpu

# ----------------------------- configuration (small shapes) -----------------------------
N_BATCH = 2          # batch size
Z_DIM = 32
C_DIM = 25           # 16 (cam2world) + 9 (intrinsics)
W_DIM = 32
NUM_WS = 10
PLANE_RES = 16       # (module uses 256; small for the demo)
PLANE_CH = 32        # features per plane  -> backbone img_channels = 3*32 = 96
NEURAL_RES = 8       # neural_rendering_resolution (module default 64; small here)
DEPTH_SAMPLES = 8    # samples per ray
IMG_RES = 32         # super-resolution output resolution
N_VERTS = 256
DECODER_HIDDEN = 64
DECODER_OUT = 1 + 32          # sigma + 32 rgb features
DECODER_OUT_PAD = 64          # lane-dense padded output width
DECODER_TILE_CAP = 8192       # max rows of samples per decoder grid step (bigger tiles
                              # amortize the ~0.35us/step overhead, esp. on v7x @ 3.2 TB/s)
DECODER_TILE_ALIGN = 16       # bf16 sublane tiling is (16, 128)
BLEND_HW_TILE_CAP = 65536     # max flattened H*W elems per blend grid step (4 MiB/buffer @ C=32 bf16)
BLEND_BATCH_BUDGET = 4 * 1024 * 1024   # per-buffer byte budget when grouping the N*3 axis
VMEM_LIMIT_BYTES = 48 * 1024 * 1024    # raised above default scoped VMEM on v5e/v6e/v7x,
                                       # still under v7x's 64 MiB physical VMEM


def _largest_divisor_tile(total, cap, align):
    """Largest divisor of `total` that is <= cap and a multiple of `align` (or == total)."""
    if total <= cap:
        return total
    for cand in range(min(cap, total), 0, -1):
        if total % cand == 0 and cand % align == 0:
            return cand
    return total


def _largest_batch_group(nb, bytes_per_row, budget):
    best = 1
    for cand in range(1, nb + 1):
        if nb % cand == 0 and cand * bytes_per_row <= budget:
            best = cand
    return best


def _largest_divisor_le(n, cap):
    cap = max(1, min(cap, n))
    for cand in range(cap, 0, -1):
        if n % cand == 0:
            return cand
    return 1


# ===================================== Pallas kernels ====================================

def _blend_kernel(r_ref, p_ref, a_ref, o_ref):
    # r_ref/p_ref: (B_TILE, 32, HW_TILE) bf16, a_ref: (B_TILE, 1, HW_TILE) f32
    # o_ref: (B_TILE, 32, HW_TILE) bf16.  Math in f32 (free at mem-bound), I/O in bf16.
    a = a_ref[...]
    r = r_ref[...].astype(jnp.float32)
    p = p_ref[...].astype(jnp.float32)
    o_ref[...] = (r * a + p * (1.0 - a)).astype(o_ref.dtype)


def blend_planes(renderings, planes, alphas):
    """blended_planes = renderings * alphas.unsqueeze(2) + planes * (1 - alphas.unsqueeze(2))

    renderings, planes: (N, 3, 32, P, P)   alphas: (N, 3, P, P)
    Returns bf16 (N, 3, 32, P, P) -- the consumer (grid_sample -> decoder) is bf16 anyway,
    so keeping the blend output bf16 halves both the blend writeback and the gather reads.
    """
    N, three, C, P, _ = planes.shape
    HW = P * P
    NB = N * three
    r = renderings.reshape(NB, C, HW).astype(jnp.bfloat16)
    p = planes.reshape(NB, C, HW).astype(jnp.bfloat16)
    a = alphas.reshape(NB, 1, HW).astype(jnp.float32)   # 1/32 of the bytes: keep f32 precision

    # Tile the flattened H*W axis so a block never exceeds ~4 MiB per buffer (mem-bound-optimal,
    # VMEM-safe on every generation: 3 data buffers * 2-deep ~= 24 MiB < 48 MiB limit), then group
    # the NB axis as far as the budget allows so toy sizes collapse into few grid steps.
    hw_tile = _largest_divisor_tile(HW, BLEND_HW_TILE_CAP, 128)
    b_tile = _largest_batch_group(NB, C * hw_tile * 2, BLEND_BATCH_BUDGET)  # bf16 bytes

    # v7x has 2 TensorCores per chip: make sure at least one "parallel" axis has >= 2 steps.
    if (NB // b_tile) * (HW // hw_tile) < 2:
        if NB >= 2:
            b_tile = _largest_divisor_le(NB, NB // 2)
        elif HW >= 256 and (HW // 2) % 128 == 0:
            hw_tile = HW // 2

    out = pl.pallas_call(
        _blend_kernel,
        out_shape=jax.ShapeDtypeStruct((NB, C, HW), jnp.bfloat16),
        grid_spec=pltpu.PrefetchScalarGridSpec(
            num_scalar_prefetch=0,
            grid=(NB // b_tile, HW // hw_tile),
            in_specs=[
                pl.BlockSpec((b_tile, C, hw_tile), lambda b, h: (b, 0, h)),
                pl.BlockSpec((b_tile, C, hw_tile), lambda b, h: (b, 0, h)),
                pl.BlockSpec((b_tile, 1, hw_tile), lambda b, h: (b, 0, h)),
            ],
            out_specs=pl.BlockSpec((b_tile, C, hw_tile), lambda b, h: (b, 0, h)),
        ),
        compiler_params=pltpu.CompilerParams(
            dimension_semantics=("parallel", "parallel"),
            vmem_limit_bytes=VMEM_LIMIT_BYTES,
        ),
    )(r, p, a)
    return out.reshape(N, three, C, P, P)


def _softplus(x):
    # torch.nn.Softplus (beta=1): numerically-stable log(1 + exp(x)), f32.
    # TODO(synk): v6e/v7x could evaluate this in bf16 (2x EUP) -- precision/perf trade, kept f32.
    return jnp.maximum(x, 0.0) + jnp.log(1.0 + jnp.exp(-jnp.abs(x)))


def _decoder_kernel(f_ref, w1_ref, b1_ref, w2_ref, b2_ref, o_ref):
    # f_ref: (1, 3, TILE_M, 32) bf16 -- 3 tri-plane features for TILE_M sample points
    # w1_ref: (32, 64) bf16 (1/sqrt(32) * 1/3 folded -> the 3-plane mean is a plain sum here)
    # b1_ref: (1, 64) f32
    # w2_ref: (64, 64) bf16 (1/sqrt(64) folded; columns reordered: rgb 0..31, sigma 32, zero pad)
    # b2_ref: (1, 64) f32 (same reorder / zero pad)
    # o_ref: (1, TILE_M, 64) bf16 lane-dense slab: cols 0..31 = rgb, col 32 = sigma, rest pad
    f = f_ref[0]                                            # (3, TILE_M, 32) bf16
    x = f[0] + f[1] + f[2]                                  # sum; mean folded into w1
    h = jnp.dot(x, w1_ref[...], preferred_element_type=jnp.float32) + b1_ref[...]
    h = _softplus(h)                                        # torch.nn.Softplus(), f32
    y = jnp.dot(h.astype(jnp.bfloat16), w2_ref[...],
                preferred_element_type=jnp.float32) + b2_ref[...]   # (TILE_M, 64)
    # sigmoid only on the lane-aligned rgb prefix: exp (EUP) + approximate reciprocal (EUP).
    y_rgb = y[:, :PLANE_CH]                                 # (TILE_M, 32)
    sig = pl.reciprocal(1.0 + jnp.exp(-y_rgb), approx=True)
    rgb = sig * (1.0 + 2.0 * 0.001) - 0.001
    # col 32 = raw sigma, cols 33..63 = y's zero pad (zero weights/bias) -- never read downstream.
    out = jnp.concatenate([rgb, y[:, PLANE_CH:]], axis=-1)  # (TILE_M, 64)
    o_ref[0] = out.astype(o_ref.dtype)


def osg_decoder(features, w1, b1, w2, b2):
    """OSGDecoder forward.

    features: (N, 3, MS, 32) bf16  (plane axis kept inside -- no HBM transpose needed)
    returns rgb (N, MS, 32) bf16, sigma (N, MS, 1) f32
    """
    N, three, MS, C = features.shape

    # One-time parameter prep (outside the kernel): fold FullyConnectedLayer's 1/sqrt(fan_in)
    # scaling (lr_multiplier = 1) AND the 3-plane mean (1/3) into w1, cast to bf16, pad/reorder
    # layer-2 to lane width 64 with rgb first (lane-aligned) and sigma at column 32.
    w1s = (w1 * (1.0 / (3.0 * math.sqrt(C)))).astype(jnp.bfloat16)               # (32, 64)
    w2s = (w2 * (1.0 / math.sqrt(DECODER_HIDDEN))).astype(jnp.bfloat16)          # (64, 33)
    w2p = jnp.zeros((DECODER_HIDDEN, DECODER_OUT_PAD), jnp.bfloat16)
    w2p = w2p.at[:, :PLANE_CH].set(w2s[:, 1:1 + PLANE_CH]).at[:, PLANE_CH].set(w2s[:, 0])
    b2p = jnp.zeros((1, DECODER_OUT_PAD), jnp.float32)
    b2p = b2p.at[:, :PLANE_CH].set(b2[:, 1:1 + PLANE_CH]).at[:, PLANE_CH].set(b2[:, 0])

    tile_m = _largest_divisor_tile(MS, DECODER_TILE_CAP, DECODER_TILE_ALIGN)
    assert MS % tile_m == 0

    out = pl.pallas_call(
        _decoder_kernel,
        out_shape=jax.ShapeDtypeStruct((N, MS, DECODER_OUT_PAD), jnp.bfloat16),
        grid_spec=pltpu.PrefetchScalarGridSpec(
            num_scalar_prefetch=0,
            grid=(N, MS // tile_m),
            in_specs=[
                pl.BlockSpec((1, 3, tile_m, C), lambda n, i: (n, 0, i, 0)),
                pl.BlockSpec((C, DECODER_HIDDEN), lambda n, i: (0, 0)),
                pl.BlockSpec((1, DECODER_HIDDEN), lambda n, i: (0, 0)),
                pl.BlockSpec((DECODER_HIDDEN, DECODER_OUT_PAD), lambda n, i: (0, 0)),
                pl.BlockSpec((1, DECODER_OUT_PAD), lambda n, i: (0, 0)),
            ],
            out_specs=pl.BlockSpec((1, tile_m, DECODER_OUT_PAD), lambda n, i: (n, i, 0)),
        ),
        compiler_params=pltpu.CompilerParams(
            dimension_semantics=("parallel", "parallel"),
            vmem_limit_bytes=VMEM_LIMIT_BYTES,
        ),
    )(features, w1s, b1, w2p, b2p)

    rgb = out[..., :PLANE_CH]                                    # bf16, lane-aligned slice
    sigma = out[..., PLANE_CH:PLANE_CH + 1].astype(jnp.float32)  # tiny; f32 for the renderer
    return rgb, sigma


# ===================================== plain-JAX glue ====================================

def _sigmoid_np(x):
    return 1.0 / (1.0 + jnp.exp(-x))


def mapping_stub(params, z, c):
    # TODO(synk): StyleGAN2 mapping network is an external dependency; deterministic stub.
    c = jnp.zeros_like(c)  # rendering_kwargs['c_gen_conditioning_zero'] semantics
    del c
    w = jnp.tanh(z @ params["w_map"])
    return jnp.tile(w[:, None, :], (1, NUM_WS, 1))


def backbone_synthesis_stub(proj, ws, out_ch):
    # TODO(synk): StyleGAN2 synthesis backbone is an external dependency; deterministic stub.
    wmean = ws.mean(axis=1)                       # (N, W_DIM)
    x = jnp.tanh(wmean @ proj)                    # (N, out_ch*P*P)
    return x.reshape(-1, out_ch, PLANE_RES, PLANE_RES)


def rasterize_orth_stub(v, textures):
    # TODO(synk): pytorch3d rasterizer + F.grid_sample over rasterized UVs not reproducible here;
    #             deterministic stand-in producing 3 views (N,96,P,P) and alphas (N,3,P,P).
    N = v.shape[0]
    P = textures.shape[-1]
    vstat = jnp.tanh(v.mean(axis=1))              # (N, 3)
    views, alphas = [], []
    for k in range(3):
        scale = 1.0 + 0.1 * vstat[:, k][:, None, None, None]
        views.append(textures * scale)
        alphas.append(_sigmoid_np(vstat[:, k])[:, None, None, None] * jnp.ones((N, 1, P, P)))
    return jnp.concatenate(views, axis=1), jnp.concatenate(alphas, axis=1)


def ray_sampler(cam2world, intrinsics, resolution):
    # Simplified EG3D RaySampler (glue).
    N = cam2world.shape[0]
    fx, fy = intrinsics[:, 0, 0], intrinsics[:, 1, 1]
    cx, cy = intrinsics[:, 0, 2], intrinsics[:, 1, 2]
    u = (jnp.arange(resolution, dtype=jnp.float32) + 0.5) / resolution
    uu, vv = jnp.meshgrid(u, u, indexing="xy")
    uv = jnp.stack([uu.ravel(), vv.ravel()], axis=-1)            # (M, 2)
    x = (uv[None, :, 0] - cx[:, None]) / fx[:, None]
    y = (uv[None, :, 1] - cy[:, None]) / fy[:, None]
    dirs_cam = jnp.stack([x, y, jnp.ones_like(x)], axis=-1)      # (N, M, 3)
    dirs_world = jnp.einsum("nij,nmj->nmi", cam2world[:, :3, :3], dirs_cam)
    dirs_world = dirs_world / jnp.linalg.norm(dirs_world, axis=-1, keepdims=True)
    origins = jnp.broadcast_to(cam2world[:, None, :3, 3], dirs_world.shape)
    return origins, dirs_world


def project_onto_planes(pts):
    # pts: (N, M, 3) -> (N, 3, M, 2)   (XY / XZ / ZY projections, box_warp = 2)
    xy = pts[..., jnp.array([0, 1])]
    xz = pts[..., jnp.array([0, 2])]
    zy = pts[..., jnp.array([2, 1])]
    return jnp.stack([xy, xz, zy], axis=1)


def grid_sample_2d(plane, grid):
    # plane: (C, H, W) bf16, grid: (M, 2) in [-1, 1]; bilinear, align_corners=False.
    # TODO(synk): torch uses padding_mode='zeros'; border-clamp used here (gather glue, not a kernel).
    # TODO(synk): longer term, fuse this gather into the decoder Pallas kernel (VMEM-resident plane
    #             + in-kernel bilinear gather) -- at production sizes this XLA gather is the hot path;
    #             the bf16 blended planes already halve its read traffic.
    C, H, W = plane.shape
    x = (grid[:, 0] + 1.0) * 0.5 * W - 0.5
    y = (grid[:, 1] + 1.0) * 0.5 * H - 0.5
    x0 = jnp.floor(x)
    y0 = jnp.floor(y)
    wx1, wy1 = x - x0, y - y0
    wx0, wy0 = 1.0 - wx1, 1.0 - wy1

    def ci(v, hi):
        return jnp.clip(v, 0, hi - 1).astype(jnp.int32)

    x0i, x1i = ci(x0, W), ci(x0 + 1, W)
    y0i, y1i = ci(y0, H), ci(y0 + 1, H)
    p00 = plane[:, y0i, x0i]
    p01 = plane[:, y0i, x1i]
    p10 = plane[:, y1i, x0i]
    p11 = plane[:, y1i, x1i]
    out = p00 * (wy0 * wx0) + p01 * (wy0 * wx1) + p10 * (wy1 * wx0) + p11 * (wy1 * wx1)
    return out.T  # (M, C) f32


def _softplus_host(x):
    return jnp.maximum(x, 0.0) + jnp.log(1.0 + jnp.exp(-jnp.abs(x)))


def synthesis(params, ws, c, v):
    N = ws.shape[0]
    cam2world = c[:, :16].reshape(-1, 4, 4)
    intrinsics = c[:, 16:25].reshape(-1, 3, 3)
    R, S = NEURAL_RES, DEPTH_SAMPLES

    ray_origins, ray_dirs = ray_sampler(cam2world, intrinsics, R)      # (N, R*R, 3)

    planes = backbone_synthesis_stub(params["plane_proj"], ws, 3 * PLANE_CH)   # (N, 96, P, P)
    textures = backbone_synthesis_stub(params["tex_proj"], ws, PLANE_CH)       # (N, 32, P, P)

    renderings, alphas = rasterize_orth_stub(v, textures)              # (N,96,P,P), (N,3,P,P)
    renderings = renderings.reshape(N, 3, PLANE_CH, PLANE_RES, PLANE_RES)
    planes = planes.reshape(N, 3, PLANE_CH, PLANE_RES, PLANE_RES)

    # ---- Pallas: plane blending (bf16 I/O) ----
    blended = blend_planes(renderings, planes, alphas)                 # (N, 3, 32, P, P) bf16

    # ---- simplified ImportanceRenderer (uniform sampling; TODO(synk): importance resampling) ----
    t = jnp.linspace(2.25, 3.3, S, dtype=jnp.float32)
    pts = ray_origins[:, :, None, :] + ray_dirs[:, :, None, :] * t[None, None, :, None]  # (N,M,S,3)
    M = R * R
    MS = M * S
    pts_flat = pts.reshape(N, MS, 3)
    coords3 = project_onto_planes(pts_flat)                            # (N, 3, M*S, 2)

    sample_fn = jax.vmap(jax.vmap(grid_sample_2d, in_axes=(0, 0)), in_axes=(0, 0))
    feats = sample_fn(blended, coords3)                                # (N, 3, M*S, 32)
    # Keep the (N, 3, MS, 32) layout (no HBM transpose) and halve the feature DMA with bf16.
    feats = feats.astype(jnp.bfloat16)

    # ---- Pallas: OSGDecoder ----
    rgb, sigma = osg_decoder(feats, params["dec_w1"], params["dec_b1"],
                             params["dec_w2"], params["dec_b2"])
    rgb = rgb.reshape(N, M, S, PLANE_CH)                               # bf16
    sigma = sigma.reshape(N, M, S)                                     # f32

    # volume rendering (alpha compositing), f32
    deltas = jnp.concatenate([t[1:] - t[:-1], (t[1:] - t[:-1])[-1:]])  # (S,)
    density = _softplus_host(sigma - 1.0)                              # TODO(synk): exact density act. from rendering_kwargs
    alpha = 1.0 - jnp.exp(-density * deltas[None, None, :])
    trans = jnp.cumprod(1.0 - alpha + 1e-10, axis=-1)
    trans = jnp.concatenate([jnp.ones_like(trans[..., :1]), trans[..., :-1]], axis=-1)
    weights = alpha * trans                                            # (N, M, S)

    feature_samples = jnp.sum(weights[..., None] * rgb.astype(jnp.float32), axis=2)     # (N, M, 32)
    depth_samples = jnp.sum(weights * t[None, None, :], axis=2, keepdims=True)          # (N, M, 1)

    feature_image = feature_samples.transpose(0, 2, 1).reshape(N, PLANE_CH, R, R)
    depth_image = depth_samples.transpose(0, 2, 1).reshape(N, 1, R, R)
    rgb_image = feature_image[:, :3]

    # TODO(synk): superresolution module is an external dependency; bilinear upsample stand-in.
    sr_image = jax.image.resize(rgb_image, (N, 3, IMG_RES, IMG_RES), method="bilinear")

    return {"image": sr_image, "image_raw": rgb_image, "image_depth": depth_image}


@functools.partial(jax.jit, static_argnums=())
def triplane_generator_forward(params, z, c, v):
    ws = mapping_stub(params, z, c)
    return synthesis(params, ws, c, v)


# ===================================== parameter init ====================================

def init_params(key):
    ks = jax.random.split(key, 8)
    P2 = PLANE_RES * PLANE_RES
    return {
        "w_map": jax.random.normal(ks[0], (Z_DIM, W_DIM), jnp.float32) * 0.1,
        "plane_proj": jax.random.normal(ks[1], (W_DIM, 3 * PLANE_CH * P2), jnp.float32) * 0.05,
        "tex_proj": jax.random.normal(ks[2], (W_DIM, PLANE_CH * P2), jnp.float32) * 0.05,
        # OSGDecoder: FullyConnectedLayer weights stored transposed as (in, out); biases zero-init.
        "dec_w1": jax.random.normal(ks[3], (PLANE_CH, DECODER_HIDDEN), jnp.float32),
        "dec_b1": jnp.zeros((1, DECODER_HIDDEN), jnp.float32),
        "dec_w2": jax.random.normal(ks[4], (DECODER_HIDDEN, DECODER_OUT), jnp.float32),
        "dec_b2": jnp.zeros((1, DECODER_OUT), jnp.float32),
    }


def make_camera_params(n):
    # cam2world: camera at (0, 0, 2.7) looking at the origin (180° rotation about y).
    R = jnp.array([[-1.0, 0.0, 0.0],
                   [0.0, 1.0, 0.0],
                   [0.0, 0.0, -1.0]], jnp.float32)
    cam2world = jnp.eye(4, dtype=jnp.float32).at[:3, :3].set(R).at[:3, 3].set(
        jnp.array([0.0, 0.0, 2.7], jnp.float32))
    intr = jnp.array([[4.26, 0.0, 0.5],
                      [0.0, 4.26, 0.5],
                      [0.0, 0.0, 1.0]], jnp.float32)
    c = jnp.concatenate([cam2world.reshape(-1), intr.reshape(-1)])
    return jnp.tile(c[None, :], (n, 1))  # (n, 25)


# ========================================= main ==========================================

if __name__ == "__main__":
    key = jax.random.PRNGKey(0)
    kp, kz, kv = jax.random.split(key, 3)

    params = init_params(kp)
    z = jax.random.normal(kz, (N_BATCH, Z_DIM), jnp.float32)
    c = make_camera_params(N_BATCH)
    v = jax.random.normal(kv, (N_BATCH, N_VERTS, 3), jnp.float32) * 0.1

    out = triplane_generator_forward(params, z, c, v)
    jax.block_until_ready(out)

    assert out["image"].shape == (N_BATCH, 3, IMG_RES, IMG_RES)
    assert out["image_raw"].shape == (N_BATCH, 3, NEURAL_RES, NEURAL_RES)
    assert out["image_depth"].shape == (N_BATCH, 1, NEURAL_RES, NEURAL_RES)
    print("KERNEL_OK")
</pallas_src>

<mosaic_0001>
module attributes {stable_mosaic.version = 11 : i64} {
  func.func @_blend_kernel(%arg0: i32, %arg1: i32, %arg2: memref<3x32x256xbf16, #tpu.memory_space<vmem>>, %arg3: memref<3x32x256xbf16, #tpu.memory_space<vmem>>, %arg4: memref<3x1x256xf32, #tpu.memory_space<vmem>>, %arg5: memref<3x32x256xbf16, #tpu.memory_space<vmem>>) attributes {dimension_semantics = [#tpu.dimension_semantics<parallel>, #tpu.dimension_semantics<parallel>], iteration_bounds = array<i64: 2, 1>, scalar_prefetch = 0 : i64, scratch_operands = 0 : i64, tpu.core_type = #tpu.core_type<tc>, window_params = [{transform_indices = @transform_0, window_bounds = array<i64: 3, 32, 256>}, {transform_indices = @transform_1, window_bounds = array<i64: 3, 32, 256>}, {transform_indices = @transform_2, window_bounds = array<i64: 3, 1, 256>}, {transform_indices = @transform_3, window_bounds = array<i64: 3, 32, 256>}]} {
    %c0 = arith.constant 0 : index
    %c0_0 = arith.constant 0 : index
    %c0_1 = arith.constant 0 : index
    %0 = vector.load %arg4[%c0, %c0_0, %c0_1] : memref<3x1x256xf32, #tpu.memory_space<vmem>>, vector<3x1x256xf32>
    %c0_2 = arith.constant 0 : index
    %c0_3 = arith.constant 0 : index
    %c0_4 = arith.constant 0 : index
    %1 = vector.load %arg2[%c0_2, %c0_3, %c0_4] : memref<3x32x256xbf16, #tpu.memory_space<vmem>>, vector<3x32x256xbf16>
    %2 = arith.extf %1 : vector<3x32x256xbf16> to vector<3x32x256xf32>
    %c0_5 = arith.constant 0 : index
    %c0_6 = arith.constant 0 : index
    %c0_7 = arith.constant 0 : index
    %3 = vector.load %arg3[%c0_5, %c0_6, %c0_7] : memref<3x32x256xbf16, #tpu.memory_space<vmem>>, vector<3x32x256xbf16>
    %4 = arith.extf %3 : vector<3x32x256xbf16> to vector<3x32x256xf32>
    %5 = vector.broadcast %0 : vector<3x1x256xf32> to vector<3x32x256xf32>
    %6 = arith.mulf %2, %5 : vector<3x32x256xf32>
    %cst = arith.constant 1.000000e+00 : f32
    %7 = vector.broadcast %cst : f32 to vector<3x1x256xf32>
    %8 = arith.subf %7, %0 : vector<3x1x256xf32>
    %9 = vector.broadcast %8 : vector<3x1x256xf32> to vector<3x32x256xf32>
    %10 = arith.mulf %4, %9 : vector<3x32x256xf32>
    %11 = arith.addf %6, %10 : vector<3x32x256xf32>
    %12 = arith.truncf %11 : vector<3x32x256xf32> to vector<3x32x256xbf16>
    %c0_8 = arith.constant 0 : index
    %c0_9 = arith.constant 0 : index
    %c0_10 = arith.constant 0 : index
    %13 = vector.load %arg5[%c0_8, %c0_9, %c0_10] : memref<3x32x256xbf16, #tpu.memory_space<vmem>>, vector<3x32x256xbf16>
    tpu.vector_store %arg5[%c0_8, %c0_9, %c0_10], %12 {strides = array<i32>} : memref<3x32x256xbf16, #tpu.memory_space<vmem>>, vector<3x32x256xbf16>,
    return
  }
  func.func @transform_0(%arg0: i32, %arg1: i32) -> (i32, i32, i32) {
    %c0_i32 = arith.constant 0 : i32
    %c0_i32_0 = arith.constant 0 : i32
    return %arg0, %c0_i32, %arg1 : i32, i32, i32
  }
  func.func @transform_1(%arg0: i32, %arg1: i32) -> (i32, i32, i32) {
    %c0_i32 = arith.constant 0 : i32
    %c0_i32_0 = arith.constant 0 : i32
    return %arg0, %c0_i32, %arg1 : i32, i32, i32
  }
  func.func @transform_2(%arg0: i32, %arg1: i32) -> (i32, i32, i32) {
    %c0_i32 = arith.constant 0 : i32
    %c0_i32_0 = arith.constant 0 : i32
    return %arg0, %c0_i32, %arg1 : i32, i32, i32
  }
  func.func @transform_3(%arg0: i32, %arg1: i32) -> (i32, i32, i32) {
    %c0_i32 = arith.constant 0 : i32
    %c0_i32_0 = arith.constant 0 : i32
    return %arg0, %c0_i32, %arg1 : i32, i32, i32
  }
}

module attributes {stable_mosaic.version = 11 : i64} {
  func.func @_decoder_kernel(%arg0: i32, %arg1: i32, %arg2: memref<1x3x512x32xbf16, #tpu.memory_space<vmem>>, %arg3: memref<32x64xbf16, #tpu.memory_space<vmem>>, %arg4: memref<1x64xf32, #tpu.memory_space<vmem>>, %arg5: memref<64x64xbf16, #tpu.memory_space<vmem>>, %arg6: memref<1x64xf32, #tpu.memory_space<vmem>>, %arg7: memref<1x512x64xbf16, #tpu.memory_space<vmem>>) attributes {dimension_semantics = [#tpu.dimension_semantics<parallel>, #tpu.dimension_semantics<parallel>], iteration_bounds = array<i64: 2, 1>, scalar_prefetch = 0 : i64, scratch_operands = 0 : i64, tpu.core_type = #tpu.core_type<tc>, window_params = [{transform_indices = @transform_0, window_bounds = array<i64: 1, 3, 512, 32>}, {pipeline_mode = #tpu.pipeline_mode<synchronous>, transform_indices = @transform_1, window_bounds = array<i64: 32, 64>}, {pipeline_mode = #tpu.pipeline_mode<synchronous>, transform_indices = @transform_2, window_bounds = array<i64: 1, 64>}, {pipeline_mode = #tpu.pipeline_mode<synchronous>, transform_indices = @transform_3, window_bounds = array<i64: 64, 64>}, {pipeline_mode = #tpu.pipeline_mode<synchronous>, transform_indices = @transform_4, window_bounds = array<i64: 1, 64>}, {transform_indices = @transform_5, window_bounds = array<i64: 1, 512, 64>}]} {
    %c0 = arith.constant 0 : index
    %c0_0 = arith.constant 0 : index
    %c0_1 = arith.constant 0 : index
    %c0_2 = arith.constant 0 : index
    %0 = vector.load %arg2[%c0, %c0_0, %c0_1, %c0_2] : memref<1x3x512x32xbf16, #tpu.memory_space<vmem>>, vector<1x3x512x32xbf16>
    %1 = vector.shape_cast %0 : vector<1x3x512x32xbf16> to vector<3x512x32xbf16>
    %2 = vector.extract_strided_slice %1 {offsets = [0, 0, 0], sizes = [1, 512, 32], strides = [1, 1, 1]} : vector<3x512x32xbf16> to vector<1x512x32xbf16>
    %3 = vector.shape_cast %2 : vector<1x512x32xbf16> to vector<512x32xbf16>
    %4 = vector.extract_strided_slice %1 {offsets = [1, 0, 0], sizes = [1, 512, 32], strides = [1, 1, 1]} : vector<3x512x32xbf16> to vector<1x512x32xbf16>
    %5 = vector.shape_cast %4 : vector<1x512x32xbf16> to vector<512x32xbf16>
    %6 = arith.addf %3, %5 : vector<512x32xbf16>
    %7 = vector.extract_strided_slice %1 {offsets = [2, 0, 0], sizes = [1, 512, 32], strides = [1, 1, 1]} : vector<3x512x32xbf16> to vector<1x512x32xbf16>
    %8 = vector.shape_cast %7 : vector<1x512x32xbf16> to vector<512x32xbf16>
    %9 = arith.addf %6, %8 : vector<512x32xbf16>
    %c0_3 = arith.constant 0 : index
    %c0_4 = arith.constant 0 : index
    %10 = vector.load %arg3[%c0_3, %c0_4] : memref<32x64xbf16, #tpu.memory_space<vmem>>, vector<32x64xbf16>
    %cst = arith.constant dense<0.000000e+00> : vector<512x64xf32>
    %11 = tpu.matmul %9, %10, %cst {dimension_numbers = #tpu.dot_dimension_numbers<[1], [0], [0], [1], [0, 0, 1, 1], [], []>} : vector<512x32xbf16>, vector<32x64xbf16>, vector<512x64xf32> -> vector<512x64xf32>
    %c0_5 = arith.constant 0 : index
    %c0_6 = arith.constant 0 : index
    %12 = vector.load %arg4[%c0_5, %c0_6] : memref<1x64xf32, #tpu.memory_space<vmem>>, vector<1x64xf32>
    %13 = vector.broadcast %12 : vector<1x64xf32> to vector<512x64xf32>
    %14 = arith.addf %11, %13 : vector<512x64xf32>
    %cst_7 = arith.constant 0.000000e+00 : f32
    %15 = vector.broadcast %cst_7 : f32 to vector<512x64xf32>
    %16 = arith.maximumf %14, %15 : vector<512x64xf32>
    %17 = math.absf %14 : vector<512x64xf32>
    %cst_8 = arith.constant 0.000000e+00 : f32
    %18 = vector.broadcast %cst_8 : f32 to vector<512x64xf32>
    %19 = arith.subf %18, %17 : vector<512x64xf32>
    %20 = math.exp %19 : vector<512x64xf32>
    %cst_9 = arith.constant 1.000000e+00 : f32
    %21 = vector.broadcast %cst_9 : f32 to vector<512x64xf32>
    %22 = arith.addf %21, %20 : vector<512x64xf32>
    %23 = math.log %22 : vector<512x64xf32>
    %24 = arith.addf %16, %23 : vector<512x64xf32>
    %25 = arith.truncf %24 : vector<512x64xf32> to vector<512x64xbf16>
    %c0_10 = arith.constant 0 : index
    %c0_11 = arith.constant 0 : index
    %26 = vector.load %arg5[%c0_10, %c0_11] : memref<64x64xbf16, #tpu.memory_space<vmem>>, vector<64x64xbf16>
    %cst_12 = arith.constant dense<0.000000e+00> : vector<512x64xf32>
    %27 = tpu.matmul %25, %26, %cst_12 {dimension_numbers = #tpu.dot_dimension_numbers<[1], [0], [0], [1], [0, 0, 1, 1], [], []>} : vector<512x64xbf16>, vector<64x64xbf16>, vector<512x64xf32> -> vector<512x64xf32>
    %c0_13 = arith.constant 0 : index
    %c0_14 = arith.constant 0 : index
    %28 = vector.load %arg6[%c0_13, %c0_14] : memref<1x64xf32, #tpu.memory_space<vmem>>, vector<1x64xf32>
    %29 = vector.broadcast %28 : vector<1x64xf32> to vector<512x64xf32>
    %30 = arith.addf %27, %29 : vector<512x64xf32>
    %31 = vector.extract_strided_slice %30 {offsets = [0, 0], sizes = [512, 32], strides = [1, 1]} : vector<512x64xf32> to vector<512x32xf32>
    %cst_15 = arith.constant 0.000000e+00 : f32
    %32 = vector.broadcast %cst_15 : f32 to vector<512x32xf32>
    %33 = arith.subf %32, %31 : vector<512x32xf32>
    %34 = math.exp %33 : vector<512x32xf32>
    %cst_16 = arith.constant 1.000000e+00 : f32
    %35 = vector.broadcast %cst_16 : f32 to vector<512x32xf32>
    %36 = arith.addf %35, %34 : vector<512x32xf32>
    %37 = tpu.reciprocal %36 {approx = true} : vector<512x32xf32> -> vector<512x32xf32>
    %cst_17 = arith.constant 1.002000e+00 : f32
    %38 = vector.broadcast %cst_17 : f32 to vector<512x32xf32>
    %39 = arith.mulf %37, %38 : vector<512x32xf32>
    %cst_18 = arith.constant 1.000000e-03 : f32
    %40 = vector.broadcast %cst_18 : f32 to vector<512x32xf32>
    %41 = arith.subf %39, %40 : vector<512x32xf32>
    %42 = vector.extract_strided_slice %30 {offsets = [0, 32], sizes = [512, 32], strides = [1, 1]} : vector<512x64xf32> to vector<512x32xf32>
    %43 = tpu.concatenate %41, %42 in 1 : vector<512x32xf32>, vector<512x32xf32> -> vector<512x64xf32>
    %44 = arith.truncf %43 : vector<512x64xf32> to vector<512x64xbf16>
    %c0_19 = arith.constant 0 : index
    %c0_20 = arith.constant 0 : index
    %c0_21 = arith.constant 0 : index
    %45 = vector.load %arg7[%c0_19, %c0_20, %c0_21] : memref<1x512x64xbf16, #tpu.memory_space<vmem>>, vector<1x512x64xbf16>
    %46 = vector.shape_cast %45 : vector<1x512x64xbf16> to vector<512x64xbf16>
    %47 = vector.shape_cast %44 : vector<512x64xbf16> to vector<1x512x64xbf16>
    tpu.vector_store %arg7[%c0_19, %c0_20, %c0_21], %47 {strides = array<i32>} : memref<1x512x64xbf16, #tpu.memory_space<vmem>>, vector<1x512x64xbf16>,
    return
  }
  func.func @transform_0(%arg0: i32, %arg1: i32) -> (i32, i32, i32, i32) {
    %c0_i32 = arith.constant 0 : i32
    %c0_i32_0 = arith.constant 0 : i32
    %c0_i32_1 = arith.constant 0 : i32
    return %arg0, %c0_i32, %arg1, %c0_i32_0 : i32, i32, i32, i32
  }
  func.func @transform_1(%arg0: i32, %arg1: i32) -> (i32, i32) {
    %c0_i32 = arith.constant 0 : i32
    %c0_i32_0 = arith.constant 0 : i32
    %c0_i32_1 = arith.constant 0 : i32
    return %c0_i32, %c0_i32_0 : i32, i32
  }
  func.func @transform_2(%arg0: i32, %arg1: i32) -> (i32, i32) {
    %c0_i32 = arith.constant 0 : i32
    %c0_i32_0 = arith.constant 0 : i32
    %c0_i32_1 = arith.constant 0 : i32
    return %c0_i32, %c0_i32_0 : i32, i32
  }
  func.func @transform_3(%arg0: i32, %arg1: i32) -> (i32, i32) {
    %c0_i32 = arith.constant 0 : i32
    %c0_i32_0 = arith.constant 0 : i32
    %c0_i32_1 = arith.constant 0 : i32
    return %c0_i32, %c0_i32_0 : i32, i32
  }
  func.func @transform_4(%arg0: i32, %arg1: i32) -> (i32, i32) {
    %c0_i32 = arith.constant 0 : i32
    %c0_i32_0 = arith.constant 0 : i32
    %c0_i32_1 = arith.constant 0 : i32
    return %c0_i32, %c0_i32_0 : i32, i32
  }
  func.func @transform_5(%arg0: i32, %arg1: i32) -> (i32, i32, i32) {
    %c0_i32 = arith.constant 0 : i32
    %c0_i32_0 = arith.constant 0 : i32
    return %arg0, %arg1, %c0_i32 : i32, i32, i32
  }
}

</mosaic_0001>

<llo_original>
// kernel: mul.105
$region0: #{mul.105}
  #allocation0 [shape = 's32[1]{0}', space=sflag, size = 0x4, scoped, tag = 'scoped memory for mul.105']
  %s0 = inlined_call_operand.vmem [shape: f32[2], index: 0, kind: input, shape index: {}]
  %s1 = inlined_call_operand.vmem [shape: f32[2,1,16,16], index: 1, kind: output, shape index: {}]
  // Predicated region
  $region2: #{mul.105} parent=0 // pred_check
    _
  $region3: #{mul.105} parent=0 // pred_check_branch
    %3 = sbr.rel (0) target = $region5
  $region4: #{mul.105} parent=0 // pred_region
    _
  $region5: #{mul.105} parent=0 // pred_fallthru
    _
  %v4 = vld [vmem:[%s0] ss:$0 sm:$0xff]
  %5 = vbcast.lane.b32.xlu0 %v4, 0
  %v6 = vpop.permute.xlu0 %5
  %7 = vst [vmem:[%s1] sm:$0xff] %v6
  %v8 = vld [vmem:[%s0] ss:$0 sm:$0xff]
  %9 = vbcast.lane.b32.xlu0 %v8, 1
  %v10 = vpop.permute.xlu0 %9
  %s11 = scalar_lea.vmem %s1, 16
  %12 = vst [vmem:[%s11] sm:$0xff] %v10
  %s13 = scalar_lea.vmem %s1, 8
  %14 = vst [vmem:[%s13] sm:$0xff] %v6
  %s15 = scalar_lea.vmem %s1, 24
  %16 = vst [vmem:[%s15] sm:$0xff] %v10

// kernel: triplane_generator_forward.2
$region0: #{triplane_generator_forward.2}
  #allocation0 [shape = 'u32[]', space=smem, size = 0x4, offset = 0x4, fixed_abs, tag = 'smem constant byte address 0x4 - core index']
  #allocation1 [shape = 'u32[144,128]{1,0:T(1,128)}', space=vmem, size = 0x12000, scoped, tag = 'internal scratch']
  %s0 = inlined_call_operand.vmem [shape: bf16[6,32,256], index: 0, kind: input, shape index: {}]
  %s1 = inlined_call_operand.vmem [shape: bf16[6,32,256], index: 1, kind: input, shape index: {}]
  %s2 = inlined_call_operand.vmem [shape: f32[6,1,256], index: 2, kind: input, shape index: {}]
  %s3 = inlined_call_operand.vmem [shape: bf16[6,32,256], index: 3, kind: output, shape index: {}]
  %s4 = sld [smem:[#allocation0]]
  $region45: #{triplane_generator_forward.2} parent=0
    _
  %s6 = ssub.s32 1, %s4
  %s7 = scalar_select 0, %s6, %s4
  loop: start=0, step=1, limit=4
  $region2: #{triplane_generator_forward.2} parent=0 // loop_pre_header
    _
  $region3: #{triplane_generator_forward.2} parent=0 // loop_header
    %s9 = sphi 0, %s13
    %p10 = scmp.ge.s32.totalorder %s9, 4
    %s16 = sphi 0, %s28
    %s17 = sphi 0, %s24
    %s18 = sphi 0, %s16
    %s19 = sphi 0, %s17
    %s20 = sphi 0, %s18
    %s21 = sphi 0, %s19
    %s33 = sphi 0, %s35
    %s36 = sphi 0, %s33
    %s37 = sphi 0, %s36
    %s53 = sphi 0, %s37
    %s61 = sphi 0, %s63
    %s64 = sphi 0, %s61
    %s65 = sphi 0, %s64
    %s81 = sphi 0, %s65
    %s89 = sphi 0, %s91
    %s92 = sphi 0, %s89
    %s93 = sphi 0, %s92
    %s109 = sphi 0, %s93
    %s117 = sphi 0, %s119
    %s120 = sphi 0, %s117
    %s121 = sphi 0, %s120
    %s137 = sphi 0, %s121
  $region4: #{triplane_generator_forward.2} parent=0 // loop_header_branch
    %12 = sbr.rel (%p10) target = $region8
  $region5: #{triplane_generator_forward.2} parent=0 // loop_body
    %s14 = ssub.s32 %s9, 1
    %s15 = ssub.s32 %s9, 2
    %s22 = sadd.s32 1, %s17
    %p23 = scmp.ge.s32.totalorder %s22, 1
    %s24 = scalar_select %p23, 0, %s22
    %s25 = sadd.s32 1, %s16
    %s26 = scalar_select %p23, %s25, %s16
    %p27 = scmp.ge.s32.totalorder %s26, 2
    %s28 = scalar_select %p27, 0, %s26
    %s29 = ssub.s32 %s16, %s28
    %s30 = ssub.s32 %s17, %s24
    %s31 = sor.u32 %s29, %s30
    %p32 = scmp.eq.s32.totalorder %s31, 0
    %s34 = sadd.s32 %s33, 1
    %s35 = scalar_select %p32, %s33, %s34
    %p38 = pneg %p32
    %p39 = scmp.eq.s32.totalorder %s9, 1
    %p40 = por %p38, %p39
    %p41 = scmp.ne.s32.totalorder %s33, %s36
    %p42 = scmp.eq.s32.totalorder %s9, 0
    %p43 = por %p41, %p42
    %p44 = scmp.ne.s32.totalorder %s33, %s36
    %p45 = scmp.eq.s32.totalorder %s14, 1
    %p46 = por %p44, %p45
    %p47 = scmp.ne.s32.totalorder %s36, %s37
    %p48 = scmp.eq.s32.totalorder %s14, 0
    %p49 = por %p47, %p48
    %p50 = scmp.ne.s32.totalorder %s36, %s37
    %p51 = scmp.eq.s32.totalorder %s15, 1
    %p52 = por %p50, %p51
    %p54 = scmp.ne.s32.totalorder %s37, %s53
    %p55 = scmp.eq.s32.totalorder %s15, 0
    %p56 = por %p54, %p55
    %s57 = ssub.s32 %s16, %s28
    %s58 = ssub.s32 %s17, %s24
    %s59 = sor.u32 %s57, %s58
    %p60 = scmp.eq.s32.totalorder %s59, 0
    %s62 = sadd.s32 %s61, 1
    %s63 = scalar_select %p60, %s61, %s62
    %p66 = pneg %p60
    %p67 = scmp.eq.s32.totalorder %s9, 1
    %p68 = por %p66, %p67
    %p69 = scmp.ne.s32.totalorder %s61, %s64
    %p70 = scmp.eq.s32.totalorder %s9, 0
    %p71 = por %p69, %p70
    %p72 = scmp.ne.s32.totalorder %s61, %s64
    %p73 = scmp.eq.s32.totalorder %s14, 1
    %p74 = por %p72, %p73
    %p75 = scmp.ne.s32.totalorder %s64, %s65
    %p76 = scmp.eq.s32.totalorder %s14, 0
    %p77 = por %p75, %p76
    %p78 = scmp.ne.s32.totalorder %s64, %s65
    %p79 = scmp.eq.s32.totalorder %s15, 1
    %p80 = por %p78, %p79
    %p82 = scmp.ne.s32.totalorder %s65, %s81
    %p83 = scmp.eq.s32.totalorder %s15, 0
    %p84 = por %p82, %p83
    %s85 = ssub.s32 %s16, %s28
    %s86 = ssub.s32 %s17, %s24
    %s87 = sor.u32 %s85, %s86
    %p88 = scmp.eq.s32.totalorder %s87, 0
    %s90 = sadd.s32 %s89, 1
    %s91 = scalar_select %p88, %s89, %s90
    %p94 = pneg %p88
    %p95 = scmp.eq.s32.totalorder %s9, 1
    %p96 = por %p94, %p95
    %p97 = scmp.ne.s32.totalorder %s89, %s92
    %p98 = scmp.eq.s32.totalorder %s9, 0
    %p99 = por %p97, %p98
    %p100 = scmp.ne.s32.totalorder %s89, %s92
    %p101 = scmp.eq.s32.totalorder %s14, 1
    %p102 = por %p100, %p101
    %p103 = scmp.ne.s32.totalorder %s92, %s93
    %p104 = scmp.eq.s32.totalorder %s14, 0
    %p105 = por %p103, %p104
    %p106 = scmp.ne.s32.totalorder %s92, %s93
    %p107 = scmp.eq.s32.totalorder %s15, 1
    %p108 = por %p106, %p107
    %p110 = scmp.ne.s32.totalorder %s93, %s109
    %p111 = scmp.eq.s32.totalorder %s15, 0
    %p112 = por %p110, %p111
    %s113 = ssub.s32 %s16, %s28
    %s114 = ssub.s32 %s17, %s24
    %s115 = sor.u32 %s113, %s114
    %p116 = scmp.eq.s32.totalorder %s115, 0
    %s118 = sadd.s32 %s117, 1
    %s119 = scalar_select %p116, %s117, %s118
    %p122 = pneg %p116
    %p123 = scmp.eq.s32.totalorder %s9, 1
    %p124 = por %p122, %p123
    %p125 = scmp.ne.s32.totalorder %s117, %s120
    %p126 = scmp.eq.s32.totalorder %s9, 0
    %p127 = por %p125, %p126
    %p128 = scmp.ne.s32.totalorder %s117, %s120
    %p129 = scmp.eq.s32.totalorder %s14, 1
    %p130 = por %p128, %p129
    %p131 = scmp.ne.s32.totalorder %s120, %s121
    %p132 = scmp.eq.s32.totalorder %s14, 0
    %p133 = por %p131, %p132
    %p134 = scmp.ne.s32.totalorder %s120, %s121
    %p135 = scmp.eq.s32.totalorder %s15, 1
    %p136 = por %p134, %p135
    %p138 = scmp.ne.s32.totalorder %s121, %s137
    %p139 = scmp.eq.s32.totalorder %s15, 0
    %p140 = por %p138, %p139
    %p141 = scmp.le.s32.totalorder 1, %s9
    %p142 = scmp.lt.s32.totalorder %s9, 3
    %p143 = pnand %p141, %p142
    %p144 = pneg %p143
    // Predicated region
    $region9: #{triplane_generator_forward.2} parent=5 // pred_check
      _
    $region10: #{triplane_generator_forward.2} parent=5 // pred_check_branch
      %146 = sbr.rel (%p143) target = $region12
    $region11: #{triplane_generator_forward.2} parent=5 // pred_region
      %s147 = ssub.s32 %s9, 1
    $region12: #{triplane_generator_forward.2} parent=5 // pred_fallthru
      _
    %p148 = scmp.lt.s32.totalorder %s9, 2
    // Predicated region
    $region13: #{triplane_generator_forward.2} parent=5 // pred_check
      %p149 = pneg %p148
    $region14: #{triplane_generator_forward.2} parent=5 // pred_check_branch
      %151 = sbr.rel (%p149) target = $region16
    $region15: #{triplane_generator_forward.2} parent=5 // pred_region
      // Predicated region
      $region17: #{triplane_generator_forward.2} parent=15 // pred_check
        %p152 = pneg %p43
      $region18: #{triplane_generator_forward.2} parent=15 // pred_check_branch
        %154 = sbr.rel (%p152) target = $region20
      $region19: #{triplane_generator_forward.2} parent=15 // pred_region
        %s155 = smul.u32 3, %s16
        %s156 = smul.u32 2, %s17
        %p157 = scmp.lt.s32.totalorder %s155, 5
        %s158 = scalar_select %p157, %s155, 5
        %p159 = scmp.lt.s32.totalorder %s156, 1
        %s160 = scalar_select %p159, %s156, 1
        %s161 = smul.addr %s158, 8
        %s162 = sadd.s32 %s160, %s161
        %s163 = smul.addr %s162, 4
        %s164 = scalar_lea.vmem %s0, %s163
        %s165 = smul.u32 3, %s16
        %s166 = smul.u32 2, %s17
      $region20: #{triplane_generator_forward.2} parent=15 // pred_fallthru
        _
      // Predicated region
      $region21: #{triplane_generator_forward.2} parent=15 // pred_check
        %p167 = pneg %p71
      $region22: #{triplane_generator_forward.2} parent=15 // pred_check_branch
        %169 = sbr.rel (%p167) target = $region24
      $region23: #{triplane_generator_forward.2} parent=15 // pred_region
        %s170 = smul.u32 3, %s16
        %s171 = smul.u32 2, %s17
        %p172 = scmp.lt.s32.totalorder %s170, 5
        %s173 = scalar_select %p172, %s170, 5
        %p174 = scmp.lt.s32.totalorder %s171, 1
        %s175 = scalar_select %p174, %s171, 1
        %s176 = smul.addr %s173, 8
        %s177 = sadd.s32 %s175, %s176
        %s178 = smul.addr %s177, 4
        %s179 = scalar_lea.vmem %s1, %s178
        %s180 = smul.u32 3, %s16
        %s181 = smul.u32 2, %s17
      $region24: #{triplane_generator_forward.2} parent=15 // pred_fallthru
        _
      // Predicated region
      $region25: #{triplane_generator_forward.2} parent=15 // pred_check
        %p182 = pneg %p99
      $region26: #{triplane_generator_forward.2} parent=15 // pred_check_branch
        %184 = sbr.rel (%p182) target = $region28
      $region27: #{triplane_generator_forward.2} parent=15 // pred_region
        %s185 = smul.u32 3, %s16
        %s186 = smul.u32 2, %s17
        %p187 = scmp.lt.s32.totalorder %s185, 5
        %s188 = scalar_select %p187, %s185, 5
        %p189 = scmp.lt.s32.totalorder %s186, 1
        %s190 = scalar_select %p189, %s186, 1
        %s191 = smul.addr %s188, 2
        %s192 = sadd.s32 %s190, %s191
        %s193 = scalar_lea.vmem %s2, %s192
        %s194 = smul.u32 3, %s16
        %s195 = smul.u32 2, %s17
      $region28: #{triplane_generator_forward.2} parent=15 // pred_fallthru
        _
    $region16: #{triplane_generator_forward.2} parent=5 // pred_fallthru
      _
    %p196 = scmp.le.s32.totalorder 1, %s9
    %p197 = scmp.lt.s32.totalorder %s9, 3
    %p198 = pnand %p196, %p197
    %p199 = pneg %p198
    // Predicated region
    $region29: #{triplane_generator_forward.2} parent=5 // pred_check
      _
    $region30: #{triplane_generator_forward.2} parent=5 // pred_check_branch
      %201 = sbr.rel (%p198) target = $region32
    $region31: #{triplane_generator_forward.2} parent=5 // pred_region
      %s202 = ssub.s32 %s9, 1
      %s203 = smul.u32 3, %s18
      %s204 = smul.u32 2, %s19
      %p205 = scmp.lt.s32.totalorder %s203, 5
      %s206 = scalar_select %p205, %s203, 5
      %p207 = scmp.lt.s32.totalorder %s204, 1
      %s208 = scalar_select %p207, %s204, 1
      %s209 = smul.addr %s206, 8
      %s210 = sadd.s32 %s208, %s209
      %s211 = smul.addr %s210, 4
      %s212 = scalar_lea.vmem %s0, %s211
      %p213 = pneg %p49
      %p214 = pneg %p46
      %s215 = smul.u32 3, %s18
      %s216 = smul.u32 2, %s19
      %p217 = scmp.lt.s32.totalorder %s215, 5
      %s218 = scalar_select %p217, %s215, 5
      %p219 = scmp.lt.s32.totalorder %s216, 1
      %s220 = scalar_select %p219, %s216, 1
      %s221 = smul.addr %s218, 8
      %s222 = sadd.s32 %s220, %s221
      %s223 = smul.addr %s222, 4
      %s224 = scalar_lea.vmem %s1, %s223
      %p225 = pneg %p77
      %p226 = pneg %p74
      %s227 = smul.u32 3, %s18
      %s228 = smul.u32 2, %s19
      %p229 = scmp.lt.s32.totalorder %s227, 5
      %s230 = scalar_select %p229, %s227, 5
      %p231 = scmp.lt.s32.totalorder %s228, 1
      %s232 = scalar_select %p231, %s228, 1
      %s233 = smul.addr %s230, 2
      %s234 = sadd.s32 %s232, %s233
      %s235 = scalar_lea.vmem %s2, %s234
      %p236 = pneg %p105
      %p237 = pneg %p102
      %p238 = pneg %p133
      %p239 = pneg %p130
      %s240 = smul.u32 3, %s18
      %s241 = smul.u32 2, %s19
      %p242 = scmp.lt.s32.totalorder %s240, 5
      %s243 = scalar_select %p242, %s240, 5
      %p244 = scmp.lt.s32.totalorder %s241, 1
      %s245 = scalar_select %p244, %s241, 1
      %s246 = smul.addr %s243, 8
      %s247 = sadd.s32 %s245, %s246
      %s248 = smul.addr %s247, 4
      %s249 = scalar_lea.vmem %s3, %s248
      %s250 = smul.u32 3, %s18
      %s251 = smul.u32 2, %s19
      %p252 = scmp.lt.s32.totalorder %s250, 5
      %s253 = scalar_select %p252, %s250, 5
      %p254 = scmp.lt.s32.totalorder %s251, 1
      %s255 = scalar_select %p254, %s251, 1
      %s256 = smul.addr %s253, 8
      %s257 = sadd.s32 %s255, %s256
      %s258 = smul.addr %s257, 4
      %s259 = scalar_lea.vmem %s0, %s258
      %s260 = smul.u32 3, %s18
      %s261 = smul.u32 2, %s19
      %s262 = smul.u32 3, %s18
      %s263 = smul.u32 2, %s19
      %p264 = scmp.lt.s32.totalorder %s262, 5
      %s265 = scalar_select %p264, %s262, 5
      %p266 = scmp.lt.s32.totalorder %s263, 1
      %s267 = scalar_select %p266, %s263, 1
      %s268 = smul.addr %s265, 8
      %s269 = sadd.s32 %s267, %s268
      %s270 = smul.addr %s269, 4
      %s271 = scalar_lea.vmem %s1, %s270
      %s272 = smul.u32 3, %s18
      %s273 = smul.u32 2, %s19
      %s274 = smul.u32 3, %s18
      %s275 = smul.u32 2, %s19
      %p276 = scmp.lt.s32.totalorder %s274, 5
      %s277 = scalar_select %p276, %s274, 5
      %p278 = scmp.lt.s32.totalorder %s275, 1
      %s279 = scalar_select %p278, %s275, 1
      %s280 = smul.addr %s277, 2
      %s281 = sadd.s32 %s279, %s280
      %s282 = scalar_lea.vmem %s2, %s281
      %s283 = smul.u32 3, %s18
      %s284 = smul.u32 2, %s19
      %s285 = smul.u32 3, %s18
      %s286 = smul.u32 2, %s19
      %p287 = scmp.lt.s32.totalorder %s285, 5
      %s288 = scalar_select %p287, %s285, 5
      %p289 = scmp.lt.s32.totalorder %s286, 1
      %s290 = scalar_select %p289, %s286, 1
      %s291 = smul.addr %s288, 8
      %s292 = sadd.s32 %s290, %s291
      %s293 = smul.addr %s292, 4
      %s294 = scalar_lea.vmem %s3, %s293
      %s295 = smul.u32 3, %s18
      %s296 = smul.u32 2, %s19
      %v297 = vld [vmem:[%s282] sm:$0x3]
      %v298 = vld [vmem:[%s282 + $0x2] sm:$0x3]
      %v299 = vld [vmem:[%s282 + $0x4] sm:$0x3]
      %v300 = vld [vmem:[%s259] sm:$0xff]
      %v301 = vld [vmem:[%s259 + $0x8] sm:$0xff]
      %v302 = vld [vmem:[%s259 + $0x10] sm:$0xff]
      %v303 = vld [vmem:[%s259 + $0x18] sm:$0xff]
      %v304 = vld [vmem:[%s259 + $0x20] sm:$0xff]
      %v305 = vld [vmem:[%s259 + $0x28] sm:$0xff]
      %v306 = vld [vmem:[%s259 + $0x30] sm:$0xff]
      %v307 = vld [vmem:[%s259 + $0x38] sm:$0xff]
      %v308 = vld [vmem:[%s259 + $0x40] sm:$0xff]
      %v309 = vld [vmem:[%s259 + $0x48] sm:$0xff]
      %v310 = vld [vmem:[%s259 + $0x50] sm:$0xff]
      %v311 = vld [vmem:[%s259 + $0x58] sm:$0xff]
      %v312 = vunpack.c.l.bf16 %v300
      %v313 = vunpack.c.h.bf16 %v300
      %v314 = vunpack.c.l.bf16 %v301
      %v315 = vunpack.c.h.bf16 %v301
      %v316 = vunpack.c.l.bf16 %v302
      %v317 = vunpack.c.h.bf16 %v302
      %v318 = vunpack.c.l.bf16 %v303
      %v319 = vunpack.c.h.bf16 %v303
      %v320 = vunpack.c.l.bf16 %v304
      %v321 = vunpack.c.h.bf16 %v304
      %v322 = vunpack.c.l.bf16 %v305
      %v323 = vunpack.c.h.bf16 %v305
      %v324 = vunpack.c.l.bf16 %v306
      %v325 = vunpack.c.h.bf16 %v306
      %v326 = vunpack.c.l.bf16 %v307
      %v327 = vunpack.c.h.bf16 %v307
      %v328 = vunpack.c.l.bf16 %v308
      %v329 = vunpack.c.h.bf16 %v308
      %v330 = vunpack.c.l.bf16 %v309
      %v331 = vunpack.c.h.bf16 %v309
      %v332 = vunpack.c.l.bf16 %v310
      %v333 = vunpack.c.h.bf16 %v310
      %v334 = vunpack.c.l.bf16 %v311
      %v335 = vunpack.c.h.bf16 %v311
      %v336 = vld [vmem:[%s271] sm:$0xff]
      %v337 = vld [vmem:[%s271 + $0x8] sm:$0xff]
      %v338 = vld [vmem:[%s271 + $0x10] sm:$0xff]
      %v339 = vld [vmem:[%s271 + $0x18] sm:$0xff]
      %v340 = vld [vmem:[%s271 + $0x20] sm:$0xff]
      %v341 = vld [vmem:[%s271 + $0x28] sm:$0xff]
      %v342 = vld [vmem:[%s271 + $0x30] sm:$0xff]
      %v343 = vld [vmem:[%s271 + $0x38] sm:$0xff]
      %v344 = vld [vmem:[%s271 + $0x40] sm:$0xff]
      %v345 = vld [vmem:[%s271 + $0x48] sm:$0xff]
      %v346 = vld [vmem:[%s271 + $0x50] sm:$0xff]
      %v347 = vld [vmem:[%s271 + $0x58] sm:$0xff]
      %v348 = vunpack.c.l.bf16 %v336
      %v349 = vunpack.c.h.bf16 %v336
      %v350 = vunpack.c.l.bf16 %v337
      %v351 = vunpack.c.h.bf16 %v337
      %v352 = vunpack.c.l.bf16 %v338
      %v353 = vunpack.c.h.bf16 %v338
      %v354 = vunpack.c.l.bf16 %v339
      %v355 = vunpack.c.h.bf16 %v339
      %v356 = vunpack.c.l.bf16 %v340
      %v357 = vunpack.c.h.bf16 %v340
      %v358 = vunpack.c.l.bf16 %v341
      %v359 = vunpack.c.h.bf16 %v341
      %v360 = vunpack.c.l.bf16 %v342
      %v361 = vunpack.c.h.bf16 %v342
      %v362 = vunpack.c.l.bf16 %v343
      %v363 = vunpack.c.h.bf16 %v343
      %v364 = vunpack.c.l.bf16 %v344
      %v365 = vunpack.c.h.bf16 %v344
      %v366 = vunpack.c.l.bf16 %v345
      %v367 = vunpack.c.h.bf16 %v345
      %v368 = vunpack.c.l.bf16 %v346
      %v369 = vunpack.c.h.bf16 %v346
      %v370 = vunpack.c.l.bf16 %v347
      %v371 = vunpack.c.h.bf16 %v347
      %v375 = vlaneseq
      %v376 = vshrl.u32 %v375, 7
      %v377 = vsub.s32 0, %v376
      %v378 = vrot.slane %v297, %v377
      %v379 = vlaneseq
      %v380 = vshrl.u32 %v379, 7
      %v381 = vsub.s32 1, %v380
      %v382 = vrot.slane %v297, %v381
      %v383 = vlaneseq
      %v384 = vshrl.u32 %v383, 7
      %v385 = vsub.s32 0, %v384
      %v386 = vrot.slane %v298, %v385
      %v387 = vlaneseq
      %v388 = vshrl.u32 %v387, 7
      %v389 = vsub.s32 1, %v388
      %v390 = vrot.slane %v298, %v389
      %v391 = vlaneseq
      %v392 = vshrl.u32 %v391, 7
      %v393 = vsub.s32 0, %v392
      %v394 = vrot.slane %v299, %v393
      %v395 = vlaneseq
      %v396 = vshrl.u32 %v395, 7
      %v397 = vsub.s32 1, %v396
      %v398 = vrot.slane %v299, %v397
      %v405 = vmul.f32 %v312, %v378
      %v406 = vmul.f32 %v313, %v382
      %v407 = vmul.f32 %v314, %v378
      %v408 = vmul.f32 %v315, %v382
      %v409 = vmul.f32 %v316, %v378
      %v410 = vmul.f32 %v317, %v382
      %v411 = vmul.f32 %v318, %v378
      %v412 = vmul.f32 %v319, %v382
      %v413 = vmul.f32 %v320, %v386
      %v414 = vmul.f32 %v321, %v390
      %v415 = vmul.f32 %v322, %v386
      %v416 = vmul.f32 %v323, %v390
      %v417 = vmul.f32 %v324, %v386
      %v418 = vmul.f32 %v325, %v390
      %v419 = vmul.f32 %v326, %v386
      %v420 = vmul.f32 %v327, %v390
      %v421 = vmul.f32 %v328, %v394
      %v422 = vmul.f32 %v329, %v398
      %v423 = vmul.f32 %v330, %v394
      %v424 = vmul.f32 %v331, %v398
      %v425 = vmul.f32 %v332, %v394
      %v426 = vmul.f32 %v333, %v398
      %v427 = vmul.f32 %v334, %v394
      %v428 = vmul.f32 %v335, %v398
      %v429 = vsub.f32 1.0, %v297
      %v430 = vsub.f32 1.0, %v298
      %v431 = vsub.f32 1.0, %v299
      %v435 = vlaneseq
      %v436 = vshrl.u32 %v435, 7
      %v437 = vsub.s32 0, %v436
      %v438 = vrot.slane %v429, %v437
      %v439 = vlaneseq
      %v440 = vshrl.u32 %v439, 7
      %v441 = vsub.s32 1, %v440
      %v442 = vrot.slane %v429, %v441
      %v443 = vlaneseq
      %v444 = vshrl.u32 %v443, 7
      %v445 = vsub.s32 0, %v444
      %v446 = vrot.slane %v430, %v445
      %v447 = vlaneseq
      %v448 = vshrl.u32 %v447, 7
      %v449 = vsub.s32 1, %v448
      %v450 = vrot.slane %v430, %v449
      %v451 = vlaneseq
      %v452 = vshrl.u32 %v451, 7
      %v453 = vsub.s32 0, %v452
      %v454 = vrot.slane %v431, %v453
      %v455 = vlaneseq
      %v456 = vshrl.u32 %v455, 7
      %v457 = vsub.s32 1, %v456
      %v458 = vrot.slane %v431, %v457
      %v465 = vmul.f32 %v348, %v438
      %v466 = vmul.f32 %v349, %v442
      %v467 = vmul.f32 %v350, %v438
      %v468 = vmul.f32 %v351, %v442
      %v469 = vmul.f32 %v352, %v438
      %v470 = vmul.f32 %v353, %v442
      %v471 = vmul.f32 %v354, %v438
      %v472 = vmul.f32 %v355, %v442
      %v473 = vmul.f32 %v356, %v446
      %v474 = vmul.f32 %v357, %v450
      %v475 = vmul.f32 %v358, %v446
      %v476 = vmul.f32 %v359, %v450
      %v477 = vmul.f32 %v360, %v446
      %v478 = vmul.f32 %v361, %v450
      %v479 = vmul.f32 %v362, %v446
      %v480 = vmul.f32 %v363, %v450
      %v481 = vmul.f32 %v364, %v454
      %v482 = vmul.f32 %v365, %v458
      %v483 = vmul.f32 %v366, %v454
      %v484 = vmul.f32 %v367, %v458
      %v485 = vmul.f32 %v368, %v454
      %v486 = vmul.f32 %v369, %v458
      %v487 = vmul.f32 %v370, %v454
      %v488 = vmul.f32 %v371, %v458
      %v489 = vadd.f32 %v405, %v465
      %v490 = vadd.f32 %v406, %v466
      %v491 = vadd.f32 %v407, %v467
      %v492 = vadd.f32 %v408, %v468
      %v493 = vadd.f32 %v409, %v469
      %v494 = vadd.f32 %v410, %v470
      %v495 = vadd.f32 %v411, %v471
      %v496 = vadd.f32 %v412, %v472
      %v497 = vadd.f32 %v413, %v473
      %v498 = vadd.f32 %v414, %v474
      %v499 = vadd.f32 %v415, %v475
      %v500 = vadd.f32 %v416, %v476
      %v501 = vadd.f32 %v417, %v477
      %v502 = vadd.f32 %v418, %v478
      %v503 = vadd.f32 %v419, %v479
      %v504 = vadd.f32 %v420, %v480
      %v505 = vadd.f32 %v421, %v481
      %v506 = vadd.f32 %v422, %v482
      %v507 = vadd.f32 %v423, %v483
      %v508 = vadd.f32 %v424, %v484
      %v509 = vadd.f32 %v425, %v485
      %v510 = vadd.f32 %v426, %v486
      %v511 = vadd.f32 %v427, %v487
      %v512 = vadd.f32 %v428, %v488
      %v513 = vpack.c.bf16 %v491, %v489
      %v514 = vpack.c.bf16 %v492, %v490
      %v515 = vpack.c.bf16 %v495, %v493
      %v516 = vpack.c.bf16 %v496, %v494
      %v517 = vpack.c.bf16 %v499, %v497
      %v518 = vpack.c.bf16 %v500, %v498
      %v519 = vpack.c.bf16 %v503, %v501
      %v520 = vpack.c.bf16 %v504, %v502
      %v521 = vpack.c.bf16 %v507, %v505
      %v522 = vpack.c.bf16 %v508, %v506
      %v523 = vpack.c.bf16 %v511, %v509
      %v524 = vpack.c.bf16 %v512, %v510
      %v537 = vunpack.c.l.b16 %v513
      %v538 = vunpack.c.l.b16 %v514
      %v539 = vunpack.c.h.b16 %v513
      %v540 = vunpack.c.h.b16 %v514
      %v541 = vunpack.c.l.b16 %v515
      %v542 = vunpack.c.l.b16 %v516
      %v543 = vunpack.c.h.b16 %v515
      %v544 = vunpack.c.h.b16 %v516
      %v545 = vunpack.c.l.b16 %v517
      %v546 = vunpack.c.l.b16 %v518
      %v547 = vunpack.c.h.b16 %v517
      %v548 = vunpack.c.h.b16 %v518
      %v549 = vunpack.c.l.b16 %v519
      %v550 = vunpack.c.l.b16 %v520
      %v551 = vunpack.c.h.b16 %v519
      %v552 = vunpack.c.h.b16 %v520
      %v553 = vunpack.c.l.b16 %v521
      %v554 = vunpack.c.l.b16 %v522
      %v555 = vunpack.c.h.b16 %v521
      %v556 = vunpack.c.h.b16 %v522
      %v557 = vunpack.c.l.b16 %v523
      %v558 = vunpack.c.l.b16 %v524
      %v559 = vunpack.c.h.b16 %v523
      %v560 = vunpack.c.h.b16 %v524
      %v561 = vpack.c.b16 %v538, %v537
      %v562 = vpack.c.b16 %v540, %v539
      %v563 = vpack.c.b16 %v542, %v541
      %v564 = vpack.c.b16 %v544, %v543
      %v565 = vpack.c.b16 %v546, %v545
      %v566 = vpack.c.b16 %v548, %v547
      %v567 = vpack.c.b16 %v550, %v549
      %v568 = vpack.c.b16 %v552, %v551
      %v569 = vpack.c.b16 %v554, %v553
      %v570 = vpack.c.b16 %v556, %v555
      %v571 = vpack.c.b16 %v558, %v557
      %v572 = vpack.c.b16 %v560, %v559
      %585 = vst [vmem:[%s294] sm:$0xff] %v561
      %586 = vst [vmem:[%s294 + $0x8] sm:$0xff] %v562
      %587 = vst [vmem:[%s294 + $0x10] sm:$0xff] %v563
      %588 = vst [vmem:[%s294 + $0x18] sm:$0xff] %v564
      %589 = vst [vmem:[%s294 + $0x20] sm:$0xff] %v565
      %590 = vst [vmem:[%s294 + $0x28] sm:$0xff] %v566
      %591 = vst [vmem:[%s294 + $0x30] sm:$0xff] %v567
      %592 = vst [vmem:[%s294 + $0x38] sm:$0xff] %v568
      %593 = vst [vmem:[%s294 + $0x40] sm:$0xff] %v569
      %594 = vst [vmem:[%s294 + $0x48] sm:$0xff] %v570
      %595 = vst [vmem:[%s294 + $0x50] sm:$0xff] %v571
      %596 = vst [vmem:[%s294 + $0x58] sm:$0xff] %v572
      %s597 = smul.u32 3, %s18
      %s598 = smul.u32 2, %s19
      %p599 = scmp.lt.s32.totalorder %s597, 5
      %s600 = scalar_select %p599, %s597, 5
      %p601 = scmp.lt.s32.totalorder %s598, 1
      %s602 = scalar_select %p601, %s598, 1
      %s603 = smul.addr %s600, 8
      %s604 = sadd.s32 %s602, %s603
      %s605 = smul.addr %s604, 4
      %s606 = scalar_lea.vmem %s3, %s605
      // Predicated region
      $region33: #{triplane_generator_forward.2} parent=31 // pred_check
        %p607 = pneg %p130
      $region34: #{triplane_generator_forward.2} parent=31 // pred_check_branch
        %609 = sbr.rel (%p607) target = $region36
      $region35: #{triplane_generator_forward.2} parent=31 // pred_region
        %s610 = smul.u32 3, %s18
        %s611 = smul.u32 2, %s19
      $region36: #{triplane_generator_forward.2} parent=31 // pred_fallthru
        _
    $region32: #{triplane_generator_forward.2} parent=5 // pred_fallthru
      _
    %p612 = scmp.le.s32.totalorder 2, %s9
    // Predicated region
    $region37: #{triplane_generator_forward.2} parent=5 // pred_check
      %p613 = pneg %p612
    $region38: #{triplane_generator_forward.2} parent=5 // pred_check_branch
      %615 = sbr.rel (%p613) target = $region40
    $region39: #{triplane_generator_forward.2} parent=5 // pred_region
      %s616 = ssub.s32 %s9, 2
      // Predicated region
      $region41: #{triplane_generator_forward.2} parent=39 // pred_check
        %p617 = pneg %p136
      $region42: #{triplane_generator_forward.2} parent=39 // pred_check_branch
        %619 = sbr.rel (%p617) target = $region44
      $region43: #{triplane_generator_forward.2} parent=39 // pred_region
        %s620 = smul.u32 3, %s20
        %s621 = smul.u32 2, %s21
        %p622 = scmp.lt.s32.totalorder %s620, 5
        %s623 = scalar_select %p622, %s620, 5
        %p624 = scmp.lt.s32.totalorder %s621, 1
        %s625 = scalar_select %p624, %s621, 1
        %s626 = smul.addr %s623, 8
        %s627 = sadd.s32 %s625, %s626
        %s628 = smul.addr %s627, 4
        %s629 = scalar_lea.vmem %s3, %s628
      $region44: #{triplane_generator_forward.2} parent=39 // pred_fallthru
        _
    $region40: #{triplane_generator_forward.2} parent=5 // pred_fallthru
      _
  $region6: #{triplane_generator_forward.2} parent=0 // loop_footer
    %s13 = sadd.s32 1, %s9
  $region7: #{triplane_generator_forward.2} parent=0 // loop_footer_branch
    %8 = sbr.rel target = $region3
  $region8: #{triplane_generator_forward.2} parent=0 // loop_exit
    _

// kernel: triplane_generator_forward.3
$region0: #{triplane_generator_forward.3}
  #allocation0 [shape = 'u32[]', space=smem, size = 0x4, offset = 0x4, fixed_abs, tag = 'smem constant byte address 0x4 - core index']
  #allocation1 [shape = 'u32[144,128]{1,0:T(1,128)}', space=vmem, size = 0x12000, scoped, tag = 'internal scratch']
  %s0 = inlined_call_operand.vmem [shape: bf16[2,3,512,32], index: 0, kind: input, shape index: {}]
  %s1 = inlined_call_operand.vmem [shape: bf16[32,64], index: 1, kind: input, shape index: {}]
  %s2 = inlined_call_operand.vmem [shape: f32[1,64], index: 2, kind: input, shape index: {}]
  %s3 = inlined_call_operand.vmem [shape: bf16[64,64], index: 3, kind: input, shape index: {}]
  %s4 = inlined_call_operand.vmem [shape: f32[1,64], index: 4, kind: input, shape index: {}]
  %s5 = inlined_call_operand.vmem [shape: bf16[2,512,64], index: 5, kind: output, shape index: {}]
  %s6 = sld [smem:[#allocation0]]
  $region53: #{triplane_generator_forward.3} parent=0
    _
  %s8 = ssub.s32 1, %s6
  %s9 = scalar_select 0, %s8, %s6
  loop: start=0, step=1, limit=4
  $region2: #{triplane_generator_forward.3} parent=0 // loop_pre_header
    _
  $region3: #{triplane_generator_forward.3} parent=0 // loop_header
    %s11 = sphi 0, %s15
    %p12 = scmp.ge.s32.totalorder %s11, 4
    %s18 = sphi 0, %s30
    %s19 = sphi 0, %s26
    %s20 = sphi 0, %s18
    %s21 = sphi 0, %s19
    %s22 = sphi 0, %s20
    %s23 = sphi 0, %s21
    %s35 = sphi 0, %s37
    %s38 = sphi 0, %s35
    %s39 = sphi 0, %s38
    %s55 = sphi 0, %s39
    %s59 = sphi 0, %s59
    %s61 = sphi 0, %s59
    %s62 = sphi 0, %s61
    %s76 = sphi 0, %s62
    %s80 = sphi 0, %s80
    %s82 = sphi 0, %s80
    %s83 = sphi 0, %s82
    %s97 = sphi 0, %s83
    %s101 = sphi 0, %s101
    %s103 = sphi 0, %s101
    %s104 = sphi 0, %s103
    %s118 = sphi 0, %s104
    %s122 = sphi 0, %s122
    %s124 = sphi 0, %s122
    %s125 = sphi 0, %s124
    %s139 = sphi 0, %s125
    %s147 = sphi 0, %s149
    %s150 = sphi 0, %s147
    %s151 = sphi 0, %s150
    %s167 = sphi 0, %s151
  $region4: #{triplane_generator_forward.3} parent=0 // loop_header_branch
    %14 = sbr.rel (%p12) target = $region8
  $region5: #{triplane_generator_forward.3} parent=0 // loop_body
    %s16 = ssub.s32 %s11, 1
    %s17 = ssub.s32 %s11, 2
    %s24 = sadd.s32 1, %s19
    %p25 = scmp.ge.s32.totalorder %s24, 1
    %s26 = scalar_select %p25, 0, %s24
    %s27 = sadd.s32 1, %s18
    %s28 = scalar_select %p25, %s27, %s18
    %p29 = scmp.ge.s32.totalorder %s28, 2
    %s30 = scalar_select %p29, 0, %s28
    %s31 = ssub.s32 %s18, %s30
    %s32 = ssub.s32 %s19, %s26
    %s33 = sor.u32 %s31, %s32
    %p34 = scmp.eq.s32.totalorder %s33, 0
    %s36 = sadd.s32 %s35, 1
    %s37 = scalar_select %p34, %s35, %s36
    %p40 = pneg %p34
    %p41 = scmp.eq.s32.totalorder %s11, 1
    %p42 = por %p40, %p41
    %p43 = scmp.ne.s32.totalorder %s35, %s38
    %p44 = scmp.eq.s32.totalorder %s11, 0
    %p45 = por %p43, %p44
    %p46 = scmp.ne.s32.totalorder %s35, %s38
    %p47 = scmp.eq.s32.totalorder %s16, 1
    %p48 = por %p46, %p47
    %p49 = scmp.ne.s32.totalorder %s38, %s39
    %p50 = scmp.eq.s32.totalorder %s16, 0
    %p51 = por %p49, %p50
    %p52 = scmp.ne.s32.totalorder %s38, %s39
    %p53 = scmp.eq.s32.totalorder %s17, 1
    %p54 = por %p52, %p53
    %p56 = scmp.ne.s32.totalorder %s39, %s55
    %p57 = scmp.eq.s32.totalorder %s17, 0
    %p58 = por %p56, %p57
    %s60 = sadd.s32 %s59, 1
    %p63 = scmp.eq.s32.totalorder %s11, 1
    %p64 = scmp.ne.s32.totalorder %s59, %s61
    %p65 = scmp.eq.s32.totalorder %s11, 0
    %p66 = por %p64, %p65
    %p67 = scmp.ne.s32.totalorder %s59, %s61
    %p68 = scmp.eq.s32.totalorder %s16, 1
    %p69 = por %p67, %p68
    %p70 = scmp.ne.s32.totalorder %s61, %s62
    %p71 = scmp.eq.s32.totalorder %s16, 0
    %p72 = por %p70, %p71
    %p73 = scmp.ne.s32.totalorder %s61, %s62
    %p74 = scmp.eq.s32.totalorder %s17, 1
    %p75 = por %p73, %p74
    %p77 = scmp.ne.s32.totalorder %s62, %s76
    %p78 = scmp.eq.s32.totalorder %s17, 0
    %p79 = por %p77, %p78
    %s81 = sadd.s32 %s80, 1
    %p84 = scmp.eq.s32.totalorder %s11, 1
    %p85 = scmp.ne.s32.totalorder %s80, %s82
    %p86 = scmp.eq.s32.totalorder %s11, 0
    %p87 = por %p85, %p86
    %p88 = scmp.ne.s32.totalorder %s80, %s82
    %p89 = scmp.eq.s32.totalorder %s16, 1
    %p90 = por %p88, %p89
    %p91 = scmp.ne.s32.totalorder %s82, %s83
    %p92 = scmp.eq.s32.totalorder %s16, 0
    %p93 = por %p91, %p92
    %p94 = scmp.ne.s32.totalorder %s82, %s83
    %p95 = scmp.eq.s32.totalorder %s17, 1
    %p96 = por %p94, %p95
    %p98 = scmp.ne.s32.totalorder %s83, %s97
    %p99 = scmp.eq.s32.totalorder %s17, 0
    %p100 = por %p98, %p99
    %s102 = sadd.s32 %s101, 1
    %p105 = scmp.eq.s32.totalorder %s11, 1
    %p106 = scmp.ne.s32.totalorder %s101, %s103
    %p107 = scmp.eq.s32.totalorder %s11, 0
    %p108 = por %p106, %p107
    %p109 = scmp.ne.s32.totalorder %s101, %s103
    %p110 = scmp.eq.s32.totalorder %s16, 1
    %p111 = por %p109, %p110
    %p112 = scmp.ne.s32.totalorder %s103, %s104
    %p113 = scmp.eq.s32.totalorder %s16, 0
    %p114 = por %p112, %p113
    %p115 = scmp.ne.s32.totalorder %s103, %s104
    %p116 = scmp.eq.s32.totalorder %s17, 1
    %p117 = por %p115, %p116
    %p119 = scmp.ne.s32.totalorder %s104, %s118
    %p120 = scmp.eq.s32.totalorder %s17, 0
    %p121 = por %p119, %p120
    %s123 = sadd.s32 %s122, 1
    %p126 = scmp.eq.s32.totalorder %s11, 1
    %p127 = scmp.ne.s32.totalorder %s122, %s124
    %p128 = scmp.eq.s32.totalorder %s11, 0
    %p129 = por %p127, %p128
    %p130 = scmp.ne.s32.totalorder %s122, %s124
    %p131 = scmp.eq.s32.totalorder %s16, 1
    %p132 = por %p130, %p131
    %p133 = scmp.ne.s32.totalorder %s124, %s125
    %p134 = scmp.eq.s32.totalorder %s16, 0
    %p135 = por %p133, %p134
    %p136 = scmp.ne.s32.totalorder %s124, %s125
    %p137 = scmp.eq.s32.totalorder %s17, 1
    %p138 = por %p136, %p137
    %p140 = scmp.ne.s32.totalorder %s125, %s139
    %p141 = scmp.eq.s32.totalorder %s17, 0
    %p142 = por %p140, %p141
    %s143 = ssub.s32 %s18, %s30
    %s144 = ssub.s32 %s19, %s26
    %s145 = sor.u32 %s143, %s144
    %p146 = scmp.eq.s32.totalorder %s145, 0
    %s148 = sadd.s32 %s147, 1
    %s149 = scalar_select %p146, %s147, %s148
    %p152 = pneg %p146
    %p153 = scmp.eq.s32.totalorder %s11, 1
    %p154 = por %p152, %p153
    %p155 = scmp.ne.s32.totalorder %s147, %s150
    %p156 = scmp.eq.s32.totalorder %s11, 0
    %p157 = por %p155, %p156
    %p158 = scmp.ne.s32.totalorder %s147, %s150
    %p159 = scmp.eq.s32.totalorder %s16, 1
    %p160 = por %p158, %p159
    %p161 = scmp.ne.s32.totalorder %s150, %s151
    %p162 = scmp.eq.s32.totalorder %s16, 0
    %p163 = por %p161, %p162
    %p164 = scmp.ne.s32.totalorder %s150, %s151
    %p165 = scmp.eq.s32.totalorder %s17, 1
    %p166 = por %p164, %p165
    %p168 = scmp.ne.s32.totalorder %s151, %s167
    %p169 = scmp.eq.s32.totalorder %s17, 0
    %p170 = por %p168, %p169
    %p171 = scmp.le.s32.totalorder 1, %s11
    %p172 = scmp.lt.s32.totalorder %s11, 3
    %p173 = pnand %p171, %p172
    %p174 = pneg %p173
    // Predicated region
    $region9: #{triplane_generator_forward.3} parent=5 // pred_check
      _
    $region10: #{triplane_generator_forward.3} parent=5 // pred_check_branch
      %176 = sbr.rel (%p173) target = $region12
    $region11: #{triplane_generator_forward.3} parent=5 // pred_region
      %s177 = ssub.s32 %s11, 1
      // Predicated region
      $region13: #{triplane_generator_forward.3} parent=11 // pred_check
        %p178 = pneg %p72
      $region14: #{triplane_generator_forward.3} parent=11 // pred_check_branch
        %180 = sbr.rel (%p178) target = $region16
      $region15: #{triplane_generator_forward.3} parent=11 // pred_region
        _
      $region16: #{triplane_generator_forward.3} parent=11 // pred_fallthru
        _
      // Predicated region
      $region17: #{triplane_generator_forward.3} parent=11 // pred_check
        %p181 = pneg %p93
      $region18: #{triplane_generator_forward.3} parent=11 // pred_check_branch
        %183 = sbr.rel (%p181) target = $region20
      $region19: #{triplane_generator_forward.3} parent=11 // pred_region
        _
      $region20: #{triplane_generator_forward.3} parent=11 // pred_fallthru
        _
      // Predicated region
      $region21: #{triplane_generator_forward.3} parent=11 // pred_check
        %p184 = pneg %p114
      $region22: #{triplane_generator_forward.3} parent=11 // pred_check_branch
        %186 = sbr.rel (%p184) target = $region24
      $region23: #{triplane_generator_forward.3} parent=11 // pred_region
        _
      $region24: #{triplane_generator_forward.3} parent=11 // pred_fallthru
        _
      // Predicated region
      $region25: #{triplane_generator_forward.3} parent=11 // pred_check
        %p187 = pneg %p135
      $region26: #{triplane_generator_forward.3} parent=11 // pred_check_branch
        %189 = sbr.rel (%p187) target = $region28
      $region27: #{triplane_generator_forward.3} parent=11 // pred_region
        _
      $region28: #{triplane_generator_forward.3} parent=11 // pred_fallthru
        _
    $region12: #{triplane_generator_forward.3} parent=5 // pred_fallthru
      _
    %p190 = scmp.lt.s32.totalorder %s11, 2
    // Predicated region
    $region29: #{triplane_generator_forward.3} parent=5 // pred_check
      %p191 = pneg %p190
    $region30: #{triplane_generator_forward.3} parent=5 // pred_check_branch
      %193 = sbr.rel (%p191) target = $region32
    $region31: #{triplane_generator_forward.3} parent=5 // pred_region
      // Predicated region
      $region33: #{triplane_generator_forward.3} parent=31 // pred_check
        %p194 = pneg %p45
      $region34: #{triplane_generator_forward.3} parent=31 // pred_check_branch
        %196 = sbr.rel (%p194) target = $region36
      $region35: #{triplane_generator_forward.3} parent=31 // pred_region
        %s197 = smul.u32 64, %s19
        %p198 = scmp.lt.s32.totalorder %s18, 1
        %s199 = scalar_select %p198, %s18, 1
        %p200 = scmp.lt.s32.totalorder %s197, 63
        %s201 = scalar_select %p200, %s197, 63
        %s202 = smul.addr %s199, 192
        %s203 = sadd.s32 %s201, %s202
        %s204 = smul.addr %s203, 4
        %s205 = scalar_lea.vmem %s0, %s204
        %s206 = smul.u32 64, %s19
      $region36: #{triplane_generator_forward.3} parent=31 // pred_fallthru
        _
    $region32: #{triplane_generator_forward.3} parent=5 // pred_fallthru
      _
    %p207 = scmp.le.s32.totalorder 1, %s11
    %p208 = scmp.lt.s32.totalorder %s11, 3
    %p209 = pnand %p207, %p208
    %p210 = pneg %p209
    // Predicated region
    $region37: #{triplane_generator_forward.3} parent=5 // pred_check
      _
    $region38: #{triplane_generator_forward.3} parent=5 // pred_check_branch
      %212 = sbr.rel (%p209) target = $region40
    $region39: #{triplane_generator_forward.3} parent=5 // pred_region
      %s213 = ssub.s32 %s11, 1
      %s214 = smul.u32 64, %s21
      %p215 = scmp.lt.s32.totalorder %s20, 1
      %s216 = scalar_select %p215, %s20, 1
      %p217 = scmp.lt.s32.totalorder %s214, 63
      %s218 = scalar_select %p217, %s214, 63
      %s219 = smul.addr %s216, 192
      %s220 = sadd.s32 %s218, %s219
      %s221 = smul.addr %s220, 4
      %s222 = scalar_lea.vmem %s0, %s221
      %p223 = pneg %p51
      %p224 = pneg %p48
      %p225 = pneg %p72
      %p226 = pneg %p69
      %p227 = pneg %p93
      %p228 = pneg %p90
      %p229 = pneg %p114
      %p230 = pneg %p111
      %p231 = pneg %p135
      %p232 = pneg %p132
      %p233 = pneg %p163
      %p234 = pneg %p160
      %s235 = smul.u32 64, %s21
      %p236 = scmp.lt.s32.totalorder %s20, 1
      %s237 = scalar_select %p236, %s20, 1
      %p238 = scmp.lt.s32.totalorder %s235, 63
      %s239 = scalar_select %p238, %s235, 63
      %s240 = smul.addr %s237, 64
      %s241 = sadd.s32 %s239, %s240
      %s242 = smul.addr %s241, 4
      %s243 = scalar_lea.vmem %s5, %s242
      %s244 = smul.u32 64, %s21
      %p245 = scmp.lt.s32.totalorder %s20, 1
      %s246 = scalar_select %p245, %s20, 1
      %p247 = scmp.lt.s32.totalorder %s244, 63
      %s248 = scalar_select %p247, %s244, 63
      %s249 = smul.addr %s246, 192
      %s250 = sadd.s32 %s248, %s249
      %s251 = smul.addr %s250, 4
      %s252 = scalar_lea.vmem %s0, %s251
      %s253 = smul.u32 64, %s21
      %s254 = smul.u32 64, %s21
      %p255 = scmp.lt.s32.totalorder %s20, 1
      %s256 = scalar_select %p255, %s20, 1
      %p257 = scmp.lt.s32.totalorder %s254, 63
      %s258 = scalar_select %p257, %s254, 63
      %s259 = smul.addr %s256, 64
      %s260 = sadd.s32 %s258, %s259
      %s261 = smul.addr %s260, 4
      %s262 = scalar_lea.vmem %s5, %s261
      %s263 = smul.u32 64, %s21
      %v265 = vld [vmem:[%s252] sm:$0xf]
      %v266 = vld [vmem:[%s252 + $0x4] sm:$0xf]
      %v267 = vld [vmem:[%s252 + $0x8] sm:$0xf]
      %v268 = vld [vmem:[%s252 + $0xc] sm:$0xf]
      %v269 = vld [vmem:[%s252 + $0x10] sm:$0xf]
      %v270 = vld [vmem:[%s252 + $0x14] sm:$0xf]
      %v271 = vld [vmem:[%s252 + $0x18] sm:$0xf]
      %v272 = vld [vmem:[%s252 + $0x1c] sm:$0xf]
      %v273 = vld [vmem:[%s252 + $0x20] sm:$0xf]
      %v274 = vld [vmem:[%s252 + $0x24] sm:$0xf]
      %v275 = vld [vmem:[%s252 + $0x28] sm:$0xf]
      %v276 = vld [vmem:[%s252 + $0x2c] sm:$0xf]
      %v277 = vld [vmem:[%s252 + $0x30] sm:$0xf]
      %v278 = vld [vmem:[%s252 + $0x34] sm:$0xf]
      %v279 = vld [vmem:[%s252 + $0x38] sm:$0xf]
      %v280 = vld [vmem:[%s252 + $0x3c] sm:$0xf]
      %v281 = vld [vmem:[%s252 + $0x40] sm:$0xf]
      %v282 = vld [vmem:[%s252 + $0x44] sm:$0xf]
      %v283 = vld [vmem:[%s252 + $0x48] sm:$0xf]
      %v284 = vld [vmem:[%s252 + $0x4c] sm:$0xf]
      %v285 = vld [vmem:[%s252 + $0x50] sm:$0xf]
      %v286 = vld [vmem:[%s252 + $0x54] sm:$0xf]
      %v287 = vld [vmem:[%s252 + $0x58] sm:$0xf]
      %v288 = vld [vmem:[%s252 + $0x5c] sm:$0xf]
      %v289 = vld [vmem:[%s252 + $0x60] sm:$0xf]
      %v290 = vld [vmem:[%s252 + $0x64] sm:$0xf]
      %v291 = vld [vmem:[%s252 + $0x68] sm:$0xf]
      %v292 = vld [vmem:[%s252 + $0x6c] sm:$0xf]
      %v293 = vld [vmem:[%s252 + $0x70] sm:$0xf]
      %v294 = vld [vmem:[%s252 + $0x74] sm:$0xf]
      %v295 = vld [vmem:[%s252 + $0x78] sm:$0xf]
      %v296 = vld [vmem:[%s252 + $0x7c] sm:$0xf]
      %v297 = vld [vmem:[%s252 + $0x80] sm:$0xf]
      %v298 = vld [vmem:[%s252 + $0x84] sm:$0xf]
      %v299 = vld [vmem:[%s252 + $0x88] sm:$0xf]
      %v300 = vld [vmem:[%s252 + $0x8c] sm:$0xf]
      %v301 = vld [vmem:[%s252 + $0x90] sm:$0xf]
      %v302 = vld [vmem:[%s252 + $0x94] sm:$0xf]
      %v303 = vld [vmem:[%s252 + $0x98] sm:$0xf]
      %v304 = vld [vmem:[%s252 + $0x9c] sm:$0xf]
      %v305 = vld [vmem:[%s252 + $0xa0] sm:$0xf]
      %v306 = vld [vmem:[%s252 + $0xa4] sm:$0xf]
      %v307 = vld [vmem:[%s252 + $0xa8] sm:$0xf]
      %v308 = vld [vmem:[%s252 + $0xac] sm:$0xf]
      %v309 = vld [vmem:[%s252 + $0xb0] sm:$0xf]
      %v310 = vld [vmem:[%s252 + $0xb4] sm:$0xf]
      %v311 = vld [vmem:[%s252 + $0xb8] sm:$0xf]
      %v312 = vld [vmem:[%s252 + $0xbc] sm:$0xf]
      %v313 = vld [vmem:[%s252 + $0xc0] sm:$0xf]
      %v314 = vld [vmem:[%s252 + $0xc4] sm:$0xf]
      %v315 = vld [vmem:[%s252 + $0xc8] sm:$0xf]
      %v316 = vld [vmem:[%s252 + $0xcc] sm:$0xf]
      %v317 = vld [vmem:[%s252 + $0xd0] sm:$0xf]
      %v318 = vld [vmem:[%s252 + $0xd4] sm:$0xf]
      %v319 = vld [vmem:[%s252 + $0xd8] sm:$0xf]
      %v320 = vld [vmem:[%s252 + $0xdc] sm:$0xf]
      %v321 = vld [vmem:[%s252 + $0xe0] sm:$0xf]
      %v322 = vld [vmem:[%s252 + $0xe4] sm:$0xf]
      %v323 = vld [vmem:[%s252 + $0xe8] sm:$0xf]
      %v324 = vld [vmem:[%s252 + $0xec] sm:$0xf]
      %v325 = vld [vmem:[%s252 + $0xf0] sm:$0xf]
      %v326 = vld [vmem:[%s252 + $0xf4] sm:$0xf]
      %v327 = vld [vmem:[%s252 + $0xf8] sm:$0xf]
      %v328 = vld [vmem:[%s252 + $0xfc] sm:$0xf]
      %v329 = vld [vmem:[%s252 + $0x100] sm:$0xf]
      %v330 = vld [vmem:[%s252 + $0x104] sm:$0xf]
      %v331 = vld [vmem:[%s252 + $0x108] sm:$0xf]
      %v332 = vld [vmem:[%s252 + $0x10c] sm:$0xf]
      %v333 = vld [vmem:[%s252 + $0x110] sm:$0xf]
      %v334 = vld [vmem:[%s252 + $0x114] sm:$0xf]
      %v335 = vld [vmem:[%s252 + $0x118] sm:$0xf]
      %v336 = vld [vmem:[%s252 + $0x11c] sm:$0xf]
      %v337 = vld [vmem:[%s252 + $0x120] sm:$0xf]
      %v338 = vld [vmem:[%s252 + $0x124] sm:$0xf]
      %v339 = vld [vmem:[%s252 + $0x128] sm:$0xf]
      %v340 = vld [vmem:[%s252 + $0x12c] sm:$0xf]
      %v341 = vld [vmem:[%s252 + $0x130] sm:$0xf]
      %v342 = vld [vmem:[%s252 + $0x134] sm:$0xf]
      %v343 = vld [vmem:[%s252 + $0x138] sm:$0xf]
      %v344 = vld [vmem:[%s252 + $0x13c] sm:$0xf]
      %v345 = vld [vmem:[%s252 + $0x140] sm:$0xf]
      %v346 = vld [vmem:[%s252 + $0x144] sm:$0xf]
      %v347 = vld [vmem:[%s252 + $0x148] sm:$0xf]
      %v348 = vld [vmem:[%s252 + $0x14c] sm:$0xf]
      %v349 = vld [vmem:[%s252 + $0x150] sm:$0xf]
      %v350 = vld [vmem:[%s252 + $0x154] sm:$0xf]
      %v351 = vld [vmem:[%s252 + $0x158] sm:$0xf]
      %v352 = vld [vmem:[%s252 + $0x15c] sm:$0xf]
      %v353 = vld [vmem:[%s252 + $0x160] sm:$0xf]
      %v354 = vld [vmem:[%s252 + $0x164] sm:$0xf]
      %v355 = vld [vmem:[%s252 + $0x168] sm:$0xf]
      %v356 = vld [vmem:[%s252 + $0x16c] sm:$0xf]
      %v357 = vld [vmem:[%s252 + $0x170] sm:$0xf]
      %v358 = vld [vmem:[%s252 + $0x174] sm:$0xf]
      %v359 = vld [vmem:[%s252 + $0x178] sm:$0xf]
      %v360 = vld [vmem:[%s252 + $0x17c] sm:$0xf]
      %v361 = vld [vmem:[%s252 + $0x180] sm:$0xf]
      %v362 = vld [vmem:[%s252 + $0x184] sm:$0xf]
      %v363 = vld [vmem:[%s252 + $0x188] sm:$0xf]
      %v364 = vld [vmem:[%s252 + $0x18c] sm:$0xf]
      %v365 = vld [vmem:[%s252 + $0x190] sm:$0xf]
      %v366 = vld [vmem:[%s252 + $0x194] sm:$0xf]
      %v367 = vld [vmem:[%s252 + $0x198] sm:$0xf]
      %v368 = vld [vmem:[%s252 + $0x19c] sm:$0xf]
      %v369 = vld [vmem:[%s252 + $0x1a0] sm:$0xf]
      %v370 = vld [vmem:[%s252 + $0x1a4] sm:$0xf]
      %v371 = vld [vmem:[%s252 + $0x1a8] sm:$0xf]
      %v372 = vld [vmem:[%s252 + $0x1ac] sm:$0xf]
      %v373 = vld [vmem:[%s252 + $0x1b0] sm:$0xf]
      %v374 = vld [vmem:[%s252 + $0x1b4] sm:$0xf]
      %v375 = vld [vmem:[%s252 + $0x1b8] sm:$0xf]
      %v376 = vld [vmem:[%s252 + $0x1bc] sm:$0xf]
      %v377 = vld [vmem:[%s252 + $0x1c0] sm:$0xf]
      %v378 = vld [vmem:[%s252 + $0x1c4] sm:$0xf]
      %v379 = vld [vmem:[%s252 + $0x1c8] sm:$0xf]
      %v380 = vld [vmem:[%s252 + $0x1cc] sm:$0xf]
      %v381 = vld [vmem:[%s252 + $0x1d0] sm:$0xf]
      %v382 = vld [vmem:[%s252 + $0x1d4] sm:$0xf]
      %v383 = vld [vmem:[%s252 + $0x1d8] sm:$0xf]
      %v384 = vld [vmem:[%s252 + $0x1dc] sm:$0xf]
      %v385 = vld [vmem:[%s252 + $0x1e0] sm:$0xf]
      %v386 = vld [vmem:[%s252 + $0x1e4] sm:$0xf]
      %v387 = vld [vmem:[%s252 + $0x1e8] sm:$0xf]
      %v388 = vld [vmem:[%s252 + $0x1ec] sm:$0xf]
      %v389 = vld [vmem:[%s252 + $0x1f0] sm:$0xf]
      %v390 = vld [vmem:[%s252 + $0x1f4] sm:$0xf]
      %v391 = vld [vmem:[%s252 + $0x1f8] sm:$0xf]
      %v392 = vld [vmem:[%s252 + $0x1fc] sm:$0xf]
      %v393 = vld [vmem:[%s252 + $0x200] sm:$0xf]
      %v394 = vld [vmem:[%s252 + $0x204] sm:$0xf]
      %v395 = vld [vmem:[%s252 + $0x208] sm:$0xf]
      %v396 = vld [vmem:[%s252 + $0x20c] sm:$0xf]
      %v397 = vld [vmem:[%s252 + $0x210] sm:$0xf]
      %v398 = vld [vmem:[%s252 + $0x214] sm:$0xf]
      %v399 = vld [vmem:[%s252 + $0x218] sm:$0xf]
      %v400 = vld [vmem:[%s252 + $0x21c] sm:$0xf]
      %v401 = vld [vmem:[%s252 + $0x220] sm:$0xf]
      %v402 = vld [vmem:[%s252 + $0x224] sm:$0xf]
      %v403 = vld [vmem:[%s252 + $0x228] sm:$0xf]
      %v404 = vld [vmem:[%s252 + $0x22c] sm:$0xf]
      %v405 = vld [vmem:[%s252 + $0x230] sm:$0xf]
      %v406 = vld [vmem:[%s252 + $0x234] sm:$0xf]
      %v407 = vld [vmem:[%s252 + $0x238] sm:$0xf]
      %v408 = vld [vmem:[%s252 + $0x23c] sm:$0xf]
      %v409 = vld [vmem:[%s252 + $0x240] sm:$0xf]
      %v410 = vld [vmem:[%s252 + $0x244] sm:$0xf]
      %v411 = vld [vmem:[%s252 + $0x248] sm:$0xf]
      %v412 = vld [vmem:[%s252 + $0x24c] sm:$0xf]
      %v413 = vld [vmem:[%s252 + $0x250] sm:$0xf]
      %v414 = vld [vmem:[%s252 + $0x254] sm:$0xf]
      %v415 = vld [vmem:[%s252 + $0x258] sm:$0xf]
      %v416 = vld [vmem:[%s252 + $0x25c] sm:$0xf]
      %v417 = vld [vmem:[%s252 + $0x260] sm:$0xf]
      %v418 = vld [vmem:[%s252 + $0x264] sm:$0xf]
      %v419 = vld [vmem:[%s252 + $0x268] sm:$0xf]
      %v420 = vld [vmem:[%s252 + $0x26c] sm:$0xf]
      %v421 = vld [vmem:[%s252 + $0x270] sm:$0xf]
      %v422 = vld [vmem:[%s252 + $0x274] sm:$0xf]
      %v423 = vld [vmem:[%s252 + $0x278] sm:$0xf]
      %v424 = vld [vmem:[%s252 + $0x27c] sm:$0xf]
      %v425 = vld [vmem:[%s252 + $0x280] sm:$0xf]
      %v426 = vld [vmem:[%s252 + $0x284] sm:$0xf]
      %v427 = vld [vmem:[%s252 + $0x288] sm:$0xf]
      %v428 = vld [vmem:[%s252 + $0x28c] sm:$0xf]
      %v429 = vld [vmem:[%s252 + $0x290] sm:$0xf]
      %v430 = vld [vmem:[%s252 + $0x294] sm:$0xf]
      %v431 = vld [vmem:[%s252 + $0x298] sm:$0xf]
      %v432 = vld [vmem:[%s252 + $0x29c] sm:$0xf]
      %v433 = vld [vmem:[%s252 + $0x2a0] sm:$0xf]
      %v434 = vld [vmem:[%s252 + $0x2a4] sm:$0xf]
      %v435 = vld [vmem:[%s252 + $0x2a8] sm:$0xf]
      %v436 = vld [vmem:[%s252 + $0x2ac] sm:$0xf]
      %v437 = vld [vmem:[%s252 + $0x2b0] sm:$0xf]
      %v438 = vld [vmem:[%s252 + $0x2b4] sm:$0xf]
      %v439 = vld [vmem:[%s252 + $0x2b8] sm:$0xf]
      %v440 = vld [vmem:[%s252 + $0x2bc] sm:$0xf]
      %v441 = vld [vmem:[%s252 + $0x2c0] sm:$0xf]
      %v442 = vld [vmem:[%s252 + $0x2c4] sm:$0xf]
      %v443 = vld [vmem:[%s252 + $0x2c8] sm:$0xf]
      %v444 = vld [vmem:[%s252 + $0x2cc] sm:$0xf]
      %v445 = vld [vmem:[%s252 + $0x2d0] sm:$0xf]
      %v446 = vld [vmem:[%s252 + $0x2d4] sm:$0xf]
      %v447 = vld [vmem:[%s252 + $0x2d8] sm:$0xf]
      %v448 = vld [vmem:[%s252 + $0x2dc] sm:$0xf]
      %v449 = vld [vmem:[%s252 + $0x2e0] sm:$0xf]
      %v450 = vld [vmem:[%s252 + $0x2e4] sm:$0xf]
      %v451 = vld [vmem:[%s252 + $0x2e8] sm:$0xf]
      %v452 = vld [vmem:[%s252 + $0x2ec] sm:$0xf]
      %v453 = vld [vmem:[%s252 + $0x2f0] sm:$0xf]
      %v454 = vld [vmem:[%s252 + $0x2f4] sm:$0xf]
      %v455 = vld [vmem:[%s252 + $0x2f8] sm:$0xf]
      %v456 = vld [vmem:[%s252 + $0x2fc] sm:$0xf]
      %v457 = vadd.bf16 %v265, %v329
      %v458 = vadd.bf16 %v266, %v330
      %v459 = vadd.bf16 %v267, %v331
      %v460 = vadd.bf16 %v268, %v332
      %v461 = vadd.bf16 %v269, %v333
      %v462 = vadd.bf16 %v270, %v334
      %v463 = vadd.bf16 %v271, %v335
      %v464 = vadd.bf16 %v272, %v336
      %v465 = vadd.bf16 %v273, %v337
      %v466 = vadd.bf16 %v274, %v338
      %v467 = vadd.bf16 %v275, %v339
      %v468 = vadd.bf16 %v276, %v340
      %v469 = vadd.bf16 %v277, %v341
      %v470 = vadd.bf16 %v278, %v342
      %v471 = vadd.bf16 %v279, %v343
      %v472 = vadd.bf16 %v280, %v344
      %v473 = vadd.bf16 %v281, %v345
      %v474 = vadd.bf16 %v282, %v346
      %v475 = vadd.bf16 %v283, %v347
      %v476 = vadd.bf16 %v284, %v348
      %v477 = vadd.bf16 %v285, %v349
      %v478 = vadd.bf16 %v286, %v350
      %v479 = vadd.bf16 %v287, %v351
      %v480 = vadd.bf16 %v288, %v352
      %v481 = vadd.bf16 %v289, %v353
      %v482 = vadd.bf16 %v290, %v354
      %v483 = vadd.bf16 %v291, %v355
      %v484 = vadd.bf16 %v292, %v356
      %v485 = vadd.bf16 %v293, %v357
      %v486 = vadd.bf16 %v294, %v358
      %v487 = vadd.bf16 %v295, %v359
      %v488 = vadd.bf16 %v296, %v360
      %v489 = vadd.bf16 %v297, %v361
      %v490 = vadd.bf16 %v298, %v362
      %v491 = vadd.bf16 %v299, %v363
      %v492 = vadd.bf16 %v300, %v364
      %v493 = vadd.bf16 %v301, %v365
      %v494 = vadd.bf16 %v302, %v366
      %v495 = vadd.bf16 %v303, %v367
      %v496 = vadd.bf16 %v304, %v368
      %v497 = vadd.bf16 %v305, %v369
      %v498 = vadd.bf16 %v306, %v370
      %v499 = vadd.bf16 %v307, %v371
      %v500 = vadd.bf16 %v308, %v372
      %v501 = vadd.bf16 %v309, %v373
      %v502 = vadd.bf16 %v310, %v374
      %v503 = vadd.bf16 %v311, %v375
      %v504 = vadd.bf16 %v312, %v376
      %v505 = vadd.bf16 %v313, %v377
      %v506 = vadd.bf16 %v314, %v378
      %v507 = vadd.bf16 %v315, %v379
      %v508 = vadd.bf16 %v316, %v380
      %v509 = vadd.bf16 %v317, %v381
      %v510 = vadd.bf16 %v318, %v382
      %v511 = vadd.bf16 %v319, %v383
      %v512 = vadd.bf16 %v320, %v384
      %v513 = vadd.bf16 %v321, %v385
      %v514 = vadd.bf16 %v322, %v386
      %v515 = vadd.bf16 %v323, %v387
      %v516 = vadd.bf16 %v324, %v388
      %v517 = vadd.bf16 %v325, %v389
      %v518 = vadd.bf16 %v326, %v390
      %v519 = vadd.bf16 %v327, %v391
      %v520 = vadd.bf16 %v328, %v392
      %v521 = vadd.bf16 %v457, %v393
      %v522 = vadd.bf16 %v458, %v394
      %v523 = vadd.bf16 %v459, %v395
      %v524 = vadd.bf16 %v460, %v396
      %v525 = vadd.bf16 %v461, %v397
      %v526 = vadd.bf16 %v462, %v398
      %v527 = vadd.bf16 %v463, %v399
      %v528 = vadd.bf16 %v464, %v400
      %v529 = vadd.bf16 %v465, %v401
      %v530 = vadd.bf16 %v466, %v402
      %v531 = vadd.bf16 %v467, %v403
      %v532 = vadd.bf16 %v468, %v404
      %v533 = vadd.bf16 %v469, %v405
      %v534 = vadd.bf16 %v470, %v406
      %v535 = vadd.bf16 %v471, %v407
      %v536 = vadd.bf16 %v472, %v408
      %v537 = vadd.bf16 %v473, %v409
      %v538 = vadd.bf16 %v474, %v410
      %v539 = vadd.bf16 %v475, %v411
      %v540 = vadd.bf16 %v476, %v412
      %v541 = vadd.bf16 %v477, %v413
      %v542 = vadd.bf16 %v478, %v414
      %v543 = vadd.bf16 %v479, %v415
      %v544 = vadd.bf16 %v480, %v416
      %v545 = vadd.bf16 %v481, %v417
      %v546 = vadd.bf16 %v482, %v418
      %v547 = vadd.bf16 %v483, %v419
      %v548 = vadd.bf16 %v484, %v420
      %v549 = vadd.bf16 %v485, %v421
      %v550 = vadd.bf16 %v486, %v422
      %v551 = vadd.bf16 %v487, %v423
      %v552 = vadd.bf16 %v488, %v424
      %v553 = vadd.bf16 %v489, %v425
      %v554 = vadd.bf16 %v490, %v426
      %v555 = vadd.bf16 %v491, %v427
      %v556 = vadd.bf16 %v492, %v428
      %v557 = vadd.bf16 %v493, %v429
      %v558 = vadd.bf16 %v494, %v430
      %v559 = vadd.bf16 %v495, %v431
      %v560 = vadd.bf16 %v496, %v432
      %v561 = vadd.bf16 %v497, %v433
      %v562 = vadd.bf16 %v498, %v434
      %v563 = vadd.bf16 %v499, %v435
      %v564 = vadd.bf16 %v500, %v436
      %v565 = vadd.bf16 %v501, %v437
      %v566 = vadd.bf16 %v502, %v438
      %v567 = vadd.bf16 %v503, %v439
      %v568 = vadd.bf16 %v504, %v440
      %v569 = vadd.bf16 %v505, %v441
      %v570 = vadd.bf16 %v506, %v442
      %v571 = vadd.bf16 %v507, %v443
      %v572 = vadd.bf16 %v508, %v444
      %v573 = vadd.bf16 %v509, %v445
      %v574 = vadd.bf16 %v510, %v446
      %v575 = vadd.bf16 %v511, %v447
      %v576 = vadd.bf16 %v512, %v448
      %v577 = vadd.bf16 %v513, %v449
      %v578 = vadd.bf16 %v514, %v450
      %v579 = vadd.bf16 %v515, %v451
      %v580 = vadd.bf16 %v516, %v452
      %v581 = vadd.bf16 %v517, %v453
      %v582 = vadd.bf16 %v518, %v454
      %v583 = vadd.bf16 %v519, %v455
      %v584 = vadd.bf16 %v520, %v456
      %v585 = vld [vmem:[%s1] sm:$0xf]
      %v586 = vld [vmem:[%s1 + $0x4] sm:$0xf]
      %v587 = vld [vmem:[%s1 + $0x8] sm:$0xf]
      %v588 = vld [vmem:[%s1 + $0xc] sm:$0xf]
      %v589 = vld [vmem:[%s2] sm:$0x1]
      %v591 = vlaneseq
      %v592 = vshrl.u32 %v591, 7
      %v593 = vsub.s32 0, %v592
      %v594 = vrot.slane %v589, %v593
      %v660 = vunpack.c.l.b16 %v521
      %v661 = vunpack.c.l.b16 %v522
      %v662 = vunpack.c.l.b16 %v523
      %v663 = vunpack.c.l.b16 %v524
      %v664 = vunpack.c.l.b16 %v525
      %v665 = vunpack.c.l.b16 %v526
      %v666 = vunpack.c.l.b16 %v527
      %v667 = vunpack.c.l.b16 %v528
      %v668 = vunpack.c.l.b16 %v529
      %v669 = vunpack.c.l.b16 %v530
      %v670 = vunpack.c.l.b16 %v531
      %v671 = vunpack.c.l.b16 %v532
      %v672 = vunpack.c.l.b16 %v533
      %v673 = vunpack.c.l.b16 %v534
      %v674 = vunpack.c.l.b16 %v535
      %v675 = vunpack.c.l.b16 %v536
      %v676 = vunpack.c.l.b16 %v537
      %v677 = vunpack.c.l.b16 %v538
      %v678 = vunpack.c.l.b16 %v539
      %v679 = vunpack.c.l.b16 %v540
      %v680 = vunpack.c.l.b16 %v541
      %v681 = vunpack.c.l.b16 %v542
      %v682 = vunpack.c.l.b16 %v543
      %v683 = vunpack.c.l.b16 %v544
      %v684 = vunpack.c.l.b16 %v545
      %v685 = vunpack.c.l.b16 %v546
      %v686 = vunpack.c.l.b16 %v547
      %v687 = vunpack.c.l.b16 %v548
      %v688 = vunpack.c.l.b16 %v549
      %v689 = vunpack.c.l.b16 %v550
      %v690 = vunpack.c.l.b16 %v551
      %v691 = vunpack.c.l.b16 %v552
      %v692 = vunpack.c.l.b16 %v553
      %v693 = vunpack.c.l.b16 %v554
      %v694 = vunpack.c.l.b16 %v555
      %v695 = vunpack.c.l.b16 %v556
      %v696 = vunpack.c.l.b16 %v557
      %v697 = vunpack.c.l.b16 %v558
      %v698 = vunpack.c.l.b16 %v559
      %v699 = vunpack.c.l.b16 %v560
      %v700 = vunpack.c.l.b16 %v561
      %v701 = vunpack.c.l.b16 %v562
      %v702 = vunpack.c.l.b16 %v563
      %v703 = vunpack.c.l.b16 %v564
      %v704 = vunpack.c.l.b16 %v565
      %v705 = vunpack.c.l.b16 %v566
      %v706 = vunpack.c.l.b16 %v567
      %v707 = vunpack.c.l.b16 %v568
      %v708 = vunpack.c.l.b16 %v569
      %v709 = vunpack.c.l.b16 %v570
      %v710 = vunpack.c.l.b16 %v571
      %v711 = vunpack.c.l.b16 %v572
      %v712 = vunpack.c.l.b16 %v573
      %v713 = vunpack.c.l.b16 %v574
      %v714 = vunpack.c.l.b16 %v575
      %v715 = vunpack.c.l.b16 %v576
      %v716 = vunpack.c.l.b16 %v577
      %v717 = vunpack.c.l.b16 %v578
      %v718 = vunpack.c.l.b16 %v579
      %v719 = vunpack.c.l.b16 %v580
      %v720 = vunpack.c.l.b16 %v581
      %v721 = vunpack.c.l.b16 %v582
      %v722 = vunpack.c.l.b16 %v583
      %v723 = vunpack.c.l.b16 %v584
      %v724 = vpack.c.b16 %v661, %v660
      %v725 = vpack.c.b16 %v663, %v662
      %v726 = vpack.c.b16 %v665, %v664
      %v727 = vpack.c.b16 %v667, %v666
      %v728 = vpack.c.b16 %v669, %v668
      %v729 = vpack.c.b16 %v671, %v670
      %v730 = vpack.c.b16 %v673, %v672
      %v731 = vpack.c.b16 %v675, %v674
      %v732 = vpack.c.b16 %v677, %v676
      %v733 = vpack.c.b16 %v679, %v678
      %v734 = vpack.c.b16 %v681, %v680
      %v735 = vpack.c.b16 %v683, %v682
      %v736 = vpack.c.b16 %v685, %v684
      %v737 = vpack.c.b16 %v687, %v686
      %v738 = vpack.c.b16 %v689, %v688
      %v739 = vpack.c.b16 %v691, %v690
      %v740 = vpack.c.b16 %v693, %v692
      %v741 = vpack.c.b16 %v695, %v694
      %v742 = vpack.c.b16 %v697, %v696
      %v743 = vpack.c.b16 %v699, %v698
      %v744 = vpack.c.b16 %v701, %v700
      %v745 = vpack.c.b16 %v703, %v702
      %v746 = vpack.c.b16 %v705, %v704
      %v747 = vpack.c.b16 %v707, %v706
      %v748 = vpack.c.b16 %v709, %v708
      %v749 = vpack.c.b16 %v711, %v710
      %v750 = vpack.c.b16 %v713, %v712
      %v751 = vpack.c.b16 %v715, %v714
      %v752 = vpack.c.b16 %v717, %v716
      %v753 = vpack.c.b16 %v719, %v718
      %v754 = vpack.c.b16 %v721, %v720
      %v755 = vpack.c.b16 %v723, %v722
      %v760 = vunpack.c.l.b16 %v585
      %v761 = vunpack.c.l.b16 %v586
      %v762 = vunpack.c.l.b16 %v587
      %v763 = vunpack.c.l.b16 %v588
      %v764 = vpack.c.b16 %v761, %v760
      %v765 = vpack.c.b16 %v763, %v762
      %vm768 = vcmask 261120
      %v770 = vsel %vm768, %v724, 0
      %v773 = vsel %vm768, %v725, 0
      %v776 = vsel %vm768, %v726, 0
      %v779 = vsel %vm768, %v727, 0
      %v782 = vsel %vm768, %v728, 0
      %v785 = vsel %vm768, %v729, 0
      %v788 = vsel %vm768, %v730, 0
      %v791 = vsel %vm768, %v731, 0
      %v794 = vsel %vm768, %v732, 0
      %v797 = vsel %vm768, %v733, 0
      %v800 = vsel %vm768, %v734, 0
      %v803 = vsel %vm768, %v735, 0
      %v806 = vsel %vm768, %v736, 0
      %v809 = vsel %vm768, %v737, 0
      %v812 = vsel %vm768, %v738, 0
      %v815 = vsel %vm768, %v739, 0
      %v818 = vsel %vm768, %v740, 0
      %v821 = vsel %vm768, %v741, 0
      %v824 = vsel %vm768, %v742, 0
      %v827 = vsel %vm768, %v743, 0
      %v830 = vsel %vm768, %v744, 0
      %v833 = vsel %vm768, %v745, 0
      %v836 = vsel %vm768, %v746, 0
      %v839 = vsel %vm768, %v747, 0
      %v842 = vsel %vm768, %v748, 0
      %v845 = vsel %vm768, %v749, 0
      %v848 = vsel %vm768, %v750, 0
      %v851 = vsel %vm768, %v751, 0
      %v854 = vsel %vm768, %v752, 0
      %v857 = vsel %vm768, %v753, 0
      %v860 = vsel %vm768, %v754, 0
      %v863 = vsel %vm768, %v755, 0
      %865 = vmatprep.subr.bf16.mxu0 0
      %866 = vmatpush1.bf16.msra.mxu0 0
      %867 = vmatprep.subr.bf16.mxu0 0
      %868 = vmatpush1.bf16.msra.mxu0 0
      %869 = vmatprep.subr.bf16.mxu0 0
      %870 = vmatpush1.bf16.msra.mxu0 0
      %871 = vmatprep.subr.bf16.mxu0 0
      %872 = vmatpush1.bf16.msra.mxu0 0
      %873 = vmatprep.subr.bf16.mxu0 0
      %874 = vmatpush1.bf16.msra.mxu0 0
      %875 = vmatprep.subr.bf16.mxu0 0
      %876 = vmatpush1.bf16.msra.mxu0 0
      %877 = vmatprep.subr.bf16.mxu0 0
      %878 = vmatpush1.bf16.msra.mxu0 %v765
      %879 = vmatprep.subr.bf16.mxu0 0
      %880 = vmatpush1.bf16.msra.mxu0 %v764
      %881 = vmatprep.subr.bf16.mxu0 0
      %882 = vmatpush2.bf16.msra.mxu0 0
      %883 = vmatprep.subr.bf16.mxu0 0
      %884 = vmatpush2.bf16.msra.mxu0 0
      %885 = vmatprep.subr.bf16.mxu0 0
      %886 = vmatpush2.bf16.msra.mxu0 0
      %887 = vmatprep.subr.bf16.mxu0 0
      %888 = vmatpush2.bf16.msra.mxu0 0
      %889 = vmatprep.subr.bf16.mxu0 0
      %890 = vmatpush2.bf16.msra.mxu0 0
      %891 = vmatprep.subr.bf16.mxu0 0
      %892 = vmatpush2.bf16.msra.mxu0 0
      %893 = vmatprep.subr.bf16.mxu0 0
      %894 = vmatpush2.bf16.msra.mxu0 0
      %895 = vmatprep.subr.bf16.mxu0 0
      %896 = vmatpush2.bf16.msra.mxu0 0
      %897 = vmatprep.mubr.bf16.mxu0 0
      %898 = vmatmul.mubr.bf16.gmra.mxu0 %v770
      %v899 = vpop.f32.mrf.mxu0
      %v900 = vadd.f32 %v594, %v899
      %v901 = vpop.f32.mrf.mxu0
      %v902 = vpop.f32.mrf.mxu0
      %v903 = vadd.f32 %v594, %v902
      %v904 = vpop.f32.mrf.mxu0
      %905 = vmatprep.mubr.bf16.mxu0 0
      %906 = vmatmul.mubr.bf16.gmra.mxu0 %v773
      %v907 = vpop.f32.mrf.mxu0
      %v908 = vadd.f32 %v594, %v907
      %v909 = vpop.f32.mrf.mxu0
      %v910 = vpop.f32.mrf.mxu0
      %v911 = vadd.f32 %v594, %v910
      %v912 = vpop.f32.mrf.mxu0
      %913 = vmatprep.mubr.bf16.mxu0 0
      %914 = vmatmul.mubr.bf16.gmra.mxu0 %v776
      %v915 = vpop.f32.mrf.mxu0
      %v916 = vadd.f32 %v594, %v915
      %v917 = vpop.f32.mrf.mxu0
      %v918 = vpop.f32.mrf.mxu0
      %v919 = vadd.f32 %v594, %v918
      %v920 = vpop.f32.mrf.mxu0
      %921 = vmatprep.mubr.bf16.mxu0 0
      %922 = vmatmul.mubr.bf16.gmra.mxu0 %v779
      %v923 = vpop.f32.mrf.mxu0
      %v924 = vadd.f32 %v594, %v923
      %v925 = vpop.f32.mrf.mxu0
      %v926 = vpop.f32.mrf.mxu0
      %v927 = vadd.f32 %v594, %v926
      %v928 = vpop.f32.mrf.mxu0
      %929 = vmatprep.mubr.bf16.mxu0 0
      %930 = vmatmul.mubr.bf16.gmra.mxu0 %v782
      %v931 = vpop.f32.mrf.mxu0
      %v932 = vadd.f32 %v594, %v931
      %v933 = vpop.f32.mrf.mxu0
      %v934 = vpop.f32.mrf.mxu0
      %v935 = vadd.f32 %v594, %v934
      %v936 = vpop.f32.mrf.mxu0
      %937 = vmatprep.mubr.bf16.mxu0 0
      %938 = vmatmul.mubr.bf16.gmra.mxu0 %v785
      %v939 = vpop.f32.mrf.mxu0
      %v940 = vadd.f32 %v594, %v939
      %v941 = vpop.f32.mrf.mxu0
      %v942 = vpop.f32.mrf.mxu0
      %v943 = vadd.f32 %v594, %v942
      %v944 = vpop.f32.mrf.mxu0
      %945 = vmatprep.mubr.bf16.mxu0 0
      %946 = vmatmul.mubr.bf16.gmra.mxu0 %v788
      %v947 = vpop.f32.mrf.mxu0
      %v948 = vadd.f32 %v594, %v947
      %v949 = vpop.f32.mrf.mxu0
      %v950 = vpop.f32.mrf.mxu0
      %v951 = vadd.f32 %v594, %v950
      %v952 = vpop.f32.mrf.mxu0
      %953 = vmatprep.mubr.bf16.mxu0 0
      %954 = vmatmul.mubr.bf16.gmra.mxu0 %v791
      %v955 = vpop.f32.mrf.mxu0
      %v956 = vadd.f32 %v594, %v955
      %v957 = vpop.f32.mrf.mxu0
      %v958 = vpop.f32.mrf.mxu0
      %v959 = vadd.f32 %v594, %v958
      %v960 = vpop.f32.mrf.mxu0
      %961 = vmatprep.mubr.bf16.mxu0 0
      %962 = vmatmul.mubr.bf16.gmra.mxu0 %v794
      %v963 = vpop.f32.mrf.mxu0
      %v964 = vadd.f32 %v594, %v963
      %v965 = vpop.f32.mrf.mxu0
      %v966 = vpop.f32.mrf.mxu0
      %v967 = vadd.f32 %v594, %v966
      %v968 = vpop.f32.mrf.mxu0
      %969 = vmatprep.mubr.bf16.mxu0 0
      %970 = vmatmul.mubr.bf16.gmra.mxu0 %v797
      %v971 = vpop.f32.mrf.mxu0
      %v972 = vadd.f32 %v594, %v971
      %v973 = vpop.f32.mrf.mxu0
      %v974 = vpop.f32.mrf.mxu0
      %v975 = vadd.f32 %v594, %v974
      %v976 = vpop.f32.mrf.mxu0
      %977 = vmatprep.mubr.bf16.mxu0 0
      %978 = vmatmul.mubr.bf16.gmra.mxu0 %v800
      %v979 = vpop.f32.mrf.mxu0
      %v980 = vadd.f32 %v594, %v979
      %v981 = vpop.f32.mrf.mxu0
      %v982 = vpop.f32.mrf.mxu0
      %v983 = vadd.f32 %v594, %v982
      %v984 = vpop.f32.mrf.mxu0
      %985 = vmatprep.mubr.bf16.mxu0 0
      %986 = vmatmul.mubr.bf16.gmra.mxu0 %v803
      %v987 = vpop.f32.mrf.mxu0
      %v988 = vadd.f32 %v594, %v987
      %v989 = vpop.f32.mrf.mxu0
      %v990 = vpop.f32.mrf.mxu0
      %v991 = vadd.f32 %v594, %v990
      %v992 = vpop.f32.mrf.mxu0
      %993 = vmatprep.mubr.bf16.mxu0 0
      %994 = vmatmul.mubr.bf16.gmra.mxu0 %v806
      %v995 = vpop.f32.mrf.mxu0
      %v996 = vadd.f32 %v594, %v995
      %v997 = vpop.f32.mrf.mxu0
      %v998 = vpop.f32.mrf.mxu0
      %v999 = vadd.f32 %v594, %v998
      %v1000 = vpop.f32.mrf.mxu0
      %1001 = vmatprep.mubr.bf16.mxu0 0
      %1002 = vmatmul.mubr.bf16.gmra.mxu0 %v809
      %v1003 = vpop.f32.mrf.mxu0
      %v1004 = vadd.f32 %v594, %v1003
      %v1005 = vpop.f32.mrf.mxu0
      %v1006 = vpop.f32.mrf.mxu0
      %v1007 = vadd.f32 %v594, %v1006
      %v1008 = vpop.f32.mrf.mxu0
      %1009 = vmatprep.mubr.bf16.mxu0 0
      %1010 = vmatmul.mubr.bf16.gmra.mxu0 %v812
      %v1011 = vpop.f32.mrf.mxu0
      %v1012 = vadd.f32 %v594, %v1011
      %v1013 = vpop.f32.mrf.mxu0
      %v1014 = vpop.f32.mrf.mxu0
      %v1015 = vadd.f32 %v594, %v1014
      %v1016 = vpop.f32.mrf.mxu0
      %1017 = vmatprep.mubr.bf16.mxu0 0
      %1018 = vmatmul.mubr.bf16.gmra.mxu0 %v815
      %v1019 = vpop.f32.mrf.mxu0
      %v1020 = vadd.f32 %v594, %v1019
      %v1021 = vpop.f32.mrf.mxu0
      %v1022 = vpop.f32.mrf.mxu0
      %v1023 = vadd.f32 %v594, %v1022
      %v1024 = vpop.f32.mrf.mxu0
      %1025 = vmatprep.mubr.bf16.mxu0 0
      %1026 = vmatmul.mubr.bf16.gmra.mxu0 %v818
      %v1027 = vpop.f32.mrf.mxu0
      %v1028 = vadd.f32 %v594, %v1027
      %v1029 = vpop.f32.mrf.mxu0
      %v1030 = vpop.f32.mrf.mxu0
      %v1031 = vadd.f32 %v594, %v1030
      %v1032 = vpop.f32.mrf.mxu0
      %1033 = vmatprep.mubr.bf16.mxu0 0
      %1034 = vmatmul.mubr.bf16.gmra.mxu0 %v821
      %v1035 = vpop.f32.mrf.mxu0
      %v1036 = vadd.f32 %v594, %v1035
      %v1037 = vpop.f32.mrf.mxu0
      %v1038 = vpop.f32.mrf.mxu0
      %v1039 = vadd.f32 %v594, %v1038
      %v1040 = vpop.f32.mrf.mxu0
      %1041 = vmatprep.mubr.bf16.mxu0 0
      %1042 = vmatmul.mubr.bf16.gmra.mxu0 %v824
      %v1043 = vpop.f32.mrf.mxu0
      %v1044 = vadd.f32 %v594, %v1043
      %v1045 = vpop.f32.mrf.mxu0
      %v1046 = vpop.f32.mrf.mxu0
      %v1047 = vadd.f32 %v594, %v1046
      %v1048 = vpop.f32.mrf.mxu0
      %1049 = vmatprep.mubr.bf16.mxu0 0
      %1050 = vmatmul.mubr.bf16.gmra.mxu0 %v827
      %v1051 = vpop.f32.mrf.mxu0
      %v1052 = vadd.f32 %v594, %v1051
      %v1053 = vpop.f32.mrf.mxu0
      %v1054 = vpop.f32.mrf.mxu0
      %v1055 = vadd.f32 %v594, %v1054
      %v1056 = vpop.f32.mrf.mxu0
      %1057 = vmatprep.mubr.bf16.mxu0 0
      %1058 = vmatmul.mubr.bf16.gmra.mxu0 %v830
      %v1059 = vpop.f32.mrf.mxu0
      %v1060 = vadd.f32 %v594, %v1059
      %v1061 = vpop.f32.mrf.mxu0
      %v1062 = vpop.f32.mrf.mxu0
      %v1063 = vadd.f32 %v594, %v1062
      %v1064 = vpop.f32.mrf.mxu0
      %1065 = vmatprep.mubr.bf16.mxu0 0
      %1066 = vmatmul.mubr.bf16.gmra.mxu0 %v833
      %v1067 = vpop.f32.mrf.mxu0
      %v1068 = vadd.f32 %v594, %v1067
      %v1069 = vpop.f32.mrf.mxu0
      %v1070 = vpop.f32.mrf.mxu0
      %v1071 = vadd.f32 %v594, %v1070
      %v1072 = vpop.f32.mrf.mxu0
      %1073 = vmatprep.mubr.bf16.mxu0 0
      %1074 = vmatmul.mubr.bf16.gmra.mxu0 %v836
      %v1075 = vpop.f32.mrf.mxu0
      %v1076 = vadd.f32 %v594, %v1075
      %v1077 = vpop.f32.mrf.mxu0
      %v1078 = vpop.f32.mrf.mxu0
      %v1079 = vadd.f32 %v594, %v1078
      %v1080 = vpop.f32.mrf.mxu0
      %1081 = vmatprep.mubr.bf16.mxu0 0
      %1082 = vmatmul.mubr.bf16.gmra.mxu0 %v839
      %v1083 = vpop.f32.mrf.mxu0
      %v1084 = vadd.f32 %v594, %v1083
      %v1085 = vpop.f32.mrf.mxu0
      %v1086 = vpop.f32.mrf.mxu0
      %v1087 = vadd.f32 %v594, %v1086
      %v1088 = vpop.f32.mrf.mxu0
      %1089 = vmatprep.mubr.bf16.mxu0 0
      %1090 = vmatmul.mubr.bf16.gmra.mxu0 %v842
      %v1091 = vpop.f32.mrf.mxu0
      %v1092 = vadd.f32 %v594, %v1091
      %v1093 = vpop.f32.mrf.mxu0
      %v1094 = vpop.f32.mrf.mxu0
      %v1095 = vadd.f32 %v594, %v1094
      %v1096 = vpop.f32.mrf.mxu0
      %1097 = vmatprep.mubr.bf16.mxu0 0
      %1098 = vmatmul.mubr.bf16.gmra.mxu0 %v845
      %v1099 = vpop.f32.mrf.mxu0
      %v1100 = vadd.f32 %v594, %v1099
      %v1101 = vpop.f32.mrf.mxu0
      %v1102 = vpop.f32.mrf.mxu0
      %v1103 = vadd.f32 %v594, %v1102
      %v1104 = vpop.f32.mrf.mxu0
      %1105 = vmatprep.mubr.bf16.mxu0 0
      %1106 = vmatmul.mubr.bf16.gmra.mxu0 %v848
      %v1107 = vpop.f32.mrf.mxu0
      %v1108 = vadd.f32 %v594, %v1107
      %v1109 = vpop.f32.mrf.mxu0
      %v1110 = vpop.f32.mrf.mxu0
      %v1111 = vadd.f32 %v594, %v1110
      %v1112 = vpop.f32.mrf.mxu0
      %1113 = vmatprep.mubr.bf16.mxu0 0
      %1114 = vmatmul.mubr.bf16.gmra.mxu0 %v851
      %v1115 = vpop.f32.mrf.mxu0
      %v1116 = vadd.f32 %v594, %v1115
      %v1117 = vpop.f32.mrf.mxu0
      %v1118 = vpop.f32.mrf.mxu0
      %v1119 = vadd.f32 %v594, %v1118
      %v1120 = vpop.f32.mrf.mxu0
      %1121 = vmatprep.mubr.bf16.mxu0 0
      %1122 = vmatmul.mubr.bf16.gmra.mxu0 %v854
      %v1123 = vpop.f32.mrf.mxu0
      %v1124 = vadd.f32 %v594, %v1123
      %v1125 = vpop.f32.mrf.mxu0
      %v1126 = vpop.f32.mrf.mxu0
      %v1127 = vadd.f32 %v594, %v1126
      %v1128 = vpop.f32.mrf.mxu0
      %1129 = vmatprep.mubr.bf16.mxu0 0
      %1130 = vmatmul.mubr.bf16.gmra.mxu0 %v857
      %v1131 = vpop.f32.mrf.mxu0
      %v1132 = vadd.f32 %v594, %v1131
      %v1133 = vpop.f32.mrf.mxu0
      %v1134 = vpop.f32.mrf.mxu0
      %v1135 = vadd.f32 %v594, %v1134
      %v1136 = vpop.f32.mrf.mxu0
      %1137 = vmatprep.mubr.bf16.mxu0 0
      %1138 = vmatmul.mubr.bf16.gmra.mxu0 %v860
      %v1139 = vpop.f32.mrf.mxu0
      %v1140 = vadd.f32 %v594, %v1139
      %v1141 = vpop.f32.mrf.mxu0
      %v1142 = vpop.f32.mrf.mxu0
      %v1143 = vadd.f32 %v594, %v1142
      %v1144 = vpop.f32.mrf.mxu0
      %1145 = vmatprep.mubr.bf16.mxu0 0
      %1146 = vmatmul.mubr.bf16.gmra.mxu0 %v863
      %v1147 = vpop.f32.mrf.mxu0
      %v1148 = vadd.f32 %v594, %v1147
      %v1149 = vpop.f32.mrf.mxu0
      %v1150 = vpop.f32.mrf.mxu0
      %v1151 = vadd.f32 %v594, %v1150
      %v1152 = vpop.f32.mrf.mxu0
      %1153 = vdwg.mxu0
      %v1154 = vmax.f32 %v900, 0.0
      %v1155 = vmax.f32 %v903, 0.0
      %v1156 = vmax.f32 %v908, 0.0
      %v1157 = vmax.f32 %v911, 0.0
      %v1158 = vmax.f32 %v916, 0.0
      %v1159 = vmax.f32 %v919, 0.0
      %v1160 = vmax.f32 %v924, 0.0
      %v1161 = vmax.f32 %v927, 0.0
      %v1162 = vmax.f32 %v932, 0.0
      %v1163 = vmax.f32 %v935, 0.0
      %v1164 = vmax.f32 %v940, 0.0
      %v1165 = vmax.f32 %v943, 0.0
      %v1166 = vmax.f32 %v948, 0.0
      %v1167 = vmax.f32 %v951, 0.0
      %v1168 = vmax.f32 %v956, 0.0
      %v1169 = vmax.f32 %v959, 0.0
      %v1170 = vmax.f32 %v964, 0.0
      %v1171 = vmax.f32 %v967, 0.0
      %v1172 = vmax.f32 %v972, 0.0
      %v1173 = vmax.f32 %v975, 0.0
      %v1174 = vmax.f32 %v980, 0.0
      %v1175 = vmax.f32 %v983, 0.0
      %v1176 = vmax.f32 %v988, 0.0
      %v1177 = vmax.f32 %v991, 0.0
      %v1178 = vmax.f32 %v996, 0.0
      %v1179 = vmax.f32 %v999, 0.0
      %v1180 = vmax.f32 %v1004, 0.0
      %v1181 = vmax.f32 %v1007, 0.0
      %v1182 = vmax.f32 %v1012, 0.0
      %v1183 = vmax.f32 %v1015, 0.0
      %v1184 = vmax.f32 %v1020, 0.0
      %v1185 = vmax.f32 %v1023, 0.0
      %v1186 = vmax.f32 %v1028, 0.0
      %v1187 = vmax.f32 %v1031, 0.0
      %v1188 = vmax.f32 %v1036, 0.0
      %v1189 = vmax.f32 %v1039, 0.0
      %v1190 = vmax.f32 %v1044, 0.0
      %v1191 = vmax.f32 %v1047, 0.0
      %v1192 = vmax.f32 %v1052, 0.0
      %v1193 = vmax.f32 %v1055, 0.0
      %v1194 = vmax.f32 %v1060, 0.0
      %v1195 = vmax.f32 %v1063, 0.0
      %v1196 = vmax.f32 %v1068, 0.0
      %v1197 = vmax.f32 %v1071, 0.0
      %v1198 = vmax.f32 %v1076, 0.0
      %v1199 = vmax.f32 %v1079, 0.0
      %v1200 = vmax.f32 %v1084, 0.0
      %v1201 = vmax.f32 %v1087, 0.0
      %v1202 = vmax.f32 %v1092, 0.0
      %v1203 = vmax.f32 %v1095, 0.0
      %v1204 = vmax.f32 %v1100, 0.0
      %v1205 = vmax.f32 %v1103, 0.0
      %v1206 = vmax.f32 %v1108, 0.0
      %v1207 = vmax.f32 %v1111, 0.0
      %v1208 = vmax.f32 %v1116, 0.0
      %v1209 = vmax.f32 %v1119, 0.0
      %v1210 = vmax.f32 %v1124, 0.0
      %v1211 = vmax.f32 %v1127, 0.0
      %v1212 = vmax.f32 %v1132, 0.0
      %v1213 = vmax.f32 %v1135, 0.0
      %v1214 = vmax.f32 %v1140, 0.0
      %v1215 = vmax.f32 %v1143, 0.0
      %v1216 = vmax.f32 %v1148, 0.0
      %v1217 = vmax.f32 %v1151, 0.0
      %v1218 = vand.u32 2147483647, %v900
      %v1219 = vand.u32 2147483647, %v903
      %v1220 = vand.u32 2147483647, %v908
      %v1221 = vand.u32 2147483647, %v911
      %v1222 = vand.u32 2147483647, %v916
      %v1223 = vand.u32 2147483647, %v919
      %v1224 = vand.u32 2147483647, %v924
      %v1225 = vand.u32 2147483647, %v927
      %v1226 = vand.u32 2147483647, %v932
      %v1227 = vand.u32 2147483647, %v935
      %v1228 = vand.u32 2147483647, %v940
      %v1229 = vand.u32 2147483647, %v943
      %v1230 = vand.u32 2147483647, %v948
      %v1231 = vand.u32 2147483647, %v951
      %v1232 = vand.u32 2147483647, %v956
      %v1233 = vand.u32 2147483647, %v959
      %v1234 = vand.u32 2147483647, %v964
      %v1235 = vand.u32 2147483647, %v967
      %v1236 = vand.u32 2147483647, %v972
      %v1237 = vand.u32 2147483647, %v975
      %v1238 = vand.u32 2147483647, %v980
      %v1239 = vand.u32 2147483647, %v983
      %v1240 = vand.u32 2147483647, %v988
      %v1241 = vand.u32 2147483647, %v991
      %v1242 = vand.u32 2147483647, %v996
      %v1243 = vand.u32 2147483647, %v999
      %v1244 = vand.u32 2147483647, %v1004
      %v1245 = vand.u32 2147483647, %v1007
      %v1246 = vand.u32 2147483647, %v1012
      %v1247 = vand.u32 2147483647, %v1015
      %v1248 = vand.u32 2147483647, %v1020
      %v1249 = vand.u32 2147483647, %v1023
      %v1250 = vand.u32 2147483647, %v1028
      %v1251 = vand.u32 2147483647, %v1031
      %v1252 = vand.u32 2147483647, %v1036
      %v1253 = vand.u32 2147483647, %v1039
      %v1254 = vand.u32 2147483647, %v1044
      %v1255 = vand.u32 2147483647, %v1047
      %v1256 = vand.u32 2147483647, %v1052
      %v1257 = vand.u32 2147483647, %v1055
      %v1258 = vand.u32 2147483647, %v1060
      %v1259 = vand.u32 2147483647, %v1063
      %v1260 = vand.u32 2147483647, %v1068
      %v1261 = vand.u32 2147483647, %v1071
      %v1262 = vand.u32 2147483647, %v1076
      %v1263 = vand.u32 2147483647, %v1079
      %v1264 = vand.u32 2147483647, %v1084
      %v1265 = vand.u32 2147483647, %v1087
      %v1266 = vand.u32 2147483647, %v1092
      %v1267 = vand.u32 2147483647, %v1095
      %v1268 = vand.u32 2147483647, %v1100
      %v1269 = vand.u32 2147483647, %v1103
      %v1270 = vand.u32 2147483647, %v1108
      %v1271 = vand.u32 2147483647, %v1111
      %v1272 = vand.u32 2147483647, %v1116
      %v1273 = vand.u32 2147483647, %v1119
      %v1274 = vand.u32 2147483647, %v1124
      %v1275 = vand.u32 2147483647, %v1127
      %v1276 = vand.u32 2147483647, %v1132
      %v1277 = vand.u32 2147483647, %v1135
      %v1278 = vand.u32 2147483647, %v1140
      %v1279 = vand.u32 2147483647, %v1143
      %v1280 = vand.u32 2147483647, %v1148
      %v1281 = vand.u32 2147483647, %v1151
      %v1282 = vsub.f32 0.0, %v1218
      %v1283 = vsub.f32 0.0, %v1219
      %v1284 = vsub.f32 0.0, %v1220
      %v1285 = vsub.f32 0.0, %v1221
      %v1286 = vsub.f32 0.0, %v1222
      %v1287 = vsub.f32 0.0, %v1223
      %v1288 = vsub.f32 0.0, %v1224
      %v1289 = vsub.f32 0.0, %v1225
      %v1290 = vsub.f32 0.0, %v1226
      %v1291 = vsub.f32 0.0, %v1227
      %v1292 = vsub.f32 0.0, %v1228
      %v1293 = vsub.f32 0.0, %v1229
      %v1294 = vsub.f32 0.0, %v1230
      %v1295 = vsub.f32 0.0, %v1231
      %v1296 = vsub.f32 0.0, %v1232
      %v1297 = vsub.f32 0.0, %v1233
      %v1298 = vsub.f32 0.0, %v1234
      %v1299 = vsub.f32 0.0, %v1235
      %v1300 = vsub.f32 0.0, %v1236
      %v1301 = vsub.f32 0.0, %v1237
      %v1302 = vsub.f32 0.0, %v1238
      %v1303 = vsub.f32 0.0, %v1239
      %v1304 = vsub.f32 0.0, %v1240
      %v1305 = vsub.f32 0.0, %v1241
      %v1306 = vsub.f32 0.0, %v1242
      %v1307 = vsub.f32 0.0, %v1243
      %v1308 = vsub.f32 0.0, %v1244
      %v1309 = vsub.f32 0.0, %v1245
      %v1310 = vsub.f32 0.0, %v1246
      %v1311 = vsub.f32 0.0, %v1247
      %v1312 = vsub.f32 0.0, %v1248
      %v1313 = vsub.f32 0.0, %v1249
      %v1314 = vsub.f32 0.0, %v1250
      %v1315 = vsub.f32 0.0, %v1251
      %v1316 = vsub.f32 0.0, %v1252
      %v1317 = vsub.f32 0.0, %v1253
      %v1318 = vsub.f32 0.0, %v1254
      %v1319 = vsub.f32 0.0, %v1255
      %v1320 = vsub.f32 0.0, %v1256
      %v1321 = vsub.f32 0.0, %v1257
      %v1322 = vsub.f32 0.0, %v1258
      %v1323 = vsub.f32 0.0, %v1259
      %v1324 = vsub.f32 0.0, %v1260
      %v1325 = vsub.f32 0.0, %v1261
      %v1326 = vsub.f32 0.0, %v1262
      %v1327 = vsub.f32 0.0, %v1263
      %v1328 = vsub.f32 0.0, %v1264
      %v1329 = vsub.f32 0.0, %v1265
      %v1330 = vsub.f32 0.0, %v1266
      %v1331 = vsub.f32 0.0, %v1267
      %v1332 = vsub.f32 0.0, %v1268
      %v1333 = vsub.f32 0.0, %v1269
      %v1334 = vsub.f32 0.0, %v1270
      %v1335 = vsub.f32 0.0, %v1271
      %v1336 = vsub.f32 0.0, %v1272
      %v1337 = vsub.f32 0.0, %v1273
      %v1338 = vsub.f32 0.0, %v1274
      %v1339 = vsub.f32 0.0, %v1275
      %v1340 = vsub.f32 0.0, %v1276
      %v1341 = vsub.f32 0.0, %v1277
      %v1342 = vsub.f32 0.0, %v1278
      %v1343 = vsub.f32 0.0, %v1279
      %v1344 = vsub.f32 0.0, %v1280
      %v1345 = vsub.f32 0.0, %v1281
      %v1346 = vmul.f32 %v1282, 1.442695
      %v1347 = vpow.pop %v1346
      %v1348 = vmul.f32 %v1283, 1.442695
      %v1349 = vpow.pop %v1348
      %v1350 = vmul.f32 %v1284, 1.442695
      %v1351 = vpow.pop %v1350
      %v1352 = vmul.f32 %v1285, 1.442695
      %v1353 = vpow.pop %v1352
      %v1354 = vmul.f32 %v1286, 1.442695
      %v1355 = vpow.pop %v1354
      %v1356 = vmul.f32 %v1287, 1.442695
      %v1357 = vpow.pop %v1356
      %v1358 = vmul.f32 %v1288, 1.442695
      %v1359 = vpow.pop %v1358
      %v1360 = vmul.f32 %v1289, 1.442695
      %v1361 = vpow.pop %v1360
      %v1362 = vmul.f32 %v1290, 1.442695
      %v1363 = vpow.pop %v1362
      %v1364 = vmul.f32 %v1291, 1.442695
      %v1365 = vpow.pop %v1364
      %v1366 = vmul.f32 %v1292, 1.442695
      %v1367 = vpow.pop %v1366
      %v1368 = vmul.f32 %v1293, 1.442695
      %v1369 = vpow.pop %v1368
      %v1370 = vmul.f32 %v1294, 1.442695
      %v1371 = vpow.pop %v1370
      %v1372 = vmul.f32 %v1295, 1.442695
      %v1373 = vpow.pop %v1372
      %v1374 = vmul.f32 %v1296, 1.442695
      %v1375 = vpow.pop %v1374
      %v1376 = vmul.f32 %v1297, 1.442695
      %v1377 = vpow.pop %v1376
      %v1378 = vmul.f32 %v1298, 1.442695
      %v1379 = vpow.pop %v1378
      %v1380 = vmul.f32 %v1299, 1.442695
      %v1381 = vpow.pop %v1380
      %v1382 = vmul.f32 %v1300, 1.442695
      %v1383 = vpow.pop %v1382
      %v1384 = vmul.f32 %v1301, 1.442695
      %v1385 = vpow.pop %v1384
      %v1386 = vmul.f32 %v1302, 1.442695
      %v1387 = vpow.pop %v1386
      %v1388 = vmul.f32 %v1303, 1.442695
      %v1389 = vpow.pop %v1388
      %v1390 = vmul.f32 %v1304, 1.442695
      %v1391 = vpow.pop %v1390
      %v1392 = vmul.f32 %v1305, 1.442695
      %v1393 = vpow.pop %v1392
      %v1394 = vmul.f32 %v1306, 1.442695
      %v1395 = vpow.pop %v1394
      %v1396 = vmul.f32 %v1307, 1.442695
      %v1397 = vpow.pop %v1396
      %v1398 = vmul.f32 %v1308, 1.442695
      %v1399 = vpow.pop %v1398
      %v1400 = vmul.f32 %v1309, 1.442695
      %v1401 = vpow.pop %v1400
      %v1402 = vmul.f32 %v1310, 1.442695
      %v1403 = vpow.pop %v1402
      %v1404 = vmul.f32 %v1311, 1.442695
      %v1405 = vpow.pop %v1404
      %v1406 = vmul.f32 %v1312, 1.442695
      %v1407 = vpow.pop %v1406
      %v1408 = vmul.f32 %v1313, 1.442695
      %v1409 = vpow.pop %v1408
      %v1410 = vmul.f32 %v1314, 1.442695
      %v1411 = vpow.pop %v1410
      %v1412 = vmul.f32 %v1315, 1.442695
      %v1413 = vpow.pop %v1412
      %v1414 = vmul.f32 %v1316, 1.442695
      %v1415 = vpow.pop %v1414
      %v1416 = vmul.f32 %v1317, 1.442695
      %v1417 = vpow.pop %v1416
      %v1418 = vmul.f32 %v1318, 1.442695
      %v1419 = vpow.pop %v1418
      %v1420 = vmul.f32 %v1319, 1.442695
      %v1421 = vpow.pop %v1420
      %v1422 = vmul.f32 %v1320, 1.442695
      %v1423 = vpow.pop %v1422
      %v1424 = vmul.f32 %v1321, 1.442695
      %v1425 = vpow.pop %v1424
      %v1426 = vmul.f32 %v1322, 1.442695
      %v1427 = vpow.pop %v1426
      %v1428 = vmul.f32 %v1323, 1.442695
      %v1429 = vpow.pop %v1428
      %v1430 = vmul.f32 %v1324, 1.442695
      %v1431 = vpow.pop %v1430
      %v1432 = vmul.f32 %v1325, 1.442695
      %v1433 = vpow.pop %v1432
      %v1434 = vmul.f32 %v1326, 1.442695
      %v1435 = vpow.pop %v1434
      %v1436 = vmul.f32 %v1327, 1.442695
      %v1437 = vpow.pop %v1436
      %v1438 = vmul.f32 %v1328, 1.442695
      %v1439 = vpow.pop %v1438
      %v1440 = vmul.f32 %v1329, 1.442695
      %v1441 = vpow.pop %v1440
      %v1442 = vmul.f32 %v1330, 1.442695
      %v1443 = vpow.pop %v1442
      %v1444 = vmul.f32 %v1331, 1.442695
      %v1445 = vpow.pop %v1444
      %v1446 = vmul.f32 %v1332, 1.442695
      %v1447 = vpow.pop %v1446
      %v1448 = vmul.f32 %v1333, 1.442695
      %v1449 = vpow.pop %v1448
      %v1450 = vmul.f32 %v1334, 1.442695
      %v1451 = vpow.pop %v1450
      %v1452 = vmul.f32 %v1335, 1.442695
      %v1453 = vpow.pop %v1452
      %v1454 = vmul.f32 %v1336, 1.442695
      %v1455 = vpow.pop %v1454
      %v1456 = vmul.f32 %v1337, 1.442695
      %v1457 = vpow.pop %v1456
      %v1458 = vmul.f32 %v1338, 1.442695
      %v1459 = vpow.pop %v1458
      %v1460 = vmul.f32 %v1339, 1.442695
      %v1461 = vpow.pop %v1460
      %v1462 = vmul.f32 %v1340, 1.442695
      %v1463 = vpow.pop %v1462
      %v1464 = vmul.f32 %v1341, 1.442695
      %v1465 = vpow.pop %v1464
      %v1466 = vmul.f32 %v1342, 1.442695
      %v1467 = vpow.pop %v1466
      %v1468 = vmul.f32 %v1343, 1.442695
      %v1469 = vpow.pop %v1468
      %v1470 = vmul.f32 %v1344, 1.442695
      %v1471 = vpow.pop %v1470
      %v1472 = vmul.f32 %v1345, 1.442695
      %v1473 = vpow.pop %v1472
      %v1474 = vadd.f32 %v1347, 1.0
      %v1475 = vadd.f32 %v1349, 1.0
      %v1476 = vadd.f32 %v1351, 1.0
      %v1477 = vadd.f32 %v1353, 1.0
      %v1478 = vadd.f32 %v1355, 1.0
      %v1479 = vadd.f32 %v1357, 1.0
      %v1480 = vadd.f32 %v1359, 1.0
      %v1481 = vadd.f32 %v1361, 1.0
      %v1482 = vadd.f32 %v1363, 1.0
      %v1483 = vadd.f32 %v1365, 1.0
      %v1484 = vadd.f32 %v1367, 1.0
      %v1485 = vadd.f32 %v1369, 1.0
      %v1486 = vadd.f32 %v1371, 1.0
      %v1487 = vadd.f32 %v1373, 1.0
      %v1488 = vadd.f32 %v1375, 1.0
      %v1489 = vadd.f32 %v1377, 1.0
      %v1490 = vadd.f32 %v1379, 1.0
      %v1491 = vadd.f32 %v1381, 1.0
      %v1492 = vadd.f32 %v1383, 1.0
      %v1493 = vadd.f32 %v1385, 1.0
      %v1494 = vadd.f32 %v1387, 1.0
      %v1495 = vadd.f32 %v1389, 1.0
      %v1496 = vadd.f32 %v1391, 1.0
      %v1497 = vadd.f32 %v1393, 1.0
      %v1498 = vadd.f32 %v1395, 1.0
      %v1499 = vadd.f32 %v1397, 1.0
      %v1500 = vadd.f32 %v1399, 1.0
      %v1501 = vadd.f32 %v1401, 1.0
      %v1502 = vadd.f32 %v1403, 1.0
      %v1503 = vadd.f32 %v1405, 1.0
      %v1504 = vadd.f32 %v1407, 1.0
      %v1505 = vadd.f32 %v1409, 1.0
      %v1506 = vadd.f32 %v1411, 1.0
      %v1507 = vadd.f32 %v1413, 1.0
      %v1508 = vadd.f32 %v1415, 1.0
      %v1509 = vadd.f32 %v1417, 1.0
      %v1510 = vadd.f32 %v1419, 1.0
      %v1511 = vadd.f32 %v1421, 1.0
      %v1512 = vadd.f32 %v1423, 1.0
      %v1513 = vadd.f32 %v1425, 1.0
      %v1514 = vadd.f32 %v1427, 1.0
      %v1515 = vadd.f32 %v1429, 1.0
      %v1516 = vadd.f32 %v1431, 1.0
      %v1517 = vadd.f32 %v1433, 1.0
      %v1518 = vadd.f32 %v1435, 1.0
      %v1519 = vadd.f32 %v1437, 1.0
      %v1520 = vadd.f32 %v1439, 1.0
      %v1521 = vadd.f32 %v1441, 1.0
      %v1522 = vadd.f32 %v1443, 1.0
      %v1523 = vadd.f32 %v1445, 1.0
      %v1524 = vadd.f32 %v1447, 1.0
      %v1525 = vadd.f32 %v1449, 1.0
      %v1526 = vadd.f32 %v1451, 1.0
      %v1527 = vadd.f32 %v1453, 1.0
      %v1528 = vadd.f32 %v1455, 1.0
      %v1529 = vadd.f32 %v1457, 1.0
      %v1530 = vadd.f32 %v1459, 1.0
      %v1531 = vadd.f32 %v1461, 1.0
      %v1532 = vadd.f32 %v1463, 1.0
      %v1533 = vadd.f32 %v1465, 1.0
      %v1534 = vadd.f32 %v1467, 1.0
      %v1535 = vadd.f32 %v1469, 1.0
      %v1536 = vadd.f32 %v1471, 1.0
      %v1537 = vadd.f32 %v1473, 1.0
      %v1538 = vlog2.pop %v1474
      %v1539 = vmul.f32 %v1538, 0.6931472
      %v1540 = vlog2.pop %v1475
      %v1541 = vmul.f32 %v1540, 0.6931472
      %v1542 = vlog2.pop %v1476
      %v1543 = vmul.f32 %v1542, 0.6931472
      %v1544 = vlog2.pop %v1477
      %v1545 = vmul.f32 %v1544, 0.6931472
      %v1546 = vlog2.pop %v1478
      %v1547 = vmul.f32 %v1546, 0.6931472
      %v1548 = vlog2.pop %v1479
      %v1549 = vmul.f32 %v1548, 0.6931472
      %v1550 = vlog2.pop %v1480
      %v1551 = vmul.f32 %v1550, 0.6931472
      %v1552 = vlog2.pop %v1481
      %v1553 = vmul.f32 %v1552, 0.6931472
      %v1554 = vlog2.pop %v1482
      %v1555 = vmul.f32 %v1554, 0.6931472
      %v1556 = vlog2.pop %v1483
      %v1557 = vmul.f32 %v1556, 0.6931472
      %v1558 = vlog2.pop %v1484
      %v1559 = vmul.f32 %v1558, 0.6931472
      %v1560 = vlog2.pop %v1485
      %v1561 = vmul.f32 %v1560, 0.6931472
      %v1562 = vlog2.pop %v1486
      %v1563 = vmul.f32 %v1562, 0.6931472
      %v1564 = vlog2.pop %v1487
      %v1565 = vmul.f32 %v1564, 0.6931472
      %v1566 = vlog2.pop %v1488
      %v1567 = vmul.f32 %v1566, 0.6931472
      %v1568 = vlog2.pop %v1489
      %v1569 = vmul.f32 %v1568, 0.6931472
      %v1570 = vlog2.pop %v1490
      %v1571 = vmul.f32 %v1570, 0.6931472
      %v1572 = vlog2.pop %v1491
      %v1573 = vmul.f32 %v1572, 0.6931472
      %v1574 = vlog2.pop %v1492
      %v1575 = vmul.f32 %v1574, 0.6931472
      %v1576 = vlog2.pop %v1493
      %v1577 = vmul.f32 %v1576, 0.6931472
      %v1578 = vlog2.pop %v1494
      %v1579 = vmul.f32 %v1578, 0.6931472
      %v1580 = vlog2.pop %v1495
      %v1581 = vmul.f32 %v1580, 0.6931472
      %v1582 = vlog2.pop %v1496
      %v1583 = vmul.f32 %v1582, 0.6931472
      %v1584 = vlog2.pop %v1497
      %v1585 = vmul.f32 %v1584, 0.6931472
      %v1586 = vlog2.pop %v1498
      %v1587 = vmul.f32 %v1586, 0.6931472
      %v1588 = vlog2.pop %v1499
      %v1589 = vmul.f32 %v1588, 0.6931472
      %v1590 = vlog2.pop %v1500
      %v1591 = vmul.f32 %v1590, 0.6931472
      %v1592 = vlog2.pop %v1501
      %v1593 = vmul.f32 %v1592, 0.6931472
      %v1594 = vlog2.pop %v1502
      %v1595 = vmul.f32 %v1594, 0.6931472
      %v1596 = vlog2.pop %v1503
      %v1597 = vmul.f32 %v1596, 0.6931472
      %v1598 = vlog2.pop %v1504
      %v1599 = vmul.f32 %v1598, 0.6931472
      %v1600 = vlog2.pop %v1505
      %v1601 = vmul.f32 %v1600, 0.6931472
      %v1602 = vlog2.pop %v1506
      %v1603 = vmul.f32 %v1602, 0.6931472
      %v1604 = vlog2.pop %v1507
      %v1605 = vmul.f32 %v1604, 0.6931472
      %v1606 = vlog2.pop %v1508
      %v1607 = vmul.f32 %v1606, 0.6931472
      %v1608 = vlog2.pop %v1509
      %v1609 = vmul.f32 %v1608, 0.6931472
      %v1610 = vlog2.pop %v1510
      %v1611 = vmul.f32 %v1610, 0.6931472
      %v1612 = vlog2.pop %v1511
      %v1613 = vmul.f32 %v1612, 0.6931472
      %v1614 = vlog2.pop %v1512
      %v1615 = vmul.f32 %v1614, 0.6931472
      %v1616 = vlog2.pop %v1513
      %v1617 = vmul.f32 %v1616, 0.6931472
      %v1618 = vlog2.pop %v1514
      %v1619 = vmul.f32 %v1618, 0.6931472
      %v1620 = vlog2.pop %v1515
      %v1621 = vmul.f32 %v1620, 0.6931472
      %v1622 = vlog2.pop %v1516
      %v1623 = vmul.f32 %v1622, 0.6931472
      %v1624 = vlog2.pop %v1517
      %v1625 = vmul.f32 %v1624, 0.6931472
      %v1626 = vlog2.pop %v1518
      %v1627 = vmul.f32 %v1626, 0.6931472
      %v1628 = vlog2.pop %v1519
      %v1629 = vmul.f32 %v1628, 0.6931472
      %v1630 = vlog2.pop %v1520
      %v1631 = vmul.f32 %v1630, 0.6931472
      %v1632 = vlog2.pop %v1521
      %v1633 = vmul.f32 %v1632, 0.6931472
      %v1634 = vlog2.pop %v1522
      %v1635 = vmul.f32 %v1634, 0.6931472
      %v1636 = vlog2.pop %v1523
      %v1637 = vmul.f32 %v1636, 0.6931472
      %v1638 = vlog2.pop %v1524
      %v1639 = vmul.f32 %v1638, 0.6931472
      %v1640 = vlog2.pop %v1525
      %v1641 = vmul.f32 %v1640, 0.6931472
      %v1642 = vlog2.pop %v1526
      %v1643 = vmul.f32 %v1642, 0.6931472
      %v1644 = vlog2.pop %v1527
      %v1645 = vmul.f32 %v1644, 0.6931472
      %v1646 = vlog2.pop %v1528
      %v1647 = vmul.f32 %v1646, 0.6931472
      %v1648 = vlog2.pop %v1529
      %v1649 = vmul.f32 %v1648, 0.6931472
      %v1650 = vlog2.pop %v1530
      %v1651 = vmul.f32 %v1650, 0.6931472
      %v1652 = vlog2.pop %v1531
      %v1653 = vmul.f32 %v1652, 0.6931472
      %v1654 = vlog2.pop %v1532
      %v1655 = vmul.f32 %v1654, 0.6931472
      %v1656 = vlog2.pop %v1533
      %v1657 = vmul.f32 %v1656, 0.6931472
      %v1658 = vlog2.pop %v1534
      %v1659 = vmul.f32 %v1658, 0.6931472
      %v1660 = vlog2.pop %v1535
      %v1661 = vmul.f32 %v1660, 0.6931472
      %v1662 = vlog2.pop %v1536
      %v1663 = vmul.f32 %v1662, 0.6931472
      %v1664 = vlog2.pop %v1537
      %v1665 = vmul.f32 %v1664, 0.6931472
      %v1666 = vadd.f32 %v1154, %v1539
      %v1667 = vadd.f32 %v1155, %v1541
      %v1668 = vadd.f32 %v1156, %v1543
      %v1669 = vadd.f32 %v1157, %v1545
      %v1670 = vadd.f32 %v1158, %v1547
      %v1671 = vadd.f32 %v1159, %v1549
      %v1672 = vadd.f32 %v1160, %v1551
      %v1673 = vadd.f32 %v1161, %v1553
      %v1674 = vadd.f32 %v1162, %v1555
      %v1675 = vadd.f32 %v1163, %v1557
      %v1676 = vadd.f32 %v1164, %v1559
      %v1677 = vadd.f32 %v1165, %v1561
      %v1678 = vadd.f32 %v1166, %v1563
      %v1679 = vadd.f32 %v1167, %v1565
      %v1680 = vadd.f32 %v1168, %v1567
      %v1681 = vadd.f32 %v1169, %v1569
      %v1682 = vadd.f32 %v1170, %v1571
      %v1683 = vadd.f32 %v1171, %v1573
      %v1684 = vadd.f32 %v1172, %v1575
      %v1685 = vadd.f32 %v1173, %v1577
      %v1686 = vadd.f32 %v1174, %v1579
      %v1687 = vadd.f32 %v1175, %v1581
      %v1688 = vadd.f32 %v1176, %v1583
      %v1689 = vadd.f32 %v1177, %v1585
      %v1690 = vadd.f32 %v1178, %v1587
      %v1691 = vadd.f32 %v1179, %v1589
      %v1692 = vadd.f32 %v1180, %v1591
      %v1693 = vadd.f32 %v1181, %v1593
      %v1694 = vadd.f32 %v1182, %v1595
      %v1695 = vadd.f32 %v1183, %v1597
      %v1696 = vadd.f32 %v1184, %v1599
      %v1697 = vadd.f32 %v1185, %v1601
      %v1698 = vadd.f32 %v1186, %v1603
      %v1699 = vadd.f32 %v1187, %v1605
      %v1700 = vadd.f32 %v1188, %v1607
      %v1701 = vadd.f32 %v1189, %v1609
      %v1702 = vadd.f32 %v1190, %v1611
      %v1703 = vadd.f32 %v1191, %v1613
      %v1704 = vadd.f32 %v1192, %v1615
      %v1705 = vadd.f32 %v1193, %v1617
      %v1706 = vadd.f32 %v1194, %v1619
      %v1707 = vadd.f32 %v1195, %v1621
      %v1708 = vadd.f32 %v1196, %v1623
      %v1709 = vadd.f32 %v1197, %v1625
      %v1710 = vadd.f32 %v1198, %v1627
      %v1711 = vadd.f32 %v1199, %v1629
      %v1712 = vadd.f32 %v1200, %v1631
      %v1713 = vadd.f32 %v1201, %v1633
      %v1714 = vadd.f32 %v1202, %v1635
      %v1715 = vadd.f32 %v1203, %v1637
      %v1716 = vadd.f32 %v1204, %v1639
      %v1717 = vadd.f32 %v1205, %v1641
      %v1718 = vadd.f32 %v1206, %v1643
      %v1719 = vadd.f32 %v1207, %v1645
      %v1720 = vadd.f32 %v1208, %v1647
      %v1721 = vadd.f32 %v1209, %v1649
      %v1722 = vadd.f32 %v1210, %v1651
      %v1723 = vadd.f32 %v1211, %v1653
      %v1724 = vadd.f32 %v1212, %v1655
      %v1725 = vadd.f32 %v1213, %v1657
      %v1726 = vadd.f32 %v1214, %v1659
      %v1727 = vadd.f32 %v1215, %v1661
      %v1728 = vadd.f32 %v1216, %v1663
      %v1729 = vadd.f32 %v1217, %v1665
      %v1730 = vpack.c.bf16 %v1667, %v1666
      %v1731 = vpack.c.bf16 %v1669, %v1668
      %v1732 = vpack.c.bf16 %v1671, %v1670
      %v1733 = vpack.c.bf16 %v1673, %v1672
      %v1734 = vpack.c.bf16 %v1675, %v1674
      %v1735 = vpack.c.bf16 %v1677, %v1676
      %v1736 = vpack.c.bf16 %v1679, %v1678
      %v1737 = vpack.c.bf16 %v1681, %v1680
      %v1738 = vpack.c.bf16 %v1683, %v1682
      %v1739 = vpack.c.bf16 %v1685, %v1684
      %v1740 = vpack.c.bf16 %v1687, %v1686
      %v1741 = vpack.c.bf16 %v1689, %v1688
      %v1742 = vpack.c.bf16 %v1691, %v1690
      %v1743 = vpack.c.bf16 %v1693, %v1692
      %v1744 = vpack.c.bf16 %v1695, %v1694
      %v1745 = vpack.c.bf16 %v1697, %v1696
      %v1746 = vpack.c.bf16 %v1699, %v1698
      %v1747 = vpack.c.bf16 %v1701, %v1700
      %v1748 = vpack.c.bf16 %v1703, %v1702
      %v1749 = vpack.c.bf16 %v1705, %v1704
      %v1750 = vpack.c.bf16 %v1707, %v1706
      %v1751 = vpack.c.bf16 %v1709, %v1708
      %v1752 = vpack.c.bf16 %v1711, %v1710
      %v1753 = vpack.c.bf16 %v1713, %v1712
      %v1754 = vpack.c.bf16 %v1715, %v1714
      %v1755 = vpack.c.bf16 %v1717, %v1716
      %v1756 = vpack.c.bf16 %v1719, %v1718
      %v1757 = vpack.c.bf16 %v1721, %v1720
      %v1758 = vpack.c.bf16 %v1723, %v1722
      %v1759 = vpack.c.bf16 %v1725, %v1724
      %v1760 = vpack.c.bf16 %v1727, %v1726
      %v1761 = vpack.c.bf16 %v1729, %v1728
      %v1762 = vld [vmem:[%s3] sm:$0xf]
      %v1763 = vld [vmem:[%s3 + $0x4] sm:$0xf]
      %v1764 = vld [vmem:[%s3 + $0x8] sm:$0xf]
      %v1765 = vld [vmem:[%s3 + $0xc] sm:$0xf]
      %v1766 = vld [vmem:[%s3 + $0x10] sm:$0xf]
      %v1767 = vld [vmem:[%s3 + $0x14] sm:$0xf]
      %v1768 = vld [vmem:[%s3 + $0x18] sm:$0xf]
      %v1769 = vld [vmem:[%s3 + $0x1c] sm:$0xf]
      %v1770 = vld [vmem:[%s4] sm:$0x1]
      %v1772 = vlaneseq
      %v1773 = vshrl.u32 %v1772, 7
      %v1774 = vsub.s32 0, %v1773
      %v1775 = vrot.slane %v1770, %v1774
      %v1785 = vunpack.c.l.b16 %v1762
      %v1786 = vunpack.c.l.b16 %v1763
      %v1787 = vunpack.c.l.b16 %v1764
      %v1788 = vunpack.c.l.b16 %v1765
      %v1789 = vunpack.c.l.b16 %v1766
      %v1790 = vunpack.c.l.b16 %v1767
      %v1791 = vunpack.c.l.b16 %v1768
      %v1792 = vunpack.c.l.b16 %v1769
      %v1793 = vpack.c.b16 %v1786, %v1785
      %v1794 = vpack.c.b16 %v1788, %v1787
      %v1795 = vpack.c.b16 %v1790, %v1789
      %v1796 = vpack.c.b16 %v1792, %v1791
      %vm1801 = vcmask 523264
      %v1803 = vsel %vm1801, %v1730, 0
      %v1806 = vsel %vm1801, %v1731, 0
      %v1809 = vsel %vm1801, %v1732, 0
      %v1812 = vsel %vm1801, %v1733, 0
      %v1815 = vsel %vm1801, %v1734, 0
      %v1818 = vsel %vm1801, %v1735, 0
      %v1821 = vsel %vm1801, %v1736, 0
      %v1824 = vsel %vm1801, %v1737, 0
      %v1827 = vsel %vm1801, %v1738, 0
      %v1830 = vsel %vm1801, %v1739, 0
      %v1833 = vsel %vm1801, %v1740, 0
      %v1836 = vsel %vm1801, %v1741, 0
      %v1839 = vsel %vm1801, %v1742, 0
      %v1842 = vsel %vm1801, %v1743, 0
      %v1845 = vsel %vm1801, %v1744, 0
      %v1848 = vsel %vm1801, %v1745, 0
      %v1851 = vsel %vm1801, %v1746, 0
      %v1854 = vsel %vm1801, %v1747, 0
      %v1857 = vsel %vm1801, %v1748, 0
      %v1860 = vsel %vm1801, %v1749, 0
      %v1863 = vsel %vm1801, %v1750, 0
      %v1866 = vsel %vm1801, %v1751, 0
      %v1869 = vsel %vm1801, %v1752, 0
      %v1872 = vsel %vm1801, %v1753, 0
      %v1875 = vsel %vm1801, %v1754, 0
      %v1878 = vsel %vm1801, %v1755, 0
      %v1881 = vsel %vm1801, %v1756, 0
      %v1884 = vsel %vm1801, %v1757, 0
      %v1887 = vsel %vm1801, %v1758, 0
      %v1890 = vsel %vm1801, %v1759, 0
      %v1893 = vsel %vm1801, %v1760, 0
      %v1896 = vsel %vm1801, %v1761, 0
      %1898 = vmatprep.subr.bf16.mxu0 0
      %1899 = vmatpush1.bf16.msra.mxu0 0
      %1900 = vmatprep.subr.bf16.mxu0 0
      %1901 = vmatpush1.bf16.msra.mxu0 0
      %1902 = vmatprep.subr.bf16.mxu0 0
      %1903 = vmatpush1.bf16.msra.mxu0 0
      %1904 = vmatprep.subr.bf16.mxu0 0
      %1905 = vmatpush1.bf16.msra.mxu0 0
      %1906 = vmatprep.subr.bf16.mxu0 0
      %1907 = vmatpush1.bf16.msra.mxu0 %v1796
      %1908 = vmatprep.subr.bf16.mxu0 0
      %1909 = vmatpush1.bf16.msra.mxu0 %v1795
      %1910 = vmatprep.subr.bf16.mxu0 0
      %1911 = vmatpush1.bf16.msra.mxu0 %v1794
      %1912 = vmatprep.subr.bf16.mxu0 0
      %1913 = vmatpush1.bf16.msra.mxu0 %v1793
      %1914 = vmatprep.subr.bf16.mxu0 0
      %1915 = vmatpush2.bf16.msra.mxu0 0
      %1916 = vmatprep.subr.bf16.mxu0 0
      %1917 = vmatpush2.bf16.msra.mxu0 0
      %1918 = vmatprep.subr.bf16.mxu0 0
      %1919 = vmatpush2.bf16.msra.mxu0 0
      %1920 = vmatprep.subr.bf16.mxu0 0
      %1921 = vmatpush2.bf16.msra.mxu0 0
      %1922 = vmatprep.subr.bf16.mxu0 0
      %1923 = vmatpush2.bf16.msra.mxu0 0
      %1924 = vmatprep.subr.bf16.mxu0 0
      %1925 = vmatpush2.bf16.msra.mxu0 0
      %1926 = vmatprep.subr.bf16.mxu0 0
      %1927 = vmatpush2.bf16.msra.mxu0 0
      %1928 = vmatprep.subr.bf16.mxu0 0
      %1929 = vmatpush2.bf16.msra.mxu0 0
      %1930 = vmatprep.mubr.bf16.mxu0 0
      %1931 = vmatmul.mubr.bf16.gmra.mxu0 %v1803
      %v1932 = vpop.f32.mrf.mxu0
      %v1933 = vadd.f32 %v1775, %v1932
      %v1934 = vpop.f32.mrf.mxu0
      %v1935 = vpop.f32.mrf.mxu0
      %v1936 = vadd.f32 %v1775, %v1935
      %v1937 = vpop.f32.mrf.mxu0
      %1938 = vmatprep.mubr.bf16.mxu0 0
      %1939 = vmatmul.mubr.bf16.gmra.mxu0 %v1806
      %v1940 = vpop.f32.mrf.mxu0
      %v1941 = vadd.f32 %v1775, %v1940
      %v1942 = vpop.f32.mrf.mxu0
      %v1943 = vpop.f32.mrf.mxu0
      %v1944 = vadd.f32 %v1775, %v1943
      %v1945 = vpop.f32.mrf.mxu0
      %1946 = vmatprep.mubr.bf16.mxu0 0
      %1947 = vmatmul.mubr.bf16.gmra.mxu0 %v1809
      %v1948 = vpop.f32.mrf.mxu0
      %v1949 = vadd.f32 %v1775, %v1948
      %v1950 = vpop.f32.mrf.mxu0
      %v1951 = vpop.f32.mrf.mxu0
      %v1952 = vadd.f32 %v1775, %v1951
      %v1953 = vpop.f32.mrf.mxu0
      %1954 = vmatprep.mubr.bf16.mxu0 0
      %1955 = vmatmul.mubr.bf16.gmra.mxu0 %v1812
      %v1956 = vpop.f32.mrf.mxu0
      %v1957 = vadd.f32 %v1775, %v1956
      %v1958 = vpop.f32.mrf.mxu0
      %v1959 = vpop.f32.mrf.mxu0
      %v1960 = vadd.f32 %v1775, %v1959
      %v1961 = vpop.f32.mrf.mxu0
      %1962 = vmatprep.mubr.bf16.mxu0 0
      %1963 = vmatmul.mubr.bf16.gmra.mxu0 %v1815
      %v1964 = vpop.f32.mrf.mxu0
      %v1965 = vadd.f32 %v1775, %v1964
      %v1966 = vpop.f32.mrf.mxu0
      %v1967 = vpop.f32.mrf.mxu0
      %v1968 = vadd.f32 %v1775, %v1967
      %v1969 = vpop.f32.mrf.mxu0
      %1970 = vmatprep.mubr.bf16.mxu0 0
      %1971 = vmatmul.mubr.bf16.gmra.mxu0 %v1818
      %v1972 = vpop.f32.mrf.mxu0
      %v1973 = vadd.f32 %v1775, %v1972
      %v1974 = vpop.f32.mrf.mxu0
      %v1975 = vpop.f32.mrf.mxu0
      %v1976 = vadd.f32 %v1775, %v1975
      %v1977 = vpop.f32.mrf.mxu0
      %1978 = vmatprep.mubr.bf16.mxu0 0
      %1979 = vmatmul.mubr.bf16.gmra.mxu0 %v1821
      %v1980 = vpop.f32.mrf.mxu0
      %v1981 = vadd.f32 %v1775, %v1980
      %v1982 = vpop.f32.mrf.mxu0
      %v1983 = vpop.f32.mrf.mxu0
      %v1984 = vadd.f32 %v1775, %v1983
      %v1985 = vpop.f32.mrf.mxu0
      %1986 = vmatprep.mubr.bf16.mxu0 0
      %1987 = vmatmul.mubr.bf16.gmra.mxu0 %v1824
      %v1988 = vpop.f32.mrf.mxu0
      %v1989 = vadd.f32 %v1775, %v1988
      %v1990 = vpop.f32.mrf.mxu0
      %v1991 = vpop.f32.mrf.mxu0
      %v1992 = vadd.f32 %v1775, %v1991
      %v1993 = vpop.f32.mrf.mxu0
      %1994 = vmatprep.mubr.bf16.mxu0 0
      %1995 = vmatmul.mubr.bf16.gmra.mxu0 %v1827
      %v1996 = vpop.f32.mrf.mxu0
      %v1997 = vadd.f32 %v1775, %v1996
      %v1998 = vpop.f32.mrf.mxu0
      %v1999 = vpop.f32.mrf.mxu0
      %v2000 = vadd.f32 %v1775, %v1999
      %v2001 = vpop.f32.mrf.mxu0
      %2002 = vmatprep.mubr.bf16.mxu0 0
      %2003 = vmatmul.mubr.bf16.gmra.mxu0 %v1830
      %v2004 = vpop.f32.mrf.mxu0
      %v2005 = vadd.f32 %v1775, %v2004
      %v2006 = vpop.f32.mrf.mxu0
      %v2007 = vpop.f32.mrf.mxu0
      %v2008 = vadd.f32 %v1775, %v2007
      %v2009 = vpop.f32.mrf.mxu0
      %2010 = vmatprep.mubr.bf16.mxu0 0
      %2011 = vmatmul.mubr.bf16.gmra.mxu0 %v1833
      %v2012 = vpop.f32.mrf.mxu0
      %v2013 = vadd.f32 %v1775, %v2012
      %v2014 = vpop.f32.mrf.mxu0
      %v2015 = vpop.f32.mrf.mxu0
      %v2016 = vadd.f32 %v1775, %v2015
      %v2017 = vpop.f32.mrf.mxu0
      %2018 = vmatprep.mubr.bf16.mxu0 0
      %2019 = vmatmul.mubr.bf16.gmra.mxu0 %v1836
      %v2020 = vpop.f32.mrf.mxu0
      %v2021 = vadd.f32 %v1775, %v2020
      %v2022 = vpop.f32.mrf.mxu0
      %v2023 = vpop.f32.mrf.mxu0
      %v2024 = vadd.f32 %v1775, %v2023
      %v2025 = vpop.f32.mrf.mxu0
      %2026 = vmatprep.mubr.bf16.mxu0 0
      %2027 = vmatmul.mubr.bf16.gmra.mxu0 %v1839
      %v2028 = vpop.f32.mrf.mxu0
      %v2029 = vadd.f32 %v1775, %v2028
      %v2030 = vpop.f32.mrf.mxu0
      %v2031 = vpop.f32.mrf.mxu0
      %v2032 = vadd.f32 %v1775, %v2031
      %v2033 = vpop.f32.mrf.mxu0
      %2034 = vmatprep.mubr.bf16.mxu0 0
      %2035 = vmatmul.mubr.bf16.gmra.mxu0 %v1842
      %v2036 = vpop.f32.mrf.mxu0
      %v2037 = vadd.f32 %v1775, %v2036
      %v2038 = vpop.f32.mrf.mxu0
      %v2039 = vpop.f32.mrf.mxu0
      %v2040 = vadd.f32 %v1775, %v2039
      %v2041 = vpop.f32.mrf.mxu0
      %2042 = vmatprep.mubr.bf16.mxu0 0
      %2043 = vmatmul.mubr.bf16.gmra.mxu0 %v1845
      %v2044 = vpop.f32.mrf.mxu0
      %v2045 = vadd.f32 %v1775, %v2044
      %v2046 = vpop.f32.mrf.mxu0
      %v2047 = vpop.f32.mrf.mxu0
      %v2048 = vadd.f32 %v1775, %v2047
      %v2049 = vpop.f32.mrf.mxu0
      %2050 = vmatprep.mubr.bf16.mxu0 0
      %2051 = vmatmul.mubr.bf16.gmra.mxu0 %v1848
      %v2052 = vpop.f32.mrf.mxu0
      %v2053 = vadd.f32 %v1775, %v2052
      %v2054 = vpop.f32.mrf.mxu0
      %v2055 = vpop.f32.mrf.mxu0
      %v2056 = vadd.f32 %v1775, %v2055
      %v2057 = vpop.f32.mrf.mxu0
      %2058 = vmatprep.mubr.bf16.mxu0 0
      %2059 = vmatmul.mubr.bf16.gmra.mxu0 %v1851
      %v2060 = vpop.f32.mrf.mxu0
      %v2061 = vadd.f32 %v1775, %v2060
      %v2062 = vpop.f32.mrf.mxu0
      %v2063 = vpop.f32.mrf.mxu0
      %v2064 = vadd.f32 %v1775, %v2063
      %v2065 = vpop.f32.mrf.mxu0
      %2066 = vmatprep.mubr.bf16.mxu0 0
      %2067 = vmatmul.mubr.bf16.gmra.mxu0 %v1854
      %v2068 = vpop.f32.mrf.mxu0
      %v2069 = vadd.f32 %v1775, %v2068
      %v2070 = vpop.f32.mrf.mxu0
      %v2071 = vpop.f32.mrf.mxu0
      %v2072 = vadd.f32 %v1775, %v2071
      %v2073 = vpop.f32.mrf.mxu0
      %2074 = vmatprep.mubr.bf16.mxu0 0
      %2075 = vmatmul.mubr.bf16.gmra.mxu0 %v1857
      %v2076 = vpop.f32.mrf.mxu0
      %v2077 = vadd.f32 %v1775, %v2076
      %v2078 = vpop.f32.mrf.mxu0
      %v2079 = vpop.f32.mrf.mxu0
      %v2080 = vadd.f32 %v1775, %v2079
      %v2081 = vpop.f32.mrf.mxu0
      %2082 = vmatprep.mubr.bf16.mxu0 0
      %2083 = vmatmul.mubr.bf16.gmra.mxu0 %v1860
      %v2084 = vpop.f32.mrf.mxu0
      %v2085 = vadd.f32 %v1775, %v2084
      %v2086 = vpop.f32.mrf.mxu0
      %v2087 = vpop.f32.mrf.mxu0
      %v2088 = vadd.f32 %v1775, %v2087
      %v2089 = vpop.f32.mrf.mxu0
      %2090 = vmatprep.mubr.bf16.mxu0 0
      %2091 = vmatmul.mubr.bf16.gmra.mxu0 %v1863
      %v2092 = vpop.f32.mrf.mxu0
      %v2093 = vadd.f32 %v1775, %v2092
      %v2094 = vpop.f32.mrf.mxu0
      %v2095 = vpop.f32.mrf.mxu0
      %v2096 = vadd.f32 %v1775, %v2095
      %v2097 = vpop.f32.mrf.mxu0
      %2098 = vmatprep.mubr.bf16.mxu0 0
      %2099 = vmatmul.mubr.bf16.gmra.mxu0 %v1866
      %v2100 = vpop.f32.mrf.mxu0
      %v2101 = vadd.f32 %v1775, %v2100
      %v2102 = vpop.f32.mrf.mxu0
      %v2103 = vpop.f32.mrf.mxu0
      %v2104 = vadd.f32 %v1775, %v2103
      %v2105 = vpop.f32.mrf.mxu0
      %2106 = vmatprep.mubr.bf16.mxu0 0
      %2107 = vmatmul.mubr.bf16.gmra.mxu0 %v1869
      %v2108 = vpop.f32.mrf.mxu0
      %v2109 = vadd.f32 %v1775, %v2108
      %v2110 = vpop.f32.mrf.mxu0
      %v2111 = vpop.f32.mrf.mxu0
      %v2112 = vadd.f32 %v1775, %v2111
      %v2113 = vpop.f32.mrf.mxu0
      %2114 = vmatprep.mubr.bf16.mxu0 0
      %2115 = vmatmul.mubr.bf16.gmra.mxu0 %v1872
      %v2116 = vpop.f32.mrf.mxu0
      %v2117 = vadd.f32 %v1775, %v2116
      %v2118 = vpop.f32.mrf.mxu0
      %v2119 = vpop.f32.mrf.mxu0
      %v2120 = vadd.f32 %v1775, %v2119
      %v2121 = vpop.f32.mrf.mxu0
      %2122 = vmatprep.mubr.bf16.mxu0 0
      %2123 = vmatmul.mubr.bf16.gmra.mxu0 %v1875
      %v2124 = vpop.f32.mrf.mxu0
      %v2125 = vadd.f32 %v1775, %v2124
      %v2126 = vpop.f32.mrf.mxu0
      %v2127 = vpop.f32.mrf.mxu0
      %v2128 = vadd.f32 %v1775, %v2127
      %v2129 = vpop.f32.mrf.mxu0
      %2130 = vmatprep.mubr.bf16.mxu0 0
      %2131 = vmatmul.mubr.bf16.gmra.mxu0 %v1878
      %v2132 = vpop.f32.mrf.mxu0
      %v2133 = vadd.f32 %v1775, %v2132
      %v2134 = vpop.f32.mrf.mxu0
      %v2135 = vpop.f32.mrf.mxu0
      %v2136 = vadd.f32 %v1775, %v2135
      %v2137 = vpop.f32.mrf.mxu0
      %2138 = vmatprep.mubr.bf16.mxu0 0
      %2139 = vmatmul.mubr.bf16.gmra.mxu0 %v1881
      %v2140 = vpop.f32.mrf.mxu0
      %v2141 = vadd.f32 %v1775, %v2140
      %v2142 = vpop.f32.mrf.mxu0
      %v2143 = vpop.f32.mrf.mxu0
      %v2144 = vadd.f32 %v1775, %v2143
      %v2145 = vpop.f32.mrf.mxu0
      %2146 = vmatprep.mubr.bf16.mxu0 0
      %2147 = vmatmul.mubr.bf16.gmra.mxu0 %v1884
      %v2148 = vpop.f32.mrf.mxu0
      %v2149 = vadd.f32 %v1775, %v2148
      %v2150 = vpop.f32.mrf.mxu0
      %v2151 = vpop.f32.mrf.mxu0
      %v2152 = vadd.f32 %v1775, %v2151
      %v2153 = vpop.f32.mrf.mxu0
      %2154 = vmatprep.mubr.bf16.mxu0 0
      %2155 = vmatmul.mubr.bf16.gmra.mxu0 %v1887
      %v2156 = vpop.f32.mrf.mxu0
      %v2157 = vadd.f32 %v1775, %v2156
      %v2158 = vpop.f32.mrf.mxu0
      %v2159 = vpop.f32.mrf.mxu0
      %v2160 = vadd.f32 %v1775, %v2159
      %v2161 = vpop.f32.mrf.mxu0
      %2162 = vmatprep.mubr.bf16.mxu0 0
      %2163 = vmatmul.mubr.bf16.gmra.mxu0 %v1890
      %v2164 = vpop.f32.mrf.mxu0
      %v2165 = vadd.f32 %v1775, %v2164
      %v2166 = vpop.f32.mrf.mxu0
      %v2167 = vpop.f32.mrf.mxu0
      %v2168 = vadd.f32 %v1775, %v2167
      %v2169 = vpop.f32.mrf.mxu0
      %2170 = vmatprep.mubr.bf16.mxu0 0
      %2171 = vmatmul.mubr.bf16.gmra.mxu0 %v1893
      %v2172 = vpop.f32.mrf.mxu0
      %v2173 = vadd.f32 %v1775, %v2172
      %v2174 = vpop.f32.mrf.mxu0
      %v2175 = vpop.f32.mrf.mxu0
      %v2176 = vadd.f32 %v1775, %v2175
      %v2177 = vpop.f32.mrf.mxu0
      %2178 = vmatprep.mubr.bf16.mxu0 0
      %2179 = vmatmul.mubr.bf16.gmra.mxu0 %v1896
      %v2180 = vpop.f32.mrf.mxu0
      %v2181 = vadd.f32 %v1775, %v2180
      %v2182 = vpop.f32.mrf.mxu0
      %v2183 = vpop.f32.mrf.mxu0
      %v2184 = vadd.f32 %v1775, %v2183
      %v2185 = vpop.f32.mrf.mxu0
      %2186 = vdwg.mxu0
      %v2187 = vsub.f32 0.0, %v1933
      %v2188 = vsub.f32 0.0, %v1936
      %v2189 = vsub.f32 0.0, %v1941
      %v2190 = vsub.f32 0.0, %v1944
      %v2191 = vsub.f32 0.0, %v1949
      %v2192 = vsub.f32 0.0, %v1952
      %v2193 = vsub.f32 0.0, %v1957
      %v2194 = vsub.f32 0.0, %v1960
      %v2195 = vsub.f32 0.0, %v1965
      %v2196 = vsub.f32 0.0, %v1968
      %v2197 = vsub.f32 0.0, %v1973
      %v2198 = vsub.f32 0.0, %v1976
      %v2199 = vsub.f32 0.0, %v1981
      %v2200 = vsub.f32 0.0, %v1984
      %v2201 = vsub.f32 0.0, %v1989
      %v2202 = vsub.f32 0.0, %v1992
      %v2203 = vsub.f32 0.0, %v1997
      %v2204 = vsub.f32 0.0, %v2000
      %v2205 = vsub.f32 0.0, %v2005
      %v2206 = vsub.f32 0.0, %v2008
      %v2207 = vsub.f32 0.0, %v2013
      %v2208 = vsub.f32 0.0, %v2016
      %v2209 = vsub.f32 0.0, %v2021
      %v2210 = vsub.f32 0.0, %v2024
      %v2211 = vsub.f32 0.0, %v2029
      %v2212 = vsub.f32 0.0, %v2032
      %v2213 = vsub.f32 0.0, %v2037
      %v2214 = vsub.f32 0.0, %v2040
      %v2215 = vsub.f32 0.0, %v2045
      %v2216 = vsub.f32 0.0, %v2048
      %v2217 = vsub.f32 0.0, %v2053
      %v2218 = vsub.f32 0.0, %v2056
      %v2219 = vsub.f32 0.0, %v2061
      %v2220 = vsub.f32 0.0, %v2064
      %v2221 = vsub.f32 0.0, %v2069
      %v2222 = vsub.f32 0.0, %v2072
      %v2223 = vsub.f32 0.0, %v2077
      %v2224 = vsub.f32 0.0, %v2080
      %v2225 = vsub.f32 0.0, %v2085
      %v2226 = vsub.f32 0.0, %v2088
      %v2227 = vsub.f32 0.0, %v2093
      %v2228 = vsub.f32 0.0, %v2096
      %v2229 = vsub.f32 0.0, %v2101
      %v2230 = vsub.f32 0.0, %v2104
      %v2231 = vsub.f32 0.0, %v2109
      %v2232 = vsub.f32 0.0, %v2112
      %v2233 = vsub.f32 0.0, %v2117
      %v2234 = vsub.f32 0.0, %v2120
      %v2235 = vsub.f32 0.0, %v2125
      %v2236 = vsub.f32 0.0, %v2128
      %v2237 = vsub.f32 0.0, %v2133
      %v2238 = vsub.f32 0.0, %v2136
      %v2239 = vsub.f32 0.0, %v2141
      %v2240 = vsub.f32 0.0, %v2144
      %v2241 = vsub.f32 0.0, %v2149
      %v2242 = vsub.f32 0.0, %v2152
      %v2243 = vsub.f32 0.0, %v2157
      %v2244 = vsub.f32 0.0, %v2160
      %v2245 = vsub.f32 0.0, %v2165
      %v2246 = vsub.f32 0.0, %v2168
      %v2247 = vsub.f32 0.0, %v2173
      %v2248 = vsub.f32 0.0, %v2176
      %v2249 = vsub.f32 0.0, %v2181
      %v2250 = vsub.f32 0.0, %v2184
      %v2251 = vmul.f32 %v2187, 1.442695
      %v2252 = vpow.pop %v2251
      %v2253 = vmul.f32 %v2188, 1.442695
      %v2254 = vpow.pop %v2253
      %v2255 = vmul.f32 %v2189, 1.442695
      %v2256 = vpow.pop %v2255
      %v2257 = vmul.f32 %v2190, 1.442695
      %v2258 = vpow.pop %v2257
      %v2259 = vmul.f32 %v2191, 1.442695
      %v2260 = vpow.pop %v2259
      %v2261 = vmul.f32 %v2192, 1.442695
      %v2262 = vpow.pop %v2261
      %v2263 = vmul.f32 %v2193, 1.442695
      %v2264 = vpow.pop %v2263
      %v2265 = vmul.f32 %v2194, 1.442695
      %v2266 = vpow.pop %v2265
      %v2267 = vmul.f32 %v2195, 1.442695
      %v2268 = vpow.pop %v2267
      %v2269 = vmul.f32 %v2196, 1.442695
      %v2270 = vpow.pop %v2269
      %v2271 = vmul.f32 %v2197, 1.442695
      %v2272 = vpow.pop %v2271
      %v2273 = vmul.f32 %v2198, 1.442695
      %v2274 = vpow.pop %v2273
      %v2275 = vmul.f32 %v2199, 1.442695
      %v2276 = vpow.pop %v2275
      %v2277 = vmul.f32 %v2200, 1.442695
      %v2278 = vpow.pop %v2277
      %v2279 = vmul.f32 %v2201, 1.442695
      %v2280 = vpow.pop %v2279
      %v2281 = vmul.f32 %v2202, 1.442695
      %v2282 = vpow.pop %v2281
      %v2283 = vmul.f32 %v2203, 1.442695
      %v2284 = vpow.pop %v2283
      %v2285 = vmul.f32 %v2204, 1.442695
      %v2286 = vpow.pop %v2285
      %v2287 = vmul.f32 %v2205, 1.442695
      %v2288 = vpow.pop %v2287
      %v2289 = vmul.f32 %v2206, 1.442695
      %v2290 = vpow.pop %v2289
      %v2291 = vmul.f32 %v2207, 1.442695
      %v2292 = vpow.pop %v2291
      %v2293 = vmul.f32 %v2208, 1.442695
      %v2294 = vpow.pop %v2293
      %v2295 = vmul.f32 %v2209, 1.442695
      %v2296 = vpow.pop %v2295
      %v2297 = vmul.f32 %v2210, 1.442695
      %v2298 = vpow.pop %v2297
      %v2299 = vmul.f32 %v2211, 1.442695
      %v2300 = vpow.pop %v2299
      %v2301 = vmul.f32 %v2212, 1.442695
      %v2302 = vpow.pop %v2301
      %v2303 = vmul.f32 %v2213, 1.442695
      %v2304 = vpow.pop %v2303
      %v2305 = vmul.f32 %v2214, 1.442695
      %v2306 = vpow.pop %v2305
      %v2307 = vmul.f32 %v2215, 1.442695
      %v2308 = vpow.pop %v2307
      %v2309 = vmul.f32 %v2216, 1.442695
      %v2310 = vpow.pop %v2309
      %v2311 = vmul.f32 %v2217, 1.442695
      %v2312 = vpow.pop %v2311
      %v2313 = vmul.f32 %v2218, 1.442695
      %v2314 = vpow.pop %v2313
      %v2315 = vmul.f32 %v2219, 1.442695
      %v2316 = vpow.pop %v2315
      %v2317 = vmul.f32 %v2220, 1.442695
      %v2318 = vpow.pop %v2317
      %v2319 = vmul.f32 %v2221, 1.442695
      %v2320 = vpow.pop %v2319
      %v2321 = vmul.f32 %v2222, 1.442695
      %v2322 = vpow.pop %v2321
      %v2323 = vmul.f32 %v2223, 1.442695
      %v2324 = vpow.pop %v2323
      %v2325 = vmul.f32 %v2224, 1.442695
      %v2326 = vpow.pop %v2325
      %v2327 = vmul.f32 %v2225, 1.442695
      %v2328 = vpow.pop %v2327
      %v2329 = vmul.f32 %v2226, 1.442695
      %v2330 = vpow.pop %v2329
      %v2331 = vmul.f32 %v2227, 1.442695
      %v2332 = vpow.pop %v2331
      %v2333 = vmul.f32 %v2228, 1.442695
      %v2334 = vpow.pop %v2333
      %v2335 = vmul.f32 %v2229, 1.442695
      %v2336 = vpow.pop %v2335
      %v2337 = vmul.f32 %v2230, 1.442695
      %v2338 = vpow.pop %v2337
      %v2339 = vmul.f32 %v2231, 1.442695
      %v2340 = vpow.pop %v2339
      %v2341 = vmul.f32 %v2232, 1.442695
      %v2342 = vpow.pop %v2341
      %v2343 = vmul.f32 %v2233, 1.442695
      %v2344 = vpow.pop %v2343
      %v2345 = vmul.f32 %v2234, 1.442695
      %v2346 = vpow.pop %v2345
      %v2347 = vmul.f32 %v2235, 1.442695
      %v2348 = vpow.pop %v2347
      %v2349 = vmul.f32 %v2236, 1.442695
      %v2350 = vpow.pop %v2349
      %v2351 = vmul.f32 %v2237, 1.442695
      %v2352 = vpow.pop %v2351
      %v2353 = vmul.f32 %v2238, 1.442695
      %v2354 = vpow.pop %v2353
      %v2355 = vmul.f32 %v2239, 1.442695
      %v2356 = vpow.pop %v2355
      %v2357 = vmul.f32 %v2240, 1.442695
      %v2358 = vpow.pop %v2357
      %v2359 = vmul.f32 %v2241, 1.442695
      %v2360 = vpow.pop %v2359
      %v2361 = vmul.f32 %v2242, 1.442695
      %v2362 = vpow.pop %v2361
      %v2363 = vmul.f32 %v2243, 1.442695
      %v2364 = vpow.pop %v2363
      %v2365 = vmul.f32 %v2244, 1.442695
      %v2366 = vpow.pop %v2365
      %v2367 = vmul.f32 %v2245, 1.442695
      %v2368 = vpow.pop %v2367
      %v2369 = vmul.f32 %v2246, 1.442695
      %v2370 = vpow.pop %v2369
      %v2371 = vmul.f32 %v2247, 1.442695
      %v2372 = vpow.pop %v2371
      %v2373 = vmul.f32 %v2248, 1.442695
      %v2374 = vpow.pop %v2373
      %v2375 = vmul.f32 %v2249, 1.442695
      %v2376 = vpow.pop %v2375
      %v2377 = vmul.f32 %v2250, 1.442695
      %v2378 = vpow.pop %v2377
      %v2379 = vadd.f32 %v2252, 1.0
      %v2380 = vadd.f32 %v2254, 1.0
      %v2381 = vadd.f32 %v2256, 1.0
      %v2382 = vadd.f32 %v2258, 1.0
      %v2383 = vadd.f32 %v2260, 1.0
      %v2384 = vadd.f32 %v2262, 1.0
      %v2385 = vadd.f32 %v2264, 1.0
      %v2386 = vadd.f32 %v2266, 1.0
      %v2387 = vadd.f32 %v2268, 1.0
      %v2388 = vadd.f32 %v2270, 1.0
      %v2389 = vadd.f32 %v2272, 1.0
      %v2390 = vadd.f32 %v2274, 1.0
      %v2391 = vadd.f32 %v2276, 1.0
      %v2392 = vadd.f32 %v2278, 1.0
      %v2393 = vadd.f32 %v2280, 1.0
      %v2394 = vadd.f32 %v2282, 1.0
      %v2395 = vadd.f32 %v2284, 1.0
      %v2396 = vadd.f32 %v2286, 1.0
      %v2397 = vadd.f32 %v2288, 1.0
      %v2398 = vadd.f32 %v2290, 1.0
      %v2399 = vadd.f32 %v2292, 1.0
      %v2400 = vadd.f32 %v2294, 1.0
      %v2401 = vadd.f32 %v2296, 1.0
      %v2402 = vadd.f32 %v2298, 1.0
      %v2403 = vadd.f32 %v2300, 1.0
      %v2404 = vadd.f32 %v2302, 1.0
      %v2405 = vadd.f32 %v2304, 1.0
      %v2406 = vadd.f32 %v2306, 1.0
      %v2407 = vadd.f32 %v2308, 1.0
      %v2408 = vadd.f32 %v2310, 1.0
      %v2409 = vadd.f32 %v2312, 1.0
      %v2410 = vadd.f32 %v2314, 1.0
      %v2411 = vadd.f32 %v2316, 1.0
      %v2412 = vadd.f32 %v2318, 1.0
      %v2413 = vadd.f32 %v2320, 1.0
      %v2414 = vadd.f32 %v2322, 1.0
      %v2415 = vadd.f32 %v2324, 1.0
      %v2416 = vadd.f32 %v2326, 1.0
      %v2417 = vadd.f32 %v2328, 1.0
      %v2418 = vadd.f32 %v2330, 1.0
      %v2419 = vadd.f32 %v2332, 1.0
      %v2420 = vadd.f32 %v2334, 1.0
      %v2421 = vadd.f32 %v2336, 1.0
      %v2422 = vadd.f32 %v2338, 1.0
      %v2423 = vadd.f32 %v2340, 1.0
      %v2424 = vadd.f32 %v2342, 1.0
      %v2425 = vadd.f32 %v2344, 1.0
      %v2426 = vadd.f32 %v2346, 1.0
      %v2427 = vadd.f32 %v2348, 1.0
      %v2428 = vadd.f32 %v2350, 1.0
      %v2429 = vadd.f32 %v2352, 1.0
      %v2430 = vadd.f32 %v2354, 1.0
      %v2431 = vadd.f32 %v2356, 1.0
      %v2432 = vadd.f32 %v2358, 1.0
      %v2433 = vadd.f32 %v2360, 1.0
      %v2434 = vadd.f32 %v2362, 1.0
      %v2435 = vadd.f32 %v2364, 1.0
      %v2436 = vadd.f32 %v2366, 1.0
      %v2437 = vadd.f32 %v2368, 1.0
      %v2438 = vadd.f32 %v2370, 1.0
      %v2439 = vadd.f32 %v2372, 1.0
      %v2440 = vadd.f32 %v2374, 1.0
      %v2441 = vadd.f32 %v2376, 1.0
      %v2442 = vadd.f32 %v2378, 1.0
      %v2443 = vrcp.pop %v2379
      %v2444 = vrcp.pop %v2380
      %v2445 = vrcp.pop %v2381
      %v2446 = vrcp.pop %v2382
      %v2447 = vrcp.pop %v2383
      %v2448 = vrcp.pop %v2384
      %v2449 = vrcp.pop %v2385
      %v2450 = vrcp.pop %v2386
      %v2451 = vrcp.pop %v2387
      %v2452 = vrcp.pop %v2388
      %v2453 = vrcp.pop %v2389
      %v2454 = vrcp.pop %v2390
      %v2455 = vrcp.pop %v2391
      %v2456 = vrcp.pop %v2392
      %v2457 = vrcp.pop %v2393
      %v2458 = vrcp.pop %v2394
      %v2459 = vrcp.pop %v2395
      %v2460 = vrcp.pop %v2396
      %v2461 = vrcp.pop %v2397
      %v2462 = vrcp.pop %v2398
      %v2463 = vrcp.pop %v2399
      %v2464 = vrcp.pop %v2400
      %v2465 = vrcp.pop %v2401
      %v2466 = vrcp.pop %v2402
      %v2467 = vrcp.pop %v2403
      %v2468 = vrcp.pop %v2404
      %v2469 = vrcp.pop %v2405
      %v2470 = vrcp.pop %v2406
      %v2471 = vrcp.pop %v2407
      %v2472 = vrcp.pop %v2408
      %v2473 = vrcp.pop %v2409
      %v2474 = vrcp.pop %v2410
      %v2475 = vrcp.pop %v2411
      %v2476 = vrcp.pop %v2412
      %v2477 = vrcp.pop %v2413
      %v2478 = vrcp.pop %v2414
      %v2479 = vrcp.pop %v2415
      %v2480 = vrcp.pop %v2416
      %v2481 = vrcp.pop %v2417
      %v2482 = vrcp.pop %v2418
      %v2483 = vrcp.pop %v2419
      %v2484 = vrcp.pop %v2420
      %v2485 = vrcp.pop %v2421
      %v2486 = vrcp.pop %v2422
      %v2487 = vrcp.pop %v2423
      %v2488 = vrcp.pop %v2424
      %v2489 = vrcp.pop %v2425
      %v2490 = vrcp.pop %v2426
      %v2491 = vrcp.pop %v2427
      %v2492 = vrcp.pop %v2428
      %v2493 = vrcp.pop %v2429
      %v2494 = vrcp.pop %v2430
      %v2495 = vrcp.pop %v2431
      %v2496 = vrcp.pop %v2432
      %v2497 = vrcp.pop %v2433
      %v2498 = vrcp.pop %v2434
      %v2499 = vrcp.pop %v2435
      %v2500 = vrcp.pop %v2436
      %v2501 = vrcp.pop %v2437
      %v2502 = vrcp.pop %v2438
      %v2503 = vrcp.pop %v2439
      %v2504 = vrcp.pop %v2440
      %v2505 = vrcp.pop %v2441
      %v2506 = vrcp.pop %v2442
      %v2507 = vmul.f32 %v2443, 1.002
      %v2508 = vmul.f32 %v2444, 1.002
      %v2509 = vmul.f32 %v2445, 1.002
      %v2510 = vmul.f32 %v2446, 1.002
      %v2511 = vmul.f32 %v2447, 1.002
      %v2512 = vmul.f32 %v2448, 1.002
      %v2513 = vmul.f32 %v2449, 1.002
      %v2514 = vmul.f32 %v2450, 1.002
      %v2515 = vmul.f32 %v2451, 1.002
      %v2516 = vmul.f32 %v2452, 1.002
      %v2517 = vmul.f32 %v2453, 1.002
      %v2518 = vmul.f32 %v2454, 1.002
      %v2519 = vmul.f32 %v2455, 1.002
      %v2520 = vmul.f32 %v2456, 1.002
      %v2521 = vmul.f32 %v2457, 1.002
      %v2522 = vmul.f32 %v2458, 1.002
      %v2523 = vmul.f32 %v2459, 1.002
      %v2524 = vmul.f32 %v2460, 1.002
      %v2525 = vmul.f32 %v2461, 1.002
      %v2526 = vmul.f32 %v2462, 1.002
      %v2527 = vmul.f32 %v2463, 1.002
      %v2528 = vmul.f32 %v2464, 1.002
      %v2529 = vmul.f32 %v2465, 1.002
      %v2530 = vmul.f32 %v2466, 1.002
      %v2531 = vmul.f32 %v2467, 1.002
      %v2532 = vmul.f32 %v2468, 1.002
      %v2533 = vmul.f32 %v2469, 1.002
      %v2534 = vmul.f32 %v2470, 1.002
      %v2535 = vmul.f32 %v2471, 1.002
      %v2536 = vmul.f32 %v2472, 1.002
      %v2537 = vmul.f32 %v2473, 1.002
      %v2538 = vmul.f32 %v2474, 1.002
      %v2539 = vmul.f32 %v2475, 1.002
      %v2540 = vmul.f32 %v2476, 1.002
      %v2541 = vmul.f32 %v2477, 1.002
      %v2542 = vmul.f32 %v2478, 1.002
      %v2543 = vmul.f32 %v2479, 1.002
      %v2544 = vmul.f32 %v2480, 1.002
      %v2545 = vmul.f32 %v2481, 1.002
      %v2546 = vmul.f32 %v2482, 1.002
      %v2547 = vmul.f32 %v2483, 1.002
      %v2548 = vmul.f32 %v2484, 1.002
      %v2549 = vmul.f32 %v2485, 1.002
      %v2550 = vmul.f32 %v2486, 1.002
      %v2551 = vmul.f32 %v2487, 1.002
      %v2552 = vmul.f32 %v2488, 1.002
      %v2553 = vmul.f32 %v2489, 1.002
      %v2554 = vmul.f32 %v2490, 1.002
      %v2555 = vmul.f32 %v2491, 1.002
      %v2556 = vmul.f32 %v2492, 1.002
      %v2557 = vmul.f32 %v2493, 1.002
      %v2558 = vmul.f32 %v2494, 1.002
      %v2559 = vmul.f32 %v2495, 1.002
      %v2560 = vmul.f32 %v2496, 1.002
      %v2561 = vmul.f32 %v2497, 1.002
      %v2562 = vmul.f32 %v2498, 1.002
      %v2563 = vmul.f32 %v2499, 1.002
      %v2564 = vmul.f32 %v2500, 1.002
      %v2565 = vmul.f32 %v2501, 1.002
      %v2566 = vmul.f32 %v2502, 1.002
      %v2567 = vmul.f32 %v2503, 1.002
      %v2568 = vmul.f32 %v2504, 1.002
      %v2569 = vmul.f32 %v2505, 1.002
      %v2570 = vmul.f32 %v2506, 1.002
      %v2571 = vsub.f32 %v2507, 0.001
      %v2572 = vsub.f32 %v2508, 0.001
      %v2573 = vsub.f32 %v2509, 0.001
      %v2574 = vsub.f32 %v2510, 0.001
      %v2575 = vsub.f32 %v2511, 0.001
      %v2576 = vsub.f32 %v2512, 0.001
      %v2577 = vsub.f32 %v2513, 0.001
      %v2578 = vsub.f32 %v2514, 0.001
      %v2579 = vsub.f32 %v2515, 0.001
      %v2580 = vsub.f32 %v2516, 0.001
      %v2581 = vsub.f32 %v2517, 0.001
      %v2582 = vsub.f32 %v2518, 0.001
      %v2583 = vsub.f32 %v2519, 0.001
      %v2584 = vsub.f32 %v2520, 0.001
      %v2585 = vsub.f32 %v2521, 0.001
      %v2586 = vsub.f32 %v2522, 0.001
      %v2587 = vsub.f32 %v2523, 0.001
      %v2588 = vsub.f32 %v2524, 0.001
      %v2589 = vsub.f32 %v2525, 0.001
      %v2590 = vsub.f32 %v2526, 0.001
      %v2591 = vsub.f32 %v2527, 0.001
      %v2592 = vsub.f32 %v2528, 0.001
      %v2593 = vsub.f32 %v2529, 0.001
      %v2594 = vsub.f32 %v2530, 0.001
      %v2595 = vsub.f32 %v2531, 0.001
      %v2596 = vsub.f32 %v2532, 0.001
      %v2597 = vsub.f32 %v2533, 0.001
      %v2598 = vsub.f32 %v2534, 0.001
      %v2599 = vsub.f32 %v2535, 0.001
      %v2600 = vsub.f32 %v2536, 0.001
      %v2601 = vsub.f32 %v2537, 0.001
      %v2602 = vsub.f32 %v2538, 0.001
      %v2603 = vsub.f32 %v2539, 0.001
      %v2604 = vsub.f32 %v2540, 0.001
      %v2605 = vsub.f32 %v2541, 0.001
      %v2606 = vsub.f32 %v2542, 0.001
      %v2607 = vsub.f32 %v2543, 0.001
      %v2608 = vsub.f32 %v2544, 0.001
      %v2609 = vsub.f32 %v2545, 0.001
      %v2610 = vsub.f32 %v2546, 0.001
      %v2611 = vsub.f32 %v2547, 0.001
      %v2612 = vsub.f32 %v2548, 0.001
      %v2613 = vsub.f32 %v2549, 0.001
      %v2614 = vsub.f32 %v2550, 0.001
      %v2615 = vsub.f32 %v2551, 0.001
      %v2616 = vsub.f32 %v2552, 0.001
      %v2617 = vsub.f32 %v2553, 0.001
      %v2618 = vsub.f32 %v2554, 0.001
      %v2619 = vsub.f32 %v2555, 0.001
      %v2620 = vsub.f32 %v2556, 0.001
      %v2621 = vsub.f32 %v2557, 0.001
      %v2622 = vsub.f32 %v2558, 0.001
      %v2623 = vsub.f32 %v2559, 0.001
      %v2624 = vsub.f32 %v2560, 0.001
      %v2625 = vsub.f32 %v2561, 0.001
      %v2626 = vsub.f32 %v2562, 0.001
      %v2627 = vsub.f32 %v2563, 0.001
      %v2628 = vsub.f32 %v2564, 0.001
      %v2629 = vsub.f32 %v2565, 0.001
      %v2630 = vsub.f32 %v2566, 0.001
      %v2631 = vsub.f32 %v2567, 0.001
      %v2632 = vsub.f32 %v2568, 0.001
      %v2633 = vsub.f32 %v2569, 0.001
      %v2634 = vsub.f32 %v2570, 0.001
      %v2635 = vsel %vm768, %v2571, %v1933
      %v2636 = vsel %vm768, %v2572, %v1936
      %v2637 = vsel %vm768, %v2573, %v1941
      %v2638 = vsel %vm768, %v2574, %v1944
      %v2639 = vsel %vm768, %v2575, %v1949
      %v2640 = vsel %vm768, %v2576, %v1952
      %v2641 = vsel %vm768, %v2577, %v1957
      %v2642 = vsel %vm768, %v2578, %v1960
      %v2643 = vsel %vm768, %v2579, %v1965
      %v2644 = vsel %vm768, %v2580, %v1968
      %v2645 = vsel %vm768, %v2581, %v1973
      %v2646 = vsel %vm768, %v2582, %v1976
      %v2647 = vsel %vm768, %v2583, %v1981
      %v2648 = vsel %vm768, %v2584, %v1984
      %v2649 = vsel %vm768, %v2585, %v1989
      %v2650 = vsel %vm768, %v2586, %v1992
      %v2651 = vsel %vm768, %v2587, %v1997
      %v2652 = vsel %vm768, %v2588, %v2000
      %v2653 = vsel %vm768, %v2589, %v2005
      %v2654 = vsel %vm768, %v2590, %v2008
      %v2655 = vsel %vm768, %v2591, %v2013
      %v2656 = vsel %vm768, %v2592, %v2016
      %v2657 = vsel %vm768, %v2593, %v2021
      %v2658 = vsel %vm768, %v2594, %v2024
      %v2659 = vsel %vm768, %v2595, %v2029
      %v2660 = vsel %vm768, %v2596, %v2032
      %v2661 = vsel %vm768, %v2597, %v2037
      %v2662 = vsel %vm768, %v2598, %v2040
      %v2663 = vsel %vm768, %v2599, %v2045
      %v2664 = vsel %vm768, %v2600, %v2048
      %v2665 = vsel %vm768, %v2601, %v2053
      %v2666 = vsel %vm768, %v2602, %v2056
      %v2667 = vsel %vm768, %v2603, %v2061
      %v2668 = vsel %vm768, %v2604, %v2064
      %v2669 = vsel %vm768, %v2605, %v2069
      %v2670 = vsel %vm768, %v2606, %v2072
      %v2671 = vsel %vm768, %v2607, %v2077
      %v2672 = vsel %vm768, %v2608, %v2080
      %v2673 = vsel %vm768, %v2609, %v2085
      %v2674 = vsel %vm768, %v2610, %v2088
      %v2675 = vsel %vm768, %v2611, %v2093
      %v2676 = vsel %vm768, %v2612, %v2096
      %v2677 = vsel %vm768, %v2613, %v2101
      %v2678 = vsel %vm768, %v2614, %v2104
      %v2679 = vsel %vm768, %v2615, %v2109
      %v2680 = vsel %vm768, %v2616, %v2112
      %v2681 = vsel %vm768, %v2617, %v2117
      %v2682 = vsel %vm768, %v2618, %v2120
      %v2683 = vsel %vm768, %v2619, %v2125
      %v2684 = vsel %vm768, %v2620, %v2128
      %v2685 = vsel %vm768, %v2621, %v2133
      %v2686 = vsel %vm768, %v2622, %v2136
      %v2687 = vsel %vm768, %v2623, %v2141
      %v2688 = vsel %vm768, %v2624, %v2144
      %v2689 = vsel %vm768, %v2625, %v2149
      %v2690 = vsel %vm768, %v2626, %v2152
      %v2691 = vsel %vm768, %v2627, %v2157
      %v2692 = vsel %vm768, %v2628, %v2160
      %v2693 = vsel %vm768, %v2629, %v2165
      %v2694 = vsel %vm768, %v2630, %v2168
      %v2695 = vsel %vm768, %v2631, %v2173
      %v2696 = vsel %vm768, %v2632, %v2176
      %v2697 = vsel %vm768, %v2633, %v2181
      %v2698 = vsel %vm768, %v2634, %v2184
      %v2699 = vpack.c.bf16 %v2636, %v2635
      %v2700 = vpack.c.bf16 %v2638, %v2637
      %v2701 = vpack.c.bf16 %v2640, %v2639
      %v2702 = vpack.c.bf16 %v2642, %v2641
      %v2703 = vpack.c.bf16 %v2644, %v2643
      %v2704 = vpack.c.bf16 %v2646, %v2645
      %v2705 = vpack.c.bf16 %v2648, %v2647
      %v2706 = vpack.c.bf16 %v2650, %v2649
      %v2707 = vpack.c.bf16 %v2652, %v2651
      %v2708 = vpack.c.bf16 %v2654, %v2653
      %v2709 = vpack.c.bf16 %v2656, %v2655
      %v2710 = vpack.c.bf16 %v2658, %v2657
      %v2711 = vpack.c.bf16 %v2660, %v2659
      %v2712 = vpack.c.bf16 %v2662, %v2661
      %v2713 = vpack.c.bf16 %v2664, %v2663
      %v2714 = vpack.c.bf16 %v2666, %v2665
      %v2715 = vpack.c.bf16 %v2668, %v2667
      %v2716 = vpack.c.bf16 %v2670, %v2669
      %v2717 = vpack.c.bf16 %v2672, %v2671
      %v2718 = vpack.c.bf16 %v2674, %v2673
      %v2719 = vpack.c.bf16 %v2676, %v2675
      %v2720 = vpack.c.bf16 %v2678, %v2677
      %v2721 = vpack.c.bf16 %v2680, %v2679
      %v2722 = vpack.c.bf16 %v2682, %v2681
      %v2723 = vpack.c.bf16 %v2684, %v2683
      %v2724 = vpack.c.bf16 %v2686, %v2685
      %v2725 = vpack.c.bf16 %v2688, %v2687
      %v2726 = vpack.c.bf16 %v2690, %v2689
      %v2727 = vpack.c.bf16 %v2692, %v2691
      %v2728 = vpack.c.bf16 %v2694, %v2693
      %v2729 = vpack.c.bf16 %v2696, %v2695
      %v2730 = vpack.c.bf16 %v2698, %v2697
      %v2763 = vunpack.c.l.b16 %v2699
      %v2764 = vunpack.c.h.b16 %v2699
      %v2765 = vunpack.c.l.b16 %v2700
      %v2766 = vunpack.c.h.b16 %v2700
      %v2767 = vunpack.c.l.b16 %v2701
      %v2768 = vunpack.c.h.b16 %v2701
      %v2769 = vunpack.c.l.b16 %v2702
      %v2770 = vunpack.c.h.b16 %v2702
      %v2771 = vunpack.c.l.b16 %v2703
      %v2772 = vunpack.c.h.b16 %v2703
      %v2773 = vunpack.c.l.b16 %v2704
      %v2774 = vunpack.c.h.b16 %v2704
      %v2775 = vunpack.c.l.b16 %v2705
      %v2776 = vunpack.c.h.b16 %v2705
      %v2777 = vunpack.c.l.b16 %v2706
      %v2778 = vunpack.c.h.b16 %v2706
      %v2779 = vunpack.c.l.b16 %v2707
      %v2780 = vunpack.c.h.b16 %v2707
      %v2781 = vunpack.c.l.b16 %v2708
      %v2782 = vunpack.c.h.b16 %v2708
      %v2783 = vunpack.c.l.b16 %v2709
      %v2784 = vunpack.c.h.b16 %v2709
      %v2785 = vunpack.c.l.b16 %v2710
      %v2786 = vunpack.c.h.b16 %v2710
      %v2787 = vunpack.c.l.b16 %v2711
      %v2788 = vunpack.c.h.b16 %v2711
      %v2789 = vunpack.c.l.b16 %v2712
      %v2790 = vunpack.c.h.b16 %v2712
      %v2791 = vunpack.c.l.b16 %v2713
      %v2792 = vunpack.c.h.b16 %v2713
      %v2793 = vunpack.c.l.b16 %v2714
      %v2794 = vunpack.c.h.b16 %v2714
      %v2795 = vunpack.c.l.b16 %v2715
      %v2796 = vunpack.c.h.b16 %v2715
      %v2797 = vunpack.c.l.b16 %v2716
      %v2798 = vunpack.c.h.b16 %v2716
      %v2799 = vunpack.c.l.b16 %v2717
      %v2800 = vunpack.c.h.b16 %v2717
      %v2801 = vunpack.c.l.b16 %v2718
      %v2802 = vunpack.c.h.b16 %v2718
      %v2803 = vunpack.c.l.b16 %v2719
      %v2804 = vunpack.c.h.b16 %v2719
      %v2805 = vunpack.c.l.b16 %v2720
      %v2806 = vunpack.c.h.b16 %v2720
      %v2807 = vunpack.c.l.b16 %v2721
      %v2808 = vunpack.c.h.b16 %v2721
      %v2809 = vunpack.c.l.b16 %v2722
      %v2810 = vunpack.c.h.b16 %v2722
      %v2811 = vunpack.c.l.b16 %v2723
      %v2812 = vunpack.c.h.b16 %v2723
      %v2813 = vunpack.c.l.b16 %v2724
      %v2814 = vunpack.c.h.b16 %v2724
      %v2815 = vunpack.c.l.b16 %v2725
      %v2816 = vunpack.c.h.b16 %v2725
      %v2817 = vunpack.c.l.b16 %v2726
      %v2818 = vunpack.c.h.b16 %v2726
      %v2819 = vunpack.c.l.b16 %v2727
      %v2820 = vunpack.c.h.b16 %v2727
      %v2821 = vunpack.c.l.b16 %v2728
      %v2822 = vunpack.c.h.b16 %v2728
      %v2823 = vunpack.c.l.b16 %v2729
      %v2824 = vunpack.c.h.b16 %v2729
      %v2825 = vunpack.c.l.b16 %v2730
      %v2826 = vunpack.c.h.b16 %v2730
      %v2827 = vpack.c.b16 %v2763, %v2763
      %v2828 = vpack.c.b16 %v2764, %v2764
      %v2829 = vpack.c.b16 %v2765, %v2765
      %v2830 = vpack.c.b16 %v2766, %v2766
      %v2831 = vpack.c.b16 %v2767, %v2767
      %v2832 = vpack.c.b16 %v2768, %v2768
      %v2833 = vpack.c.b16 %v2769, %v2769
      %v2834 = vpack.c.b16 %v2770, %v2770
      %v2835 = vpack.c.b16 %v2771, %v2771
      %v2836 = vpack.c.b16 %v2772, %v2772
      %v2837 = vpack.c.b16 %v2773, %v2773
      %v2838 = vpack.c.b16 %v2774, %v2774
      %v2839 = vpack.c.b16 %v2775, %v2775
      %v2840 = vpack.c.b16 %v2776, %v2776
      %v2841 = vpack.c.b16 %v2777, %v2777
      %v2842 = vpack.c.b16 %v2778, %v2778
      %v2843 = vpack.c.b16 %v2779, %v2779
      %v2844 = vpack.c.b16 %v2780, %v2780
      %v2845 = vpack.c.b16 %v2781, %v2781
      %v2846 = vpack.c.b16 %v2782, %v2782
      %v2847 = vpack.c.b16 %v2783, %v2783
      %v2848 = vpack.c.b16 %v2784, %v2784
      %v2849 = vpack.c.b16 %v2785, %v2785
      %v2850 = vpack.c.b16 %v2786, %v2786
      %v2851 = vpack.c.b16 %v2787, %v2787
      %v2852 = vpack.c.b16 %v2788, %v2788
      %v2853 = vpack.c.b16 %v2789, %v2789
      %v2854 = vpack.c.b16 %v2790, %v2790
      %v2855 = vpack.c.b16 %v2791, %v2791
      %v2856 = vpack.c.b16 %v2792, %v2792
      %v2857 = vpack.c.b16 %v2793, %v2793
      %v2858 = vpack.c.b16 %v2794, %v2794
      %v2859 = vpack.c.b16 %v2795, %v2795
      %v2860 = vpack.c.b16 %v2796, %v2796
      %v2861 = vpack.c.b16 %v2797, %v2797
      %v2862 = vpack.c.b16 %v2798, %v2798
      %v2863 = vpack.c.b16 %v2799, %v2799
      %v2864 = vpack.c.b16 %v2800, %v2800
      %v2865 = vpack.c.b16 %v2801, %v2801
      %v2866 = vpack.c.b16 %v2802, %v2802
      %v2867 = vpack.c.b16 %v2803, %v2803
      %v2868 = vpack.c.b16 %v2804, %v2804
      %v2869 = vpack.c.b16 %v2805, %v2805
      %v2870 = vpack.c.b16 %v2806, %v2806
      %v2871 = vpack.c.b16 %v2807, %v2807
      %v2872 = vpack.c.b16 %v2808, %v2808
      %v2873 = vpack.c.b16 %v2809, %v2809
      %v2874 = vpack.c.b16 %v2810, %v2810
      %v2875 = vpack.c.b16 %v2811, %v2811
      %v2876 = vpack.c.b16 %v2812, %v2812
      %v2877 = vpack.c.b16 %v2813, %v2813
      %v2878 = vpack.c.b16 %v2814, %v2814
      %v2879 = vpack.c.b16 %v2815, %v2815
      %v2880 = vpack.c.b16 %v2816, %v2816
      %v2881 = vpack.c.b16 %v2817, %v2817
      %v2882 = vpack.c.b16 %v2818, %v2818
      %v2883 = vpack.c.b16 %v2819, %v2819
      %v2884 = vpack.c.b16 %v2820, %v2820
      %v2885 = vpack.c.b16 %v2821, %v2821
      %v2886 = vpack.c.b16 %v2822, %v2822
      %v2887 = vpack.c.b16 %v2823, %v2823
      %v2888 = vpack.c.b16 %v2824, %v2824
      %v2889 = vpack.c.b16 %v2825, %v2825
      %v2890 = vpack.c.b16 %v2826, %v2826
      %vm2955 = vcmask 519168
      %2956 = vst.msk [vmem:[%s262] sm:$0xf] %vm2955, %v2827
      %2957 = vst.msk [vmem:[%s262 + $0x4] sm:$0xf] %vm2955, %v2828
      %2958 = vst.msk [vmem:[%s262 + $0x8] sm:$0xf] %vm2955, %v2829
      %2959 = vst.msk [vmem:[%s262 + $0xc] sm:$0xf] %vm2955, %v2830
      %2960 = vst.msk [vmem:[%s262 + $0x10] sm:$0xf] %vm2955, %v2831
      %2961 = vst.msk [vmem:[%s262 + $0x14] sm:$0xf] %vm2955, %v2832
      %2962 = vst.msk [vmem:[%s262 + $0x18] sm:$0xf] %vm2955, %v2833
      %2963 = vst.msk [vmem:[%s262 + $0x1c] sm:$0xf] %vm2955, %v2834
      %2964 = vst.msk [vmem:[%s262 + $0x20] sm:$0xf] %vm2955, %v2835
      %2965 = vst.msk [vmem:[%s262 + $0x24] sm:$0xf] %vm2955, %v2836
      %2966 = vst.msk [vmem:[%s262 + $0x28] sm:$0xf] %vm2955, %v2837
      %2967 = vst.msk [vmem:[%s262 + $0x2c] sm:$0xf] %vm2955, %v2838
      %2968 = vst.msk [vmem:[%s262 + $0x30] sm:$0xf] %vm2955, %v2839
      %2969 = vst.msk [vmem:[%s262 + $0x34] sm:$0xf] %vm2955, %v2840
      %2970 = vst.msk [vmem:[%s262 + $0x38] sm:$0xf] %vm2955, %v2841
      %2971 = vst.msk [vmem:[%s262 + $0x3c] sm:$0xf] %vm2955, %v2842
      %2972 = vst.msk [vmem:[%s262 + $0x40] sm:$0xf] %vm2955, %v2843
      %2973 = vst.msk [vmem:[%s262 + $0x44] sm:$0xf] %vm2955, %v2844
      %2974 = vst.msk [vmem:[%s262 + $0x48] sm:$0xf] %vm2955, %v2845
      %2975 = vst.msk [vmem:[%s262 + $0x4c] sm:$0xf] %vm2955, %v2846
      %2976 = vst.msk [vmem:[%s262 + $0x50] sm:$0xf] %vm2955, %v2847
      %2977 = vst.msk [vmem:[%s262 + $0x54] sm:$0xf] %vm2955, %v2848
      %2978 = vst.msk [vmem:[%s262 + $0x58] sm:$0xf] %vm2955, %v2849
      %2979 = vst.msk [vmem:[%s262 + $0x5c] sm:$0xf] %vm2955, %v2850
      %2980 = vst.msk [vmem:[%s262 + $0x60] sm:$0xf] %vm2955, %v2851
      %2981 = vst.msk [vmem:[%s262 + $0x64] sm:$0xf] %vm2955, %v2852
      %2982 = vst.msk [vmem:[%s262 + $0x68] sm:$0xf] %vm2955, %v2853
      %2983 = vst.msk [vmem:[%s262 + $0x6c] sm:$0xf] %vm2955, %v2854
      %2984 = vst.msk [vmem:[%s262 + $0x70] sm:$0xf] %vm2955, %v2855
      %2985 = vst.msk [vmem:[%s262 + $0x74] sm:$0xf] %vm2955, %v2856
      %2986 = vst.msk [vmem:[%s262 + $0x78] sm:$0xf] %vm2955, %v2857
      %2987 = vst.msk [vmem:[%s262 + $0x7c] sm:$0xf] %vm2955, %v2858
      %2988 = vst.msk [vmem:[%s262 + $0x80] sm:$0xf] %vm2955, %v2859
      %2989 = vst.msk [vmem:[%s262 + $0x84] sm:$0xf] %vm2955, %v2860
      %2990 = vst.msk [vmem:[%s262 + $0x88] sm:$0xf] %vm2955, %v2861
      %2991 = vst.msk [vmem:[%s262 + $0x8c] sm:$0xf] %vm2955, %v2862
      %2992 = vst.msk [vmem:[%s262 + $0x90] sm:$0xf] %vm2955, %v2863
      %2993 = vst.msk [vmem:[%s262 + $0x94] sm:$0xf] %vm2955, %v2864
      %2994 = vst.msk [vmem:[%s262 + $0x98] sm:$0xf] %vm2955, %v2865
      %2995 = vst.msk [vmem:[%s262 + $0x9c] sm:$0xf] %vm2955, %v2866
      %2996 = vst.msk [vmem:[%s262 + $0xa0] sm:$0xf] %vm2955, %v2867
      %2997 = vst.msk [vmem:[%s262 + $0xa4] sm:$0xf] %vm2955, %v2868
      %2998 = vst.msk [vmem:[%s262 + $0xa8] sm:$0xf] %vm2955, %v2869
      %2999 = vst.msk [vmem:[%s262 + $0xac] sm:$0xf] %vm2955, %v2870
      %3000 = vst.msk [vmem:[%s262 + $0xb0] sm:$0xf] %vm2955, %v2871
      %3001 = vst.msk [vmem:[%s262 + $0xb4] sm:$0xf] %vm2955, %v2872
      %3002 = vst.msk [vmem:[%s262 + $0xb8] sm:$0xf] %vm2955, %v2873
      %3003 = vst.msk [vmem:[%s262 + $0xbc] sm:$0xf] %vm2955, %v2874
      %3004 = vst.msk [vmem:[%s262 + $0xc0] sm:$0xf] %vm2955, %v2875
      %3005 = vst.msk [vmem:[%s262 + $0xc4] sm:$0xf] %vm2955, %v2876
      %3006 = vst.msk [vmem:[%s262 + $0xc8] sm:$0xf] %vm2955, %v2877
      %3007 = vst.msk [vmem:[%s262 + $0xcc] sm:$0xf] %vm2955, %v2878
      %3008 = vst.msk [vmem:[%s262 + $0xd0] sm:$0xf] %vm2955, %v2879
      %3009 = vst.msk [vmem:[%s262 + $0xd4] sm:$0xf] %vm2955, %v2880
      %3010 = vst.msk [vmem:[%s262 + $0xd8] sm:$0xf] %vm2955, %v2881
      %3011 = vst.msk [vmem:[%s262 + $0xdc] sm:$0xf] %vm2955, %v2882
      %3012 = vst.msk [vmem:[%s262 + $0xe0] sm:$0xf] %vm2955, %v2883
      %3013 = vst.msk [vmem:[%s262 + $0xe4] sm:$0xf] %vm2955, %v2884
      %3014 = vst.msk [vmem:[%s262 + $0xe8] sm:$0xf] %vm2955, %v2885
      %3015 = vst.msk [vmem:[%s262 + $0xec] sm:$0xf] %vm2955, %v2886
      %3016 = vst.msk [vmem:[%s262 + $0xf0] sm:$0xf] %vm2955, %v2887
      %3017 = vst.msk [vmem:[%s262 + $0xf4] sm:$0xf] %vm2955, %v2888
      %3018 = vst.msk [vmem:[%s262 + $0xf8] sm:$0xf] %vm2955, %v2889
      %3019 = vst.msk [vmem:[%s262 + $0xfc] sm:$0xf] %vm2955, %v2890
      %s3020 = smul.u32 64, %s21
      %p3021 = scmp.lt.s32.totalorder %s20, 1
      %s3022 = scalar_select %p3021, %s20, 1
      %p3023 = scmp.lt.s32.totalorder %s3020, 63
      %s3024 = scalar_select %p3023, %s3020, 63
      %s3025 = smul.addr %s3022, 64
      %s3026 = sadd.s32 %s3024, %s3025
      %s3027 = smul.addr %s3026, 4
      %s3028 = scalar_lea.vmem %s5, %s3027
      // Predicated region
      $region41: #{triplane_generator_forward.3} parent=39 // pred_check
        %p3029 = pneg %p160
      $region42: #{triplane_generator_forward.3} parent=39 // pred_check_branch
        %3031 = sbr.rel (%p3029) target = $region44
      $region43: #{triplane_generator_forward.3} parent=39 // pred_region
        %s3032 = smul.u32 64, %s21
      $region44: #{triplane_generator_forward.3} parent=39 // pred_fallthru
        _
    $region40: #{triplane_generator_forward.3} parent=5 // pred_fallthru
      _
    %p3033 = scmp.le.s32.totalorder 2, %s11
    // Predicated region
    $region45: #{triplane_generator_forward.3} parent=5 // pred_check
      %p3034 = pneg %p3033
    $region46: #{triplane_generator_forward.3} parent=5 // pred_check_branch
      %3036 = sbr.rel (%p3034) target = $region48
    $region47: #{triplane_generator_forward.3} parent=5 // pred_region
      %s3037 = ssub.s32 %s11, 2
      // Predicated region
      $region49: #{triplane_generator_forward.3} parent=47 // pred_check
        %p3038 = pneg %p166
      $region50: #{triplane_generator_forward.3} parent=47 // pred_check_branch
        %3040 = sbr.rel (%p3038) target = $region52
      $region51: #{triplane_generator_forward.3} parent=47 // pred_region
        %s3041 = smul.u32 64, %s23
        %p3042 = scmp.lt.s32.totalorder %s22, 1
        %s3043 = scalar_select %p3042, %s22, 1
        %p3044 = scmp.lt.s32.totalorder %s3041, 63
        %s3045 = scalar_select %p3044, %s3041, 63
        %s3046 = smul.addr %s3043, 64
        %s3047 = sadd.s32 %s3045, %s3046
        %s3048 = smul.addr %s3047, 4
        %s3049 = scalar_lea.vmem %s5, %s3048
      $region52: #{triplane_generator_forward.3} parent=47 // pred_fallthru
        _
    $region48: #{triplane_generator_forward.3} parent=5 // pred_fallthru
      _
  $region6: #{triplane_generator_forward.3} parent=0 // loop_footer
    %s15 = sadd.s32 1, %s11
  $region7: #{triplane_generator_forward.3} parent=0 // loop_footer_branch
    %10 = sbr.rel target = $region3
  $region8: #{triplane_generator_forward.3} parent=0 // loop_exit
    _

</llo_original>
